<compile_context>
chip_gen: v5e
topology: v5e:2x2
jax: 0.10.0
libtpu: 0.0.40
codegen_flags: <defaults>
</compile_context>

<pallas_src>
import jax
import jax.numpy as jnp
from jax.experimental import pallas as pl
from jax.experimental.pallas import tpu as pltpu


# ----------------------------------------------------------------------------
# Bilinear (align_corners=True) interpolation matrix: out = M @ in  (per axis).
# ----------------------------------------------------------------------------
def _bilinear_matrix(n_in, n_out):
    if n_in == 1:
        return jnp.ones((n_out, 1), jnp.float32)
    pos = jnp.arange(n_out, dtype=jnp.float32) * (n_in - 1) / (n_out - 1)
    lo = jnp.clip(jnp.floor(pos).astype(jnp.int32), 0, n_in - 2)
    frac = pos - lo.astype(jnp.float32)
    idx = jnp.arange(n_out)
    m = jnp.zeros((n_out, n_in), jnp.float32)
    m = m.at[idx, lo].add(1.0 - frac)
    m = m.at[idx, lo + 1].add(frac)
    return m


# ----------------------------------------------------------------------------
# Fused kernel: upsample -> pad -> add -> conv1+BN+ReLU -> conv2+BN+ReLU
# One batch element per grid step; all intermediates stay in VMEM.
# ----------------------------------------------------------------------------
def _up_fused_kernel(x1_ref, x2_ref, mh_ref, mwt_ref, w1_ref, b1_ref,
                     w2_ref, b2_ref, o_ref, xsum_ref, h1p_ref):
    Cin, H1, W1 = x1_ref.shape[1:]
    _, H2, W2 = x2_ref.shape[1:]
    Ho1, Wo1 = mh_ref.shape[0], mwt_ref.shape[1]
    Cmid = w1_ref.shape[0]
    HW = H2 * W2

    x1 = x1_ref[0].astype(jnp.float32)          # (Cin, H1, W1)
    x2 = x2_ref[0].astype(jnp.float32)          # (Cin, H2, W2)

    # --- bilinear upsample (align_corners=True) as two small matmuls --------
    # W axis: (Cin*H1, W1) @ (W1, Wo1)
    t = jnp.dot(x1.reshape(Cin * H1, W1), mwt_ref[...],
                preferred_element_type=jnp.float32).reshape(Cin, H1, Wo1)
    # H axis: batched over channels, (Ho1, H1) @ (H1, Wo1) -> (Cin, Ho1, Wo1)
    mh_b = jnp.broadcast_to(mh_ref[...], (Cin, Ho1, H1))
    x1u = jax.lax.dot_general(mh_b, t, (((2,), (1,)), ((0,), (0,))),
                              preferred_element_type=jnp.float32)

    # --- x = x2 + pad(x1u): build zero-padded sum in VMEM scratch ------------
    py = (H2 - Ho1) // 2
    px = (W2 - Wo1) // 2
    xsum_ref[...] = jnp.zeros_like(xsum_ref)
    if py == 0 and px == 0 and Ho1 == H2 and Wo1 == W2:
        xsum_ref[:, 1:1 + H2, 1:1 + W2] = x2 + x1u
    else:
        xsum_ref[:, 1:1 + H2, 1:1 + W2] = x2
        win = xsum_ref[:, 1 + py:1 + py + Ho1, 1 + px:1 + px + Wo1]
        xsum_ref[:, 1 + py:1 + py + Ho1, 1 + px:1 + px + Wo1] = win + x1u

    # --- conv1 (3x3, no bias) + folded BN + ReLU: one im2col matmul ----------
    xp = xsum_ref[...]                          # (Cin, H2+2, W2+2)
    cols = []
    for ky in range(3):
        for kx in range(3):
            cols.append(xp[:, ky:ky + H2, kx:kx + W2].reshape(Cin, HW))
    col1 = jnp.concatenate(cols, axis=0)        # (9*Cin, HW)
    h1 = jnp.dot(w1_ref[...], col1, preferred_element_type=jnp.float32)
    h1 = jnp.maximum(h1 + b1_ref[...], 0.0)     # (Cmid, HW)

    # --- conv2 (3x3, no bias) + folded BN + ReLU ------------------------------
    h1p_ref[...] = jnp.zeros_like(h1p_ref)
    h1p_ref[:, 1:1 + H2, 1:1 + W2] = h1.reshape(Cmid, H2, W2)
    hp = h1p_ref[...]                           # (Cmid, H2+2, W2+2)
    cols2 = []
    for ky in range(3):
        for kx in range(3):
            cols2.append(hp[:, ky:ky + H2, kx:kx + W2].reshape(Cmid, HW))
    col2 = jnp.concatenate(cols2, axis=0)       # (9*Cmid, HW)
    out = jnp.dot(w2_ref[...], col2, preferred_element_type=jnp.float32)
    out = jnp.maximum(out + b2_ref[...], 0.0)   # (Cout, HW) -- lane-dense store

    o_ref[0] = out.astype(o_ref.dtype)


# ----------------------------------------------------------------------------
# Wrapper: NCHW in -> NCHW out (PyTorch convention), single pallas_call.
# ----------------------------------------------------------------------------
def up_forward(params, x1_nchw, x2_nchw):
    N, Cin, H1, W1 = x1_nchw.shape
    N2, Cin2, H2, W2 = x2_nchw.shape
    assert N == N2 and Cin == Cin2
    Ho1, Wo1 = 2 * H1, 2 * W1
    Cmid = params["w1_2d"].shape[0]
    Cout = params["w2_2d"].shape[0]
    HW = H2 * W2

    mh = _bilinear_matrix(H1, Ho1)               # (Ho1, H1)
    mwt = _bilinear_matrix(W1, Wo1).T            # (W1, Wo1)

    out_flat = pl.pallas_call(
        _up_fused_kernel,
        out_shape=jax.ShapeDtypeStruct((N, Cout, HW), jnp.float32),
        grid=(N,),
        in_specs=[
            pl.BlockSpec((1, Cin, H1, W1), lambda n: (n, 0, 0, 0)),
            pl.BlockSpec((1, Cin, H2, W2), lambda n: (n, 0, 0, 0)),
            pl.BlockSpec((Ho1, H1), lambda n: (0, 0)),
            pl.BlockSpec((W1, Wo1), lambda n: (0, 0)),
            pl.BlockSpec((Cmid, 9 * Cin), lambda n: (0, 0)),
            pl.BlockSpec((Cmid, 1), lambda n: (0, 0)),
            pl.BlockSpec((Cout, 9 * Cmid), lambda n: (0, 0)),
            pl.BlockSpec((Cout, 1), lambda n: (0, 0)),
        ],
        out_specs=pl.BlockSpec((1, Cout, HW), lambda n: (n, 0, 0)),
        scratch_shapes=[
            pltpu.VMEM((Cin, H2 + 2, W2 + 2), jnp.float32),   # padded x2 + up(x1)
            pltpu.VMEM((Cmid, H2 + 2, W2 + 2), jnp.float32),  # padded h1
        ],
        compiler_params=pltpu.CompilerParams(dimension_semantics=("parallel",)),
    )(x1_nchw.astype(jnp.float32), x2_nchw.astype(jnp.float32),
      mh, mwt, params["w1_2d"], params["b1"], params["w2_2d"], params["b2"])

    # cheap reshape of the lane-dense (Cout, H*W) result back to NCHW
    return out_flat.reshape(N, Cout, H2, W2)


# ----------------------------------------------------------------------------
# Parameters (deterministic, synthetic) with BN folded into the conv weights.
# ----------------------------------------------------------------------------
def _fold_bn_into_conv(w_oihw, gamma, beta, mean, var, eps=1e-5):
    co, ci = w_oihw.shape[0], w_oihw.shape[1]
    scale = gamma / jnp.sqrt(var + eps)
    # (co, ci, 3, 3) -> (co, ky, kx, ci) -> (co, 9*ci); row order matches im2col
    w2d = jnp.transpose(w_oihw, (0, 2, 3, 1)).reshape(co, 9 * ci) * scale[:, None]
    bias = (beta - mean * scale).reshape(co, 1)
    return w2d.astype(jnp.float32), bias.astype(jnp.float32)


def init_up_params(key, in_channels, out_channels):
    mid = in_channels // 2
    ks = jax.random.split(key, 10)
    w1 = 0.1 * jax.random.normal(ks[0], (mid, in_channels, 3, 3), jnp.float32)
    w2 = 0.1 * jax.random.normal(ks[1], (out_channels, mid, 3, 3), jnp.float32)
    g1 = 1.0 + 0.1 * jax.random.normal(ks[2], (mid,), jnp.float32)
    b1 = 0.1 * jax.random.normal(ks[3], (mid,), jnp.float32)
    m1 = 0.1 * jax.random.normal(ks[4], (mid,), jnp.float32)
    v1 = jnp.abs(1.0 + 0.1 * jax.random.normal(ks[5], (mid,), jnp.float32))
    g2 = 1.0 + 0.1 * jax.random.normal(ks[6], (out_channels,), jnp.float32)
    b2 = 0.1 * jax.random.normal(ks[7], (out_channels,), jnp.float32)
    m2 = 0.1 * jax.random.normal(ks[8], (out_channels,), jnp.float32)
    v2 = jnp.abs(1.0 + 0.1 * jax.random.normal(ks[9], (out_channels,), jnp.float32))
    w1_2d, bb1 = _fold_bn_into_conv(w1, g1, b1, m1, v1)
    w2_2d, bb2 = _fold_bn_into_conv(w2, g2, b2, m2, v2)
    return dict(w1_2d=w1_2d, b1=bb1, w2_2d=w2_2d, b2=bb2)


# ----------------------------------------------------------------------------
# Pure-JAX reference (same folded parameters) for a sanity check.
# ----------------------------------------------------------------------------
def _up_reference(params, x1, x2):
    _, _, H1, W1 = x1.shape
    _, _, H2, W2 = x2.shape
    mh = _bilinear_matrix(H1, 2 * H1)
    mwt = _bilinear_matrix(W1, 2 * W1).T
    x1u = jnp.einsum("oh,nchw,wv->ncov", mh, x1, mwt,
                     precision=jax.lax.Precision.HIGHEST)
    dy, dx = H2 - x1u.shape[2], W2 - x1u.shape[3]
    x1u = jnp.pad(x1u, ((0, 0), (0, 0),
                        (dy // 2, dy - dy // 2), (dx // 2, dx - dx // 2)))
    x = x2 + x1u

    def conv_bn_relu(x, w2d, b):
        co, ci = w2d.shape[0], x.shape[1]
        w = jnp.transpose(w2d.reshape(co, 3, 3, ci), (0, 3, 1, 2))  # OIHW (folded)
        y = jax.lax.conv_general_dilated(
            x, w, (1, 1), "SAME",
            dimension_numbers=("NCHW", "OIHW", "NCHW"),
            precision=jax.lax.Precision.HIGHEST)
        return jnp.maximum(y + b.reshape(1, co, 1, 1), 0.0)

    h1 = conv_bn_relu(x, params["w1_2d"], params["b1"])
    return conv_bn_relu(h1, params["w2_2d"], params["b2"])


if __name__ == "__main__":
    key = jax.random.PRNGKey(0)
    k_p, k_x1, k_x2 = jax.random.split(key, 3)

    in_channels, out_channels = 4, 3
    N, H, W = 2, 8, 8
    x1 = jax.random.normal(k_x1, (N, in_channels, H, W), jnp.float32)         # NCHW
    x2 = jax.random.normal(k_x2, (N, in_channels, 2 * H, 2 * W), jnp.float32)

    params = init_up_params(k_p, in_channels, out_channels)
    out = up_forward(params, x1, x2)
    jax.block_until_ready(out)
    assert out.shape == (N, out_channels, 2 * H, 2 * W)

    ref = _up_reference(params, x1, x2)
    err = float(jnp.max(jnp.abs(out - ref)))
    assert err < 2e-3, f"mismatch vs pure-JAX reference: {err}"
    print("KERNEL_OK")
</pallas_src>

<mosaic_0001>
module attributes {stable_mosaic.version = 11 : i64} {
  func.func @_up_fused_kernel(%arg0: i32, %arg1: memref<1x4x8x8xf32, #tpu.memory_space<vmem>>, %arg2: memref<1x4x16x16xf32, #tpu.memory_space<vmem>>, %arg3: memref<16x8xf32, #tpu.memory_space<vmem>>, %arg4: memref<8x16xf32, #tpu.memory_space<vmem>>, %arg5: memref<2x36xf32, #tpu.memory_space<vmem>>, %arg6: memref<2x1xf32, #tpu.memory_space<vmem>>, %arg7: memref<3x18xf32, #tpu.memory_space<vmem>>, %arg8: memref<3x1xf32, #tpu.memory_space<vmem>>, %arg9: memref<1x3x256xf32, #tpu.memory_space<vmem>>, %arg10: memref<4x18x18xf32, #tpu.memory_space<vmem>>, %arg11: memref<2x18x18xf32, #tpu.memory_space<vmem>>) attributes {dimension_semantics = [#tpu.dimension_semantics<parallel>], iteration_bounds = array<i64: 2>, scalar_prefetch = 0 : i64, scratch_operands = 2 : i64, tpu.core_type = #tpu.core_type<tc>, window_params = [{transform_indices = @transform_0, window_bounds = array<i64: 1, 4, 8, 8>}, {transform_indices = @transform_1, window_bounds = array<i64: 1, 4, 16, 16>}, {pipeline_mode = #tpu.pipeline_mode<synchronous>, transform_indices = @transform_2, window_bounds = array<i64: 16, 8>}, {pipeline_mode = #tpu.pipeline_mode<synchronous>, transform_indices = @transform_3, window_bounds = array<i64: 8, 16>}, {pipeline_mode = #tpu.pipeline_mode<synchronous>, transform_indices = @transform_4, window_bounds = array<i64: 2, 36>}, {pipeline_mode = #tpu.pipeline_mode<synchronous>, transform_indices = @transform_5, window_bounds = array<i64: 2, 1>}, {pipeline_mode = #tpu.pipeline_mode<synchronous>, transform_indices = @transform_6, window_bounds = array<i64: 3, 18>}, {pipeline_mode = #tpu.pipeline_mode<synchronous>, transform_indices = @transform_7, window_bounds = array<i64: 3, 1>}, {transform_indices = @transform_8, window_bounds = array<i64: 1, 3, 256>}]} {
    %c0 = arith.constant 0 : index
    %c0_0 = arith.constant 0 : index
    %c0_1 = arith.constant 0 : index
    %c0_2 = arith.constant 0 : index
    %0 = vector.load %arg1[%c0, %c0_0, %c0_1, %c0_2] : memref<1x4x8x8xf32, #tpu.memory_space<vmem>>, vector<1x4x8x8xf32>
    %1 = vector.shape_cast %0 : vector<1x4x8x8xf32> to vector<4x8x8xf32>
    %c0_3 = arith.constant 0 : index
    %c0_4 = arith.constant 0 : index
    %c0_5 = arith.constant 0 : index
    %c0_6 = arith.constant 0 : index
    %2 = vector.load %arg2[%c0_3, %c0_4, %c0_5, %c0_6] : memref<1x4x16x16xf32, #tpu.memory_space<vmem>>, vector<1x4x16x16xf32>
    %3 = vector.shape_cast %2 : vector<1x4x16x16xf32> to vector<4x16x16xf32>
    %4 = vector.shape_cast %1 : vector<4x8x8xf32> to vector<32x8xf32>
    %c0_7 = arith.constant 0 : index
    %c0_8 = arith.constant 0 : index
    %5 = vector.load %arg4[%c0_7, %c0_8] : memref<8x16xf32, #tpu.memory_space<vmem>>, vector<8x16xf32>
    %cst = arith.constant dense<0.000000e+00> : vector<32x16xf32>
    %6 = tpu.matmul %4, %5, %cst {dimension_numbers = #tpu.dot_dimension_numbers<[1], [0], [0], [1], [0, 0, 1, 1], [], []>} : vector<32x8xf32>, vector<8x16xf32>, vector<32x16xf32> -> vector<32x16xf32>
    %7 = vector.shape_cast %6 : vector<32x16xf32> to vector<4x8x16xf32>
    %c0_9 = arith.constant 0 : index
    %c0_10 = arith.constant 0 : index
    %8 = vector.load %arg3[%c0_9, %c0_10] : memref<16x8xf32, #tpu.memory_space<vmem>>, vector<16x8xf32>
    %9 = vector.shape_cast %8 : vector<16x8xf32> to vector<1x16x8xf32>
    %10 = vector.broadcast %9 : vector<1x16x8xf32> to vector<4x16x8xf32>
    %cst_11 = arith.constant dense<0.000000e+00> : vector<4x16x16xf32>
    %11 = tpu.matmul %10, %7, %cst_11 {dimension_numbers = #tpu.dot_dimension_numbers<[2], [1], [1], [2], [0, 0, 0, 1, 1, 2], [0], [0]>} : vector<4x16x8xf32>, vector<4x8x16xf32>, vector<4x16x16xf32> -> vector<4x16x16xf32>
    %cst_12 = arith.constant 0.000000e+00 : f32
    %12 = vector.broadcast %cst_12 : f32 to vector<4x18x18xf32>
    %c0_13 = arith.constant 0 : index
    %c0_14 = arith.constant 0 : index
    %c0_15 = arith.constant 0 : index
    %13 = vector.load %arg10[%c0_13, %c0_14, %c0_15] : memref<4x18x18xf32, #tpu.memory_space<vmem>>, vector<4x18x18xf32>
    tpu.vector_store %arg10[%c0_13, %c0_14, %c0_15], %12 {strides = array<i32>} : memref<4x18x18xf32, #tpu.memory_space<vmem>>, vector<4x18x18xf32>,
    %14 = arith.addf %3, %11 : vector<4x16x16xf32>
    %c0_16 = arith.constant 0 : index
    %c1 = arith.constant 1 : index
    %c1_17 = arith.constant 1 : index
    %15 = vector.load %arg10[%c0_16, %c1, %c1_17] : memref<4x18x18xf32, #tpu.memory_space<vmem>>, vector<4x16x16xf32>
    tpu.vector_store %arg10[%c0_16, %c1, %c1_17], %14 {strides = array<i32>} : memref<4x18x18xf32, #tpu.memory_space<vmem>>, vector<4x16x16xf32>,
    %c0_18 = arith.constant 0 : index
    %c0_19 = arith.constant 0 : index
    %c0_20 = arith.constant 0 : index
    %16 = vector.load %arg10[%c0_18, %c0_19, %c0_20] : memref<4x18x18xf32, #tpu.memory_space<vmem>>, vector<4x18x18xf32>
    %17 = vector.extract_strided_slice %16 {offsets = [0, 0, 0], sizes = [4, 16, 16], strides = [1, 1, 1]} : vector<4x18x18xf32> to vector<4x16x16xf32>
    %18 = vector.shape_cast %17 : vector<4x16x16xf32> to vector<4x256xf32>
    %19 = vector.extract_strided_slice %16 {offsets = [0, 0, 1], sizes = [4, 16, 16], strides = [1, 1, 1]} : vector<4x18x18xf32> to vector<4x16x16xf32>
    %20 = vector.shape_cast %19 : vector<4x16x16xf32> to vector<4x256xf32>
    %21 = vector.extract_strided_slice %16 {offsets = [0, 0, 2], sizes = [4, 16, 16], strides = [1, 1, 1]} : vector<4x18x18xf32> to vector<4x16x16xf32>
    %22 = vector.shape_cast %21 : vector<4x16x16xf32> to vector<4x256xf32>
    %23 = vector.extract_strided_slice %16 {offsets = [0, 1, 0], sizes = [4, 16, 16], strides = [1, 1, 1]} : vector<4x18x18xf32> to vector<4x16x16xf32>
    %24 = vector.shape_cast %23 : vector<4x16x16xf32> to vector<4x256xf32>
    %25 = vector.extract_strided_slice %16 {offsets = [0, 1, 1], sizes = [4, 16, 16], strides = [1, 1, 1]} : vector<4x18x18xf32> to vector<4x16x16xf32>
    %26 = vector.shape_cast %25 : vector<4x16x16xf32> to vector<4x256xf32>
    %27 = vector.extract_strided_slice %16 {offsets = [0, 1, 2], sizes = [4, 16, 16], strides = [1, 1, 1]} : vector<4x18x18xf32> to vector<4x16x16xf32>
    %28 = vector.shape_cast %27 : vector<4x16x16xf32> to vector<4x256xf32>
    %29 = vector.extract_strided_slice %16 {offsets = [0, 2, 0], sizes = [4, 16, 16], strides = [1, 1, 1]} : vector<4x18x18xf32> to vector<4x16x16xf32>
    %30 = vector.shape_cast %29 : vector<4x16x16xf32> to vector<4x256xf32>
    %31 = vector.extract_strided_slice %16 {offsets = [0, 2, 1], sizes = [4, 16, 16], strides = [1, 1, 1]} : vector<4x18x18xf32> to vector<4x16x16xf32>
    %32 = vector.shape_cast %31 : vector<4x16x16xf32> to vector<4x256xf32>
    %33 = vector.extract_strided_slice %16 {offsets = [0, 2, 2], sizes = [4, 16, 16], strides = [1, 1, 1]} : vector<4x18x18xf32> to vector<4x16x16xf32>
    %34 = vector.shape_cast %33 : vector<4x16x16xf32> to vector<4x256xf32>
    %35 = tpu.concatenate %18, %20, %22, %24, %26, %28, %30, %32, %34 in 0 : vector<4x256xf32>, vector<4x256xf32>, vector<4x256xf32>, vector<4x256xf32>, vector<4x256xf32>, vector<4x256xf32>, vector<4x256xf32>, vector<4x256xf32>, vector<4x256xf32> -> vector<36x256xf32>
    %c0_21 = arith.constant 0 : index
    %c0_22 = arith.constant 0 : index
    %36 = vector.load %arg5[%c0_21, %c0_22] : memref<2x36xf32, #tpu.memory_space<vmem>>, vector<2x36xf32>
    %cst_23 = arith.constant dense<0.000000e+00> : vector<2x256xf32>
    %37 = tpu.matmul %36, %35, %cst_23 {dimension_numbers = #tpu.dot_dimension_numbers<[1], [0], [0], [1], [0, 0, 1, 1], [], []>} : vector<2x36xf32>, vector<36x256xf32>, vector<2x256xf32> -> vector<2x256xf32>
    %c0_24 = arith.constant 0 : index
    %c0_25 = arith.constant 0 : index
    %38 = vector.load %arg6[%c0_24, %c0_25] : memref<2x1xf32, #tpu.memory_space<vmem>>, vector<2x1xf32>
    %39 = vector.broadcast %38 : vector<2x1xf32> to vector<2x256xf32>
    %40 = arith.addf %37, %39 : vector<2x256xf32>
    %cst_26 = arith.constant 0.000000e+00 : f32
    %41 = vector.broadcast %cst_26 : f32 to vector<2x256xf32>
    %42 = arith.maximumf %40, %41 : vector<2x256xf32>
    %cst_27 = arith.constant 0.000000e+00 : f32
    %43 = vector.broadcast %cst_27 : f32 to vector<2x18x18xf32>
    %c0_28 = arith.constant 0 : index
    %c0_29 = arith.constant 0 : index
    %c0_30 = arith.constant 0 : index
    %44 = vector.load %arg11[%c0_28, %c0_29, %c0_30] : memref<2x18x18xf32, #tpu.memory_space<vmem>>, vector<2x18x18xf32>
    tpu.vector_store %arg11[%c0_28, %c0_29, %c0_30], %43 {strides = array<i32>} : memref<2x18x18xf32, #tpu.memory_space<vmem>>, vector<2x18x18xf32>,
    %45 = vector.shape_cast %42 : vector<2x256xf32> to vector<2x16x16xf32>
    %c0_31 = arith.constant 0 : index
    %c1_32 = arith.constant 1 : index
    %c1_33 = arith.constant 1 : index
    %46 = vector.load %arg11[%c0_31, %c1_32, %c1_33] : memref<2x18x18xf32, #tpu.memory_space<vmem>>, vector<2x16x16xf32>
    tpu.vector_store %arg11[%c0_31, %c1_32, %c1_33], %45 {strides = array<i32>} : memref<2x18x18xf32, #tpu.memory_space<vmem>>, vector<2x16x16xf32>,
    %c0_34 = arith.constant 0 : index
    %c0_35 = arith.constant 0 : index
    %c0_36 = arith.constant 0 : index
    %47 = vector.load %arg11[%c0_34, %c0_35, %c0_36] : memref<2x18x18xf32, #tpu.memory_space<vmem>>, vector<2x18x18xf32>
    %48 = vector.extract_strided_slice %47 {offsets = [0, 0, 0], sizes = [2, 16, 16], strides = [1, 1, 1]} : vector<2x18x18xf32> to vector<2x16x16xf32>
    %49 = vector.shape_cast %48 : vector<2x16x16xf32> to vector<2x256xf32>
    %50 = vector.extract_strided_slice %47 {offsets = [0, 0, 1], sizes = [2, 16, 16], strides = [1, 1, 1]} : vector<2x18x18xf32> to vector<2x16x16xf32>
    %51 = vector.shape_cast %50 : vector<2x16x16xf32> to vector<2x256xf32>
    %52 = vector.extract_strided_slice %47 {offsets = [0, 0, 2], sizes = [2, 16, 16], strides = [1, 1, 1]} : vector<2x18x18xf32> to vector<2x16x16xf32>
    %53 = vector.shape_cast %52 : vector<2x16x16xf32> to vector<2x256xf32>
    %54 = vector.extract_strided_slice %47 {offsets = [0, 1, 0], sizes = [2, 16, 16], strides = [1, 1, 1]} : vector<2x18x18xf32> to vector<2x16x16xf32>
    %55 = vector.shape_cast %54 : vector<2x16x16xf32> to vector<2x256xf32>
    %56 = vector.extract_strided_slice %47 {offsets = [0, 1, 1], sizes = [2, 16, 16], strides = [1, 1, 1]} : vector<2x18x18xf32> to vector<2x16x16xf32>
    %57 = vector.shape_cast %56 : vector<2x16x16xf32> to vector<2x256xf32>
    %58 = vector.extract_strided_slice %47 {offsets = [0, 1, 2], sizes = [2, 16, 16], strides = [1, 1, 1]} : vector<2x18x18xf32> to vector<2x16x16xf32>
    %59 = vector.shape_cast %58 : vector<2x16x16xf32> to vector<2x256xf32>
    %60 = vector.extract_strided_slice %47 {offsets = [0, 2, 0], sizes = [2, 16, 16], strides = [1, 1, 1]} : vector<2x18x18xf32> to vector<2x16x16xf32>
    %61 = vector.shape_cast %60 : vector<2x16x16xf32> to vector<2x256xf32>
    %62 = vector.extract_strided_slice %47 {offsets = [0, 2, 1], sizes = [2, 16, 16], strides = [1, 1, 1]} : vector<2x18x18xf32> to vector<2x16x16xf32>
    %63 = vector.shape_cast %62 : vector<2x16x16xf32> to vector<2x256xf32>
    %64 = vector.extract_strided_slice %47 {offsets = [0, 2, 2], sizes = [2, 16, 16], strides = [1, 1, 1]} : vector<2x18x18xf32> to vector<2x16x16xf32>
    %65 = vector.shape_cast %64 : vector<2x16x16xf32> to vector<2x256xf32>
    %66 = tpu.concatenate %49, %51, %53, %55, %57, %59, %61, %63, %65 in 0 : vector<2x256xf32>, vector<2x256xf32>, vector<2x256xf32>, vector<2x256xf32>, vector<2x256xf32>, vector<2x256xf32>, vector<2x256xf32>, vector<2x256xf32>, vector<2x256xf32> -> vector<18x256xf32>
    %c0_37 = arith.constant 0 : index
    %c0_38 = arith.constant 0 : index
    %67 = vector.load %arg7[%c0_37, %c0_38] : memref<3x18xf32, #tpu.memory_space<vmem>>, vector<3x18xf32>
    %cst_39 = arith.constant dense<0.000000e+00> : vector<3x256xf32>
    %68 = tpu.matmul %67, %66, %cst_39 {dimension_numbers = #tpu.dot_dimension_numbers<[1], [0], [0], [1], [0, 0, 1, 1], [], []>} : vector<3x18xf32>, vector<18x256xf32>, vector<3x256xf32> -> vector<3x256xf32>
    %c0_40 = arith.constant 0 : index
    %c0_41 = arith.constant 0 : index
    %69 = vector.load %arg8[%c0_40, %c0_41] : memref<3x1xf32, #tpu.memory_space<vmem>>, vector<3x1xf32>
    %70 = vector.broadcast %69 : vector<3x1xf32> to vector<3x256xf32>
    %71 = arith.addf %68, %70 : vector<3x256xf32>
    %cst_42 = arith.constant 0.000000e+00 : f32
    %72 = vector.broadcast %cst_42 : f32 to vector<3x256xf32>
    %73 = arith.maximumf %71, %72 : vector<3x256xf32>
    %c0_43 = arith.constant 0 : index
    %c0_44 = arith.constant 0 : index
    %c0_45 = arith.constant 0 : index
    %74 = vector.load %arg9[%c0_43, %c0_44, %c0_45] : memref<1x3x256xf32, #tpu.memory_space<vmem>>, vector<1x3x256xf32>
    %75 = vector.shape_cast %74 : vector<1x3x256xf32> to vector<3x256xf32>
    %76 = vector.shape_cast %73 : vector<3x256xf32> to vector<1x3x256xf32>
    tpu.vector_store %arg9[%c0_43, %c0_44, %c0_45], %76 {strides = array<i32>} : memref<1x3x256xf32, #tpu.memory_space<vmem>>, vector<1x3x256xf32>,
    return
  }
  func.func @transform_0(%arg0: i32) -> (i32, i32, i32, i32) {
    %c0_i32 = arith.constant 0 : i32
    %c0_i32_0 = arith.constant 0 : i32
    %c0_i32_1 = arith.constant 0 : i32
    %c0_i32_2 = arith.constant 0 : i32
    return %arg0, %c0_i32, %c0_i32_0, %c0_i32_1 : i32, i32, i32, i32
  }
  func.func @transform_1(%arg0: i32) -> (i32, i32, i32, i32) {
    %c0_i32 = arith.constant 0 : i32
    %c0_i32_0 = arith.constant 0 : i32
    %c0_i32_1 = arith.constant 0 : i32
    %c0_i32_2 = arith.constant 0 : i32
    return %arg0, %c0_i32, %c0_i32_0, %c0_i32_1 : i32, i32, i32, i32
  }
  func.func @transform_2(%arg0: i32) -> (i32, i32) {
    %c0_i32 = arith.constant 0 : i32
    %c0_i32_0 = arith.constant 0 : i32
    %c0_i32_1 = arith.constant 0 : i32
    return %c0_i32, %c0_i32_0 : i32, i32
  }
  func.func @transform_3(%arg0: i32) -> (i32, i32) {
    %c0_i32 = arith.constant 0 : i32
    %c0_i32_0 = arith.constant 0 : i32
    %c0_i32_1 = arith.constant 0 : i32
    return %c0_i32, %c0_i32_0 : i32, i32
  }
  func.func @transform_4(%arg0: i32) -> (i32, i32) {
    %c0_i32 = arith.constant 0 : i32
    %c0_i32_0 = arith.constant 0 : i32
    %c0_i32_1 = arith.constant 0 : i32
    return %c0_i32, %c0_i32_0 : i32, i32
  }
  func.func @transform_5(%arg0: i32) -> (i32, i32) {
    %c0_i32 = arith.constant 0 : i32
    %c0_i32_0 = arith.constant 0 : i32
    %c0_i32_1 = arith.constant 0 : i32
    return %c0_i32, %c0_i32_0 : i32, i32
  }
  func.func @transform_6(%arg0: i32) -> (i32, i32) {
    %c0_i32 = arith.constant 0 : i32
    %c0_i32_0 = arith.constant 0 : i32
    %c0_i32_1 = arith.constant 0 : i32
    return %c0_i32, %c0_i32_0 : i32, i32
  }
  func.func @transform_7(%arg0: i32) -> (i32, i32) {
    %c0_i32 = arith.constant 0 : i32
    %c0_i32_0 = arith.constant 0 : i32
    %c0_i32_1 = arith.constant 0 : i32
    return %c0_i32, %c0_i32_0 : i32, i32
  }
  func.func @transform_8(%arg0: i32) -> (i32, i32, i32) {
    %c0_i32 = arith.constant 0 : i32
    %c0_i32_0 = arith.constant 0 : i32
    %c0_i32_1 = arith.constant 0 : i32
    return %arg0, %c0_i32, %c0_i32_0 : i32, i32, i32
  }
}

</mosaic_0001>

<llo_original>
// kernel: tpu_custom_call.1
$region0: #{tpu_custom_call.1}
  #allocation0 [shape = 'u32[]', space=smem, size = 0x4, offset = 0x4, fixed_abs, tag = 'smem constant byte address 0x4 - core index']
  #allocation1 [shape = 'u32[72,128]{1,0:T(1,128)}', space=vmem, size = 0x9000, scoped, tag = 'internal scratch']
  #allocation2 [shape = 'f32[4,18,18]{2,1,0:T(8,128)}', space=vmem, size = 0xc000, scoped, tag = 'scratch operand']
  #allocation3 [shape = 'f32[2,18,18]{2,1,0:T(8,128)}', space=vmem, size = 0x6000, scoped, tag = 'scratch operand']
  %s0 = inlined_call_operand.hbm [shape: f32[2,4,8,8], index: 0, kind: input, shape index: {}]
  %s1 = inlined_call_operand.hbm [shape: f32[2,4,16,16], index: 1, kind: input, shape index: {}]
  %s2 = inlined_call_operand.vmem [shape: f32[16,8], index: 2, kind: input, shape index: {}]
  %s3 = inlined_call_operand.vmem [shape: f32[8,16], index: 3, kind: input, shape index: {}]
  %s4 = inlined_call_operand.vmem [shape: f32[2,36], index: 4, kind: input, shape index: {}]
  %s5 = inlined_call_operand.vmem [shape: f32[2,1], index: 5, kind: input, shape index: {}]
  %s6 = inlined_call_operand.vmem [shape: f32[3,18], index: 6, kind: input, shape index: {}]
  %s7 = inlined_call_operand.vmem [shape: f32[3,1], index: 7, kind: input, shape index: {}]
  %s8 = inlined_call_operand.vmem [shape: f32[2,3,256], index: 8, kind: output, shape index: {}]
  %s9 = sld [smem:[#allocation0]]
  $region73: #{tpu_custom_call.1} parent=0
    _
  %s11 = ssub.s32 1, %s9
  %s12 = scalar_select 0, %s11, %s9
  $region1: #{tpu_custom_call.1} parent=0
    #allocation4 [shape = 'u8[32768]{0}', space=vmem, size = 0x8000, scoped, tag = 'input window, operand 0']
    #allocation5 [shape = 's32[2]{0}', space=sflag, size = 0x8, scoped, tag = 'scoped memory for tpu_custom_call.1']
    #allocation6 [shape = 'u8[65536]{0}', space=vmem, size = 0x10000, scoped, tag = 'input window, operand 1']
    #allocation7 [shape = 's32[2]{0}', space=sflag, size = 0x8, scoped, tag = 'scoped memory for tpu_custom_call.1']
    %13 = vsyncpa [#allocation5], 0
    %s14 = scalar_lea.sflag [#allocation5], 1
    %15 = vsyncpa %s14, 0
    %16 = vsyncpa [#allocation7], 0
    %s17 = scalar_lea.sflag [#allocation7], 1
    %18 = vsyncpa %s17, 0
    loop: start=0, step=1, limit=4
    $region2: #{tpu_custom_call.1} parent=1 // loop_pre_header
      _
    $region3: #{tpu_custom_call.1} parent=1 // loop_header
      %s20 = sphi 0, %s24
      %p21 = scmp.ge.s32.totalorder %s20, 4
      %s30 = sphi 0, %s32
      %s33 = sphi 0, %s30
      %s34 = sphi 0, %s33
      %s50 = sphi 0, %s34
      %s56 = sphi 0, %s58
      %s59 = sphi 0, %s56
      %s60 = sphi 0, %s59
      %s76 = sphi 0, %s60
      %s80 = sphi 0, %s80
      %s82 = sphi 0, %s80
      %s83 = sphi 0, %s82
      %s97 = sphi 0, %s83
      %s101 = sphi 0, %s101
      %s103 = sphi 0, %s101
      %s104 = sphi 0, %s103
      %s118 = sphi 0, %s104
      %s122 = sphi 0, %s122
      %s124 = sphi 0, %s122
      %s125 = sphi 0, %s124
      %s139 = sphi 0, %s125
      %s143 = sphi 0, %s143
      %s145 = sphi 0, %s143
      %s146 = sphi 0, %s145
      %s160 = sphi 0, %s146
      %s164 = sphi 0, %s164
      %s166 = sphi 0, %s164
      %s167 = sphi 0, %s166
      %s181 = sphi 0, %s167
      %s185 = sphi 0, %s185
      %s187 = sphi 0, %s185
      %s188 = sphi 0, %s187
      %s202 = sphi 0, %s188
      %s208 = sphi 0, %s210
      %s211 = sphi 0, %s208
      %s212 = sphi 0, %s211
      %s228 = sphi 0, %s212
    $region4: #{tpu_custom_call.1} parent=1 // loop_header_branch
      %23 = sbr.rel (%p21) target = $region8
    $region5: #{tpu_custom_call.1} parent=1 // loop_body
      %s25 = ssub.s32 %s20, 1
      %s26 = ssub.s32 %s20, 2
      %s27 = sadd.s32 %s20, 1
      %s28 = ssub.s32 %s20, %s27
      %p29 = scmp.eq.s32.totalorder %s28, 0
      %s31 = sadd.s32 %s30, 1
      %s32 = scalar_select %p29, %s30, %s31
      %p35 = pneg %p29
      %p36 = scmp.eq.s32.totalorder %s20, 1
      %p37 = por %p35, %p36
      %p38 = scmp.ne.s32.totalorder %s30, %s33
      %p39 = scmp.eq.s32.totalorder %s20, 0
      %p40 = por %p38, %p39
      %p41 = scmp.ne.s32.totalorder %s30, %s33
      %p42 = scmp.eq.s32.totalorder %s25, 1
      %p43 = por %p41, %p42
      %p44 = scmp.ne.s32.totalorder %s33, %s34
      %p45 = scmp.eq.s32.totalorder %s25, 0
      %p46 = por %p44, %p45
      %p47 = scmp.ne.s32.totalorder %s33, %s34
      %p48 = scmp.eq.s32.totalorder %s26, 1
      %p49 = por %p47, %p48
      %p51 = scmp.ne.s32.totalorder %s34, %s50
      %p52 = scmp.eq.s32.totalorder %s26, 0
      %p53 = por %p51, %p52
      %s54 = ssub.s32 %s20, %s27
      %p55 = scmp.eq.s32.totalorder %s54, 0
      %s57 = sadd.s32 %s56, 1
      %s58 = scalar_select %p55, %s56, %s57
      %p61 = pneg %p55
      %p62 = scmp.eq.s32.totalorder %s20, 1
      %p63 = por %p61, %p62
      %p64 = scmp.ne.s32.totalorder %s56, %s59
      %p65 = scmp.eq.s32.totalorder %s20, 0
      %p66 = por %p64, %p65
      %p67 = scmp.ne.s32.totalorder %s56, %s59
      %p68 = scmp.eq.s32.totalorder %s25, 1
      %p69 = por %p67, %p68
      %p70 = scmp.ne.s32.totalorder %s59, %s60
      %p71 = scmp.eq.s32.totalorder %s25, 0
      %p72 = por %p70, %p71
      %p73 = scmp.ne.s32.totalorder %s59, %s60
      %p74 = scmp.eq.s32.totalorder %s26, 1
      %p75 = por %p73, %p74
      %p77 = scmp.ne.s32.totalorder %s60, %s76
      %p78 = scmp.eq.s32.totalorder %s26, 0
      %p79 = por %p77, %p78
      %s81 = sadd.s32 %s80, 1
      %p84 = scmp.eq.s32.totalorder %s20, 1
      %p85 = scmp.ne.s32.totalorder %s80, %s82
      %p86 = scmp.eq.s32.totalorder %s20, 0
      %p87 = por %p85, %p86
      %p88 = scmp.ne.s32.totalorder %s80, %s82
      %p89 = scmp.eq.s32.totalorder %s25, 1
      %p90 = por %p88, %p89
      %p91 = scmp.ne.s32.totalorder %s82, %s83
      %p92 = scmp.eq.s32.totalorder %s25, 0
      %p93 = por %p91, %p92
      %p94 = scmp.ne.s32.totalorder %s82, %s83
      %p95 = scmp.eq.s32.totalorder %s26, 1
      %p96 = por %p94, %p95
      %p98 = scmp.ne.s32.totalorder %s83, %s97
      %p99 = scmp.eq.s32.totalorder %s26, 0
      %p100 = por %p98, %p99
      %s102 = sadd.s32 %s101, 1
      %p105 = scmp.eq.s32.totalorder %s20, 1
      %p106 = scmp.ne.s32.totalorder %s101, %s103
      %p107 = scmp.eq.s32.totalorder %s20, 0
      %p108 = por %p106, %p107
      %p109 = scmp.ne.s32.totalorder %s101, %s103
      %p110 = scmp.eq.s32.totalorder %s25, 1
      %p111 = por %p109, %p110
      %p112 = scmp.ne.s32.totalorder %s103, %s104
      %p113 = scmp.eq.s32.totalorder %s25, 0
      %p114 = por %p112, %p113
      %p115 = scmp.ne.s32.totalorder %s103, %s104
      %p116 = scmp.eq.s32.totalorder %s26, 1
      %p117 = por %p115, %p116
      %p119 = scmp.ne.s32.totalorder %s104, %s118
      %p120 = scmp.eq.s32.totalorder %s26, 0
      %p121 = por %p119, %p120
      %s123 = sadd.s32 %s122, 1
      %p126 = scmp.eq.s32.totalorder %s20, 1
      %p127 = scmp.ne.s32.totalorder %s122, %s124
      %p128 = scmp.eq.s32.totalorder %s20, 0
      %p129 = por %p127, %p128
      %p130 = scmp.ne.s32.totalorder %s122, %s124
      %p131 = scmp.eq.s32.totalorder %s25, 1
      %p132 = por %p130, %p131
      %p133 = scmp.ne.s32.totalorder %s124, %s125
      %p134 = scmp.eq.s32.totalorder %s25, 0
      %p135 = por %p133, %p134
      %p136 = scmp.ne.s32.totalorder %s124, %s125
      %p137 = scmp.eq.s32.totalorder %s26, 1
      %p138 = por %p136, %p137
      %p140 = scmp.ne.s32.totalorder %s125, %s139
      %p141 = scmp.eq.s32.totalorder %s26, 0
      %p142 = por %p140, %p141
      %s144 = sadd.s32 %s143, 1
      %p147 = scmp.eq.s32.totalorder %s20, 1
      %p148 = scmp.ne.s32.totalorder %s143, %s145
      %p149 = scmp.eq.s32.totalorder %s20, 0
      %p150 = por %p148, %p149
      %p151 = scmp.ne.s32.totalorder %s143, %s145
      %p152 = scmp.eq.s32.totalorder %s25, 1
      %p153 = por %p151, %p152
      %p154 = scmp.ne.s32.totalorder %s145, %s146
      %p155 = scmp.eq.s32.totalorder %s25, 0
      %p156 = por %p154, %p155
      %p157 = scmp.ne.s32.totalorder %s145, %s146
      %p158 = scmp.eq.s32.totalorder %s26, 1
      %p159 = por %p157, %p158
      %p161 = scmp.ne.s32.totalorder %s146, %s160
      %p162 = scmp.eq.s32.totalorder %s26, 0
      %p163 = por %p161, %p162
      %s165 = sadd.s32 %s164, 1
      %p168 = scmp.eq.s32.totalorder %s20, 1
      %p169 = scmp.ne.s32.totalorder %s164, %s166
      %p170 = scmp.eq.s32.totalorder %s20, 0
      %p171 = por %p169, %p170
      %p172 = scmp.ne.s32.totalorder %s164, %s166
      %p173 = scmp.eq.s32.totalorder %s25, 1
      %p174 = por %p172, %p173
      %p175 = scmp.ne.s32.totalorder %s166, %s167
      %p176 = scmp.eq.s32.totalorder %s25, 0
      %p177 = por %p175, %p176
      %p178 = scmp.ne.s32.totalorder %s166, %s167
      %p179 = scmp.eq.s32.totalorder %s26, 1
      %p180 = por %p178, %p179
      %p182 = scmp.ne.s32.totalorder %s167, %s181
      %p183 = scmp.eq.s32.totalorder %s26, 0
      %p184 = por %p182, %p183
      %s186 = sadd.s32 %s185, 1
      %p189 = scmp.eq.s32.totalorder %s20, 1
      %p190 = scmp.ne.s32.totalorder %s185, %s187
      %p191 = scmp.eq.s32.totalorder %s20, 0
      %p192 = por %p190, %p191
      %p193 = scmp.ne.s32.totalorder %s185, %s187
      %p194 = scmp.eq.s32.totalorder %s25, 1
      %p195 = por %p193, %p194
      %p196 = scmp.ne.s32.totalorder %s187, %s188
      %p197 = scmp.eq.s32.totalorder %s25, 0
      %p198 = por %p196, %p197
      %p199 = scmp.ne.s32.totalorder %s187, %s188
      %p200 = scmp.eq.s32.totalorder %s26, 1
      %p201 = por %p199, %p200
      %p203 = scmp.ne.s32.totalorder %s188, %s202
      %p204 = scmp.eq.s32.totalorder %s26, 0
      %p205 = por %p203, %p204
      %s206 = ssub.s32 %s20, %s27
      %p207 = scmp.eq.s32.totalorder %s206, 0
      %s209 = sadd.s32 %s208, 1
      %s210 = scalar_select %p207, %s208, %s209
      %p213 = pneg %p207
      %p214 = scmp.eq.s32.totalorder %s20, 1
      %p215 = por %p213, %p214
      %p216 = scmp.ne.s32.totalorder %s208, %s211
      %p217 = scmp.eq.s32.totalorder %s20, 0
      %p218 = por %p216, %p217
      %p219 = scmp.ne.s32.totalorder %s208, %s211
      %p220 = scmp.eq.s32.totalorder %s25, 1
      %p221 = por %p219, %p220
      %p222 = scmp.ne.s32.totalorder %s211, %s212
      %p223 = scmp.eq.s32.totalorder %s25, 0
      %p224 = por %p222, %p223
      %p225 = scmp.ne.s32.totalorder %s211, %s212
      %p226 = scmp.eq.s32.totalorder %s26, 1
      %p227 = por %p225, %p226
      %p229 = scmp.ne.s32.totalorder %s212, %s228
      %p230 = scmp.eq.s32.totalorder %s26, 0
      %p231 = por %p229, %p230
      %p232 = scmp.le.s32.totalorder 1, %s20
      %p233 = scmp.lt.s32.totalorder %s20, 3
      %p234 = pnand %p232, %p233
      %p235 = pneg %p234
      // Predicated region
      $region9: #{tpu_custom_call.1} parent=5 // pred_check
        _
      $region10: #{tpu_custom_call.1} parent=5 // pred_check_branch
        %237 = sbr.rel (%p234) target = $region12
      $region11: #{tpu_custom_call.1} parent=5 // pred_region
        %s238 = ssub.s32 %s20, 1
        // Predicated region
        $region13: #{tpu_custom_call.1} parent=11 // pred_check
          %p239 = pneg %p93
        $region14: #{tpu_custom_call.1} parent=11 // pred_check_branch
          %241 = sbr.rel (%p239) target = $region16
        $region15: #{tpu_custom_call.1} parent=11 // pred_region
          _
        $region16: #{tpu_custom_call.1} parent=11 // pred_fallthru
          _
        // Predicated region
        $region17: #{tpu_custom_call.1} parent=11 // pred_check
          %p242 = pneg %p114
        $region18: #{tpu_custom_call.1} parent=11 // pred_check_branch
          %244 = sbr.rel (%p242) target = $region20
        $region19: #{tpu_custom_call.1} parent=11 // pred_region
          _
        $region20: #{tpu_custom_call.1} parent=11 // pred_fallthru
          _
        // Predicated region
        $region21: #{tpu_custom_call.1} parent=11 // pred_check
          %p245 = pneg %p135
        $region22: #{tpu_custom_call.1} parent=11 // pred_check_branch
          %247 = sbr.rel (%p245) target = $region24
        $region23: #{tpu_custom_call.1} parent=11 // pred_region
          _
        $region24: #{tpu_custom_call.1} parent=11 // pred_fallthru
          _
        // Predicated region
        $region25: #{tpu_custom_call.1} parent=11 // pred_check
          %p248 = pneg %p156
        $region26: #{tpu_custom_call.1} parent=11 // pred_check_branch
          %250 = sbr.rel (%p248) target = $region28
        $region27: #{tpu_custom_call.1} parent=11 // pred_region
          _
        $region28: #{tpu_custom_call.1} parent=11 // pred_fallthru
          _
        // Predicated region
        $region29: #{tpu_custom_call.1} parent=11 // pred_check
          %p251 = pneg %p177
        $region30: #{tpu_custom_call.1} parent=11 // pred_check_branch
          %253 = sbr.rel (%p251) target = $region32
        $region31: #{tpu_custom_call.1} parent=11 // pred_region
          _
        $region32: #{tpu_custom_call.1} parent=11 // pred_fallthru
          _
        // Predicated region
        $region33: #{tpu_custom_call.1} parent=11 // pred_check
          %p254 = pneg %p198
        $region34: #{tpu_custom_call.1} parent=11 // pred_check_branch
          %256 = sbr.rel (%p254) target = $region36
        $region35: #{tpu_custom_call.1} parent=11 // pred_region
          _
        $region36: #{tpu_custom_call.1} parent=11 // pred_fallthru
          _
      $region12: #{tpu_custom_call.1} parent=5 // pred_fallthru
        _
      %p257 = scmp.lt.s32.totalorder %s20, 2
      // Predicated region
      $region37: #{tpu_custom_call.1} parent=5 // pred_check
        %p258 = pneg %p257
      $region38: #{tpu_custom_call.1} parent=5 // pred_check_branch
        %260 = sbr.rel (%p258) target = $region40
      $region39: #{tpu_custom_call.1} parent=5 // pred_region
        // Predicated region
        $region41: #{tpu_custom_call.1} parent=39 // pred_check
          %p261 = pneg %p40
        $region42: #{tpu_custom_call.1} parent=39 // pred_check_branch
          %263 = sbr.rel (%p261) target = $region44
        $region43: #{tpu_custom_call.1} parent=39 // pred_region
          %s264 = sand.u32 %s30, 1
          %s265 = scalar_lea.sflag [#allocation5], %s264
          %s266 = sand.u32 %s30, 1
          %s267 = smul.addr %s266, 32
          %s268 = scalar_lea.vmem [#allocation4], %s267
          %270 = vsyncadd %s265, 0
          %s271 = smul.addr %s20, 4
          %s272 = smul.addr %s271, 8
          %s273 = scalar_lea.hbm %s0, %s272
          %s274 = sshll.u32 %s273, 4
          %s275 = int_to_ptr.hbm [resolvable:$true] %s274
          %s276 = sshll.u32 %s268, 4
          %s277 = int_to_ptr.vmem [resolvable:$true] %s276
          %282 = dma.hbm_to_vmem [thread:$0]  %s275, 512, %s277, %s265, 128, 128, 8
        $region44: #{tpu_custom_call.1} parent=39 // pred_fallthru
          _
        // Predicated region
        $region45: #{tpu_custom_call.1} parent=39 // pred_check
          %p283 = pneg %p66
        $region46: #{tpu_custom_call.1} parent=39 // pred_check_branch
          %285 = sbr.rel (%p283) target = $region48
        $region47: #{tpu_custom_call.1} parent=39 // pred_region
          %s286 = sand.u32 %s56, 1
          %s287 = scalar_lea.sflag [#allocation7], %s286
          %s288 = sand.u32 %s56, 1
          %s289 = smul.addr %s288, 64
          %s290 = scalar_lea.vmem [#allocation6], %s289
          %292 = vsyncadd %s287, 0
          %s293 = smul.addr %s20, 8
          %s294 = smul.addr %s293, 8
          %s295 = scalar_lea.hbm %s1, %s294
          %s296 = sshll.u32 %s295, 4
          %s297 = int_to_ptr.hbm [resolvable:$true] %s296
          %s298 = sshll.u32 %s290, 4
          %s299 = int_to_ptr.vmem [resolvable:$true] %s298
          %304 = dma.hbm_to_vmem [thread:$0]  %s297, 1024, %s299, %s287, 128, 128, 8
        $region48: #{tpu_custom_call.1} parent=39 // pred_fallthru
          _
      $region40: #{tpu_custom_call.1} parent=5 // pred_fallthru
        _
      %p305 = scmp.le.s32.totalorder 1, %s20
      %p306 = scmp.lt.s32.totalorder %s20, 3
      %p307 = pnand %p305, %p306
      %p308 = pneg %p307
      // Predicated region
      $region49: #{tpu_custom_call.1} parent=5 // pred_check
        _
      $region50: #{tpu_custom_call.1} parent=5 // pred_check_branch
        %310 = sbr.rel (%p307) target = $region52
      $region51: #{tpu_custom_call.1} parent=5 // pred_region
        %s311 = ssub.s32 %s20, 1
        %s312 = sand.u32 %s33, 1
        %s313 = scalar_lea.sflag [#allocation5], %s312
        %s314 = sand.u32 %s33, 1
        %s315 = smul.addr %s314, 32
        %s316 = scalar_lea.vmem [#allocation4], %s315
        // Predicated region
        $region53: #{tpu_custom_call.1} parent=51 // pred_check
          %p317 = pneg %p46
        $region54: #{tpu_custom_call.1} parent=51 // pred_check_branch
          %319 = sbr.rel (%p317) target = $region56
        $region55: #{tpu_custom_call.1} parent=51 // pred_region
          %321 = dma.done %s313, 512
        $region56: #{tpu_custom_call.1} parent=51 // pred_fallthru
          _
        %s322 = sand.u32 %s59, 1
        %s323 = scalar_lea.sflag [#allocation7], %s322
        %s324 = sand.u32 %s59, 1
        %s325 = smul.addr %s324, 64
        %s326 = scalar_lea.vmem [#allocation6], %s325
        // Predicated region
        $region57: #{tpu_custom_call.1} parent=51 // pred_check
          %p327 = pneg %p72
        $region58: #{tpu_custom_call.1} parent=51 // pred_check_branch
          %329 = sbr.rel (%p327) target = $region60
        $region59: #{tpu_custom_call.1} parent=51 // pred_region
          %331 = dma.done %s323, 1024
        $region60: #{tpu_custom_call.1} parent=51 // pred_fallthru
          _
        %s332 = sand.u32 %s33, 1
        %s333 = scalar_lea.sflag [#allocation5], %s332
        %s334 = sand.u32 %s33, 1
        %s335 = smul.addr %s334, 32
        %s336 = scalar_lea.vmem [#allocation4], %s335
        %p337 = pneg %p46
        %p338 = pneg %p43
        %s339 = sand.u32 %s59, 1
        %s340 = scalar_lea.sflag [#allocation7], %s339
        %s341 = sand.u32 %s59, 1
        %s342 = smul.addr %s341, 64
        %s343 = scalar_lea.vmem [#allocation6], %s342
        %p344 = pneg %p72
        %p345 = pneg %p69
        %p346 = pneg %p93
        %p347 = pneg %p90
        %p348 = pneg %p114
        %p349 = pneg %p111
        %p350 = pneg %p135
        %p351 = pneg %p132
        %p352 = pneg %p156
        %p353 = pneg %p153
        %p354 = pneg %p177
        %p355 = pneg %p174
        %p356 = pneg %p198
        %p357 = pneg %p195
        %p358 = pneg %p224
        %p359 = pneg %p221
        %p360 = scmp.lt.s32.totalorder %s25, 1
        %s361 = scalar_select %p360, %s25, 1
        %s362 = smul.addr %s361, 2
        %s363 = smul.addr %s362, 4
        %s364 = scalar_lea.vmem %s8, %s363
        %p365 = scmp.lt.s32.totalorder %s25, 1
        %s366 = scalar_select %p365, %s25, 1
        %s367 = smul.addr %s366, 2
        %s368 = smul.addr %s367, 4
        %s369 = scalar_lea.vmem %s8, %s368
        %v370 = vld [vmem:[%s316] sm:$0xff]
        %v371 = vld [vmem:[%s316 + $0x8] sm:$0xff]
        %v372 = vld [vmem:[%s316 + $0x10] sm:$0xff]
        %v373 = vld [vmem:[%s316 + $0x18] sm:$0xff]
        %v374 = vld [vmem:[%s326] sm:$0xff]
        %v375 = vld [vmem:[%s326 + $0x8] sm:$0xff]
        %v376 = vld [vmem:[%s326 + $0x10] sm:$0xff]
        %v377 = vld [vmem:[%s326 + $0x18] sm:$0xff]
        %v378 = vld [vmem:[%s326 + $0x20] sm:$0xff]
        %v379 = vld [vmem:[%s326 + $0x28] sm:$0xff]
        %v380 = vld [vmem:[%s326 + $0x30] sm:$0xff]
        %v381 = vld [vmem:[%s326 + $0x38] sm:$0xff]
        %v382 = vld [vmem:[%s3] sm:$0xff]
        %vm383 = vcmask 64512
        %v385 = vsel %vm383, %v370, 0
        %v388 = vsel %vm383, %v371, 0
        %v391 = vsel %vm383, %v372, 0
        %v394 = vsel %vm383, %v373, 0
        %396 = vmatpush.msra.mxu0 0.0
        %397 = vmatpush.msra.mxu0 0.0
        %398 = vmatpush.msra.mxu0 0.0
        %399 = vmatpush.msra.mxu0 0.0
        %400 = vmatpush.msra.mxu0 0.0
        %401 = vmatpush.msra.mxu0 0.0
        %402 = vmatpush.msra.mxu0 0.0
        %403 = vmatpush.msra.mxu0 0.0
        %404 = vmatpush.msra.mxu0 0.0
        %405 = vmatpush.msra.mxu0 0.0
        %406 = vmatpush.msra.mxu0 0.0
        %407 = vmatpush.msra.mxu0 0.0
        %408 = vmatpush.msra.mxu0 0.0
        %409 = vmatpush.msra.mxu0 0.0
        %410 = vmatpush.msra.mxu0 0.0
        %411 = vmatpush.msra.mxu0 %v382
        %412 = vmatmul.f32.gmra.mxu0 %v385
        %v413 = vpop.f32.mrf.mxu0
        %v414 = vadd.f32 0.0, %v413
        %415 = vmatmul.f32.gmra.mxu0 %v388
        %v416 = vpop.f32.mrf.mxu0
        %v417 = vadd.f32 0.0, %v416
        %418 = vmatmul.f32.gmra.mxu0 %v391
        %v419 = vpop.f32.mrf.mxu0
        %v420 = vadd.f32 0.0, %v419
        %421 = vmatmul.f32.gmra.mxu0 %v394
        %v422 = vpop.f32.mrf.mxu0
        %v423 = vadd.f32 0.0, %v422
        %424 = vdwg.mxu0
        %v425 = vld [vmem:[%s2] sm:$0xff]
        %v426 = vld [vmem:[%s2 + $0x8] sm:$0xff]
        %v428 = vsel %vm383, %v425, 0
        %v431 = vsel %vm383, %v426, 0
        %433 = vmatpush.msra.mxu0 0.0
        %434 = vmatpush.msra.mxu0 0.0
        %435 = vmatpush.msra.mxu0 0.0
        %436 = vmatpush.msra.mxu0 0.0
        %437 = vmatpush.msra.mxu0 0.0
        %438 = vmatpush.msra.mxu0 0.0
        %439 = vmatpush.msra.mxu0 0.0
        %440 = vmatpush.msra.mxu0 0.0
        %441 = vmatpush.msra.mxu0 0.0
        %442 = vmatpush.msra.mxu0 0.0
        %443 = vmatpush.msra.mxu0 0.0
        %444 = vmatpush.msra.mxu0 0.0
        %445 = vmatpush.msra.mxu0 0.0
        %446 = vmatpush.msra.mxu0 0.0
        %447 = vmatpush.msra.mxu0 0.0
        %448 = vmatpush.msra.mxu0 %v414
        %449 = vmatmul.f32.gmra.mxu0 %v428
        %v450 = vpop.f32.mrf.mxu0
        %v451 = vadd.f32 0.0, %v450
        %452 = vmatmul.f32.gmra.mxu0 %v431
        %v453 = vpop.f32.mrf.mxu0
        %v454 = vadd.f32 0.0, %v453
        %455 = vdwg.mxu0
        %456 = vmatpush.msra.mxu0 0.0
        %457 = vmatpush.msra.mxu0 0.0
        %458 = vmatpush.msra.mxu0 0.0
        %459 = vmatpush.msra.mxu0 0.0
        %460 = vmatpush.msra.mxu0 0.0
        %461 = vmatpush.msra.mxu0 0.0
        %462 = vmatpush.msra.mxu0 0.0
        %463 = vmatpush.msra.mxu0 0.0
        %464 = vmatpush.msra.mxu0 0.0
        %465 = vmatpush.msra.mxu0 0.0
        %466 = vmatpush.msra.mxu0 0.0
        %467 = vmatpush.msra.mxu0 0.0
        %468 = vmatpush.msra.mxu0 0.0
        %469 = vmatpush.msra.mxu0 0.0
        %470 = vmatpush.msra.mxu0 0.0
        %471 = vmatpush.msra.mxu0 %v417
        %472 = vmatmul.f32.gmra.mxu0 %v428
        %v473 = vpop.f32.mrf.mxu0
        %v474 = vadd.f32 0.0, %v473
        %475 = vmatmul.f32.gmra.mxu0 %v431
        %v476 = vpop.f32.mrf.mxu0
        %v477 = vadd.f32 0.0, %v476
        %478 = vdwg.mxu0
        %479 = vmatpush.msra.mxu0 0.0
        %480 = vmatpush.msra.mxu0 0.0
        %481 = vmatpush.msra.mxu0 0.0
        %482 = vmatpush.msra.mxu0 0.0
        %483 = vmatpush.msra.mxu0 0.0
        %484 = vmatpush.msra.mxu0 0.0
        %485 = vmatpush.msra.mxu0 0.0
        %486 = vmatpush.msra.mxu0 0.0
        %487 = vmatpush.msra.mxu0 0.0
        %488 = vmatpush.msra.mxu0 0.0
        %489 = vmatpush.msra.mxu0 0.0
        %490 = vmatpush.msra.mxu0 0.0
        %491 = vmatpush.msra.mxu0 0.0
        %492 = vmatpush.msra.mxu0 0.0
        %493 = vmatpush.msra.mxu0 0.0
        %494 = vmatpush.msra.mxu0 %v420
        %495 = vmatmul.f32.gmra.mxu0 %v428
        %v496 = vpop.f32.mrf.mxu0
        %v497 = vadd.f32 0.0, %v496
        %498 = vmatmul.f32.gmra.mxu0 %v431
        %v499 = vpop.f32.mrf.mxu0
        %v500 = vadd.f32 0.0, %v499
        %501 = vdwg.mxu0
        %502 = vmatpush.msra.mxu0 0.0
        %503 = vmatpush.msra.mxu0 0.0
        %504 = vmatpush.msra.mxu0 0.0
        %505 = vmatpush.msra.mxu0 0.0
        %506 = vmatpush.msra.mxu0 0.0
        %507 = vmatpush.msra.mxu0 0.0
        %508 = vmatpush.msra.mxu0 0.0
        %509 = vmatpush.msra.mxu0 0.0
        %510 = vmatpush.msra.mxu0 0.0
        %511 = vmatpush.msra.mxu0 0.0
        %512 = vmatpush.msra.mxu0 0.0
        %513 = vmatpush.msra.mxu0 0.0
        %514 = vmatpush.msra.mxu0 0.0
        %515 = vmatpush.msra.mxu0 0.0
        %516 = vmatpush.msra.mxu0 0.0
        %517 = vmatpush.msra.mxu0 %v423
        %518 = vmatmul.f32.gmra.mxu0 %v428
        %v519 = vpop.f32.mrf.mxu0
        %v520 = vadd.f32 0.0, %v519
        %521 = vmatmul.f32.gmra.mxu0 %v431
        %v522 = vpop.f32.mrf.mxu0
        %v523 = vadd.f32 0.0, %v522
        %524 = vdwg.mxu0
        %vm525 = vcmask 146432
        %526 = vst.msk [vmem:[#allocation2] sm:$0xff] %vm525, 0.0
        %527 = vst.msk [vmem:[#allocation2 + $0x8] sm:$0xff] %vm525, 0.0
        %vm528 = vcmask 140288
        %529 = vst.msk [vmem:[#allocation2 + $0x10] sm:$0x3] %vm528, 0.0
        %530 = vst.msk [vmem:[#allocation2 + $0x18] sm:$0xff] %vm525, 0.0
        %531 = vst.msk [vmem:[#allocation2 + $0x20] sm:$0xff] %vm525, 0.0
        %532 = vst.msk [vmem:[#allocation2 + $0x28] sm:$0x3] %vm528, 0.0
        %533 = vst.msk [vmem:[#allocation2 + $0x30] sm:$0xff] %vm525, 0.0
        %534 = vst.msk [vmem:[#allocation2 + $0x38] sm:$0xff] %vm525, 0.0
        %535 = vst.msk [vmem:[#allocation2 + $0x40] sm:$0x3] %vm528, 0.0
        %536 = vst.msk [vmem:[#allocation2 + $0x48] sm:$0xff] %vm525, 0.0
        %537 = vst.msk [vmem:[#allocation2 + $0x50] sm:$0xff] %vm525, 0.0
        %538 = vst.msk [vmem:[#allocation2 + $0x58] sm:$0x3] %vm528, 0.0
        %v539 = vadd.f32 %v374, %v451
        %v540 = vadd.f32 %v375, %v454
        %v541 = vadd.f32 %v376, %v474
        %v542 = vadd.f32 %v377, %v477
        %v543 = vadd.f32 %v378, %v497
        %v544 = vadd.f32 %v379, %v500
        %v545 = vadd.f32 %v380, %v520
        %v546 = vadd.f32 %v381, %v523
        %555 = vrot.lane.b32.xlu0 %v539, 1
        %v556 = vpop.permute.xlu0 %555
        %557 = vrot.lane.b32.xlu0 %v540, 1
        %v558 = vpop.permute.xlu0 %557
        %559 = vrot.lane.b32.xlu0 %v541, 1
        %v560 = vpop.permute.xlu0 %559
        %561 = vrot.lane.b32.xlu0 %v542, 1
        %v562 = vpop.permute.xlu0 %561
        %563 = vrot.lane.b32.xlu0 %v543, 1
        %v564 = vpop.permute.xlu0 %563
        %565 = vrot.lane.b32.xlu0 %v544, 1
        %v566 = vpop.permute.xlu0 %565
        %567 = vrot.lane.b32.xlu0 %v545, 1
        %v568 = vpop.permute.xlu0 %567
        %569 = vrot.lane.b32.xlu0 %v546, 1
        %v570 = vpop.permute.xlu0 %569
        %vm579 = vcmask 138248
        %580 = vst.msk [vmem:[#allocation2 + $0x1] sm:$0xff] %vm579, %v556
        %581 = vst.msk [vmem:[#allocation2 + $0x9] sm:$0xff] %vm579, %v558
        %582 = vst.msk [vmem:[#allocation2 + $0x19] sm:$0xff] %vm579, %v560
        %583 = vst.msk [vmem:[#allocation2 + $0x21] sm:$0xff] %vm579, %v562
        %584 = vst.msk [vmem:[#allocation2 + $0x31] sm:$0xff] %vm579, %v564
        %585 = vst.msk [vmem:[#allocation2 + $0x39] sm:$0xff] %vm579, %v566
        %586 = vst.msk [vmem:[#allocation2 + $0x49] sm:$0xff] %vm579, %v568
        %587 = vst.msk [vmem:[#allocation2 + $0x51] sm:$0xff] %vm579, %v570
        %v588 = vld [vmem:[#allocation2] sm:$0xff]
        %v589 = vld [vmem:[#allocation2 + $0x8] sm:$0xff]
        %v590 = vld [vmem:[#allocation2 + $0x10] sm:$0x3]
        %v591 = vld [vmem:[#allocation2 + $0x18] sm:$0xff]
        %v592 = vld [vmem:[#allocation2 + $0x20] sm:$0xff]
        %v593 = vld [vmem:[#allocation2 + $0x28] sm:$0x3]
        %v594 = vld [vmem:[#allocation2 + $0x30] sm:$0xff]
        %v595 = vld [vmem:[#allocation2 + $0x38] sm:$0xff]
        %v596 = vld [vmem:[#allocation2 + $0x40] sm:$0x3]
        %v597 = vld [vmem:[#allocation2 + $0x48] sm:$0xff]
        %v598 = vld [vmem:[#allocation2 + $0x50] sm:$0xff]
        %v599 = vld [vmem:[#allocation2 + $0x58] sm:$0x3]
        %v600 = vrot.slane %v594, 4
        %vm601 = vcmask 1047556
        %v602 = vsel %vm601, %v600, %v588
        %v603 = vrot.slane %v588, 4
        %v604 = vsel %vm601, %v594, %v603
        %v606 = vunpack.c.l.s4 1983009808
        %v607 = vunpack.c.0.s8 %v606
        %v608 = vperm.slane %v602, %v607
        %v610 = vunpack.c.l.s4 1983009808
        %v611 = vunpack.c.0.s8 %v610
        %v612 = vperm.slane %v604, %v611
        %v613 = vrot.slane %v597, 4
        %v614 = vsel %vm601, %v613, %v591
        %v615 = vrot.slane %v591, 4
        %v616 = vsel %vm601, %v597, %v615
        %v618 = vunpack.c.l.s4 1983009808
        %v619 = vunpack.c.0.s8 %v618
        %v620 = vperm.slane %v614, %v619
        %v622 = vunpack.c.l.s4 1983009808
        %v623 = vunpack.c.0.s8 %v622
        %v624 = vperm.slane %v616, %v623
        %v625 = vrot.slane %v620, 4
        %v626 = vsel %vm601, %v625, %v608
        %v627 = vrot.slane %v608, 4
        %v628 = vsel %vm601, %v620, %v627
        %v630 = vunpack.c.l.s4 1934713408
        %v631 = vunpack.c.0.s8 %v630
        %v632 = vperm.slane %v626, %v631
        %v634 = vunpack.c.l.s4 1934713408
        %v635 = vunpack.c.0.s8 %v634
        %v636 = vperm.slane %v628, %v635
        %v637 = vrot.slane %v624, 4
        %v638 = vsel %vm601, %v637, %v612
        %v639 = vrot.slane %v612, 4
        %v640 = vsel %vm601, %v624, %v639
        %v642 = vunpack.c.l.s4 1934713408
        %v643 = vunpack.c.0.s8 %v642
        %v644 = vperm.slane %v638, %v643
        %v646 = vunpack.c.l.s4 1934713408
        %v647 = vunpack.c.0.s8 %v646
        %v648 = vperm.slane %v640, %v647
        %v649 = vrot.slane %v632, 4
        %v650 = vsel %vm601, 0.0, %v649
        %v651 = vrot.slane %v636, 4
        %v652 = vsel %vm601, 0.0, %v651
        %v653 = vrot.slane %v644, 4
        %v654 = vsel %vm601, 0.0, %v653
        %v655 = vrot.slane %v648, 4
        %v656 = vsel %vm601, 0.0, %v655
        %v657 = vrot.slane %v595, 4
        %v658 = vsel %vm601, %v657, %v589
        %v659 = vrot.slane %v589, 4
        %v660 = vsel %vm601, %v595, %v659
        %v662 = vunpack.c.l.s4 1983009808
        %v663 = vunpack.c.0.s8 %v662
        %v664 = vperm.slane %v658, %v663
        %v666 = vunpack.c.l.s4 1983009808
        %v667 = vunpack.c.0.s8 %v666
        %v668 = vperm.slane %v660, %v667
        %v669 = vrot.slane %v598, 4
        %v670 = vsel %vm601, %v669, %v592
        %v671 = vrot.slane %v592, 4
        %v672 = vsel %vm601, %v598, %v671
        %v674 = vunpack.c.l.s4 1983009808
        %v675 = vunpack.c.0.s8 %v674
        %v676 = vperm.slane %v670, %v675
        %v678 = vunpack.c.l.s4 1983009808
        %v679 = vunpack.c.0.s8 %v678
        %v680 = vperm.slane %v672, %v679
        %v681 = vrot.slane %v676, 4
        %v682 = vsel %vm601, %v681, %v664
        %v683 = vrot.slane %v664, 4
        %v684 = vsel %vm601, %v676, %v683
        %v686 = vunpack.c.l.s4 1934713408
        %v687 = vunpack.c.0.s8 %v686
        %v688 = vperm.slane %v682, %v687
        %v690 = vunpack.c.l.s4 1934713408
        %v691 = vunpack.c.0.s8 %v690
        %v692 = vperm.slane %v684, %v691
        %v693 = vrot.slane %v680, 4
        %v694 = vsel %vm601, %v693, %v668
        %v695 = vrot.slane %v668, 4
        %v696 = vsel %vm601, %v680, %v695
        %v698 = vunpack.c.l.s4 1934713408
        %v699 = vunpack.c.0.s8 %v698
        %v700 = vperm.slane %v694, %v699
        %v702 = vunpack.c.l.s4 1934713408
        %v703 = vunpack.c.0.s8 %v702
        %v704 = vperm.slane %v696, %v703
        %v705 = vrot.slane %v688, 4
        %v706 = vsel %vm601, 0.0, %v705
        %v707 = vrot.slane %v692, 4
        %v708 = vsel %vm601, 0.0, %v707
        %v709 = vrot.slane %v700, 4
        %v710 = vsel %vm601, 0.0, %v709
        %v711 = vrot.slane %v704, 4
        %v712 = vsel %vm601, 0.0, %v711
        %714 = vrot.lane.b32.xlu0 %v650, 16
        %v715 = vpop.permute.xlu0 %714
        %718 = vrot.lane.b32.xlu0 %v636, 32
        %v719 = vpop.permute.xlu0 %718
        %722 = vrot.lane.b32.xlu0 %v652, 48
        %v723 = vpop.permute.xlu0 %722
        %726 = vrot.lane.b32.xlu0 %v644, 64
        %v727 = vpop.permute.xlu0 %726
        %730 = vrot.lane.b32.xlu0 %v654, 80
        %v731 = vpop.permute.xlu0 %730
        %734 = vrot.lane.b32.xlu0 %v648, 96
        %v735 = vpop.permute.xlu0 %734
        %738 = vrot.lane.b32.xlu0 %v656, 112
        %v739 = vpop.permute.xlu0 %738
        %742 = vrot.lane.b32.xlu0 %v706, 16
        %v743 = vpop.permute.xlu0 %742
        %746 = vrot.lane.b32.xlu0 %v692, 32
        %v747 = vpop.permute.xlu0 %746
        %750 = vrot.lane.b32.xlu0 %v708, 48
        %v751 = vpop.permute.xlu0 %750
        %754 = vrot.lane.b32.xlu0 %v700, 64
        %v755 = vpop.permute.xlu0 %754
        %758 = vrot.lane.b32.xlu0 %v710, 80
        %v759 = vpop.permute.xlu0 %758
        %762 = vrot.lane.b32.xlu0 %v704, 96
        %v763 = vpop.permute.xlu0 %762
        %766 = vrot.lane.b32.xlu0 %v712, 112
        %v767 = vpop.permute.xlu0 %766
        %vm769 = vcmask 130048
        %v770 = vsel %vm769, %v632, %v715
        %vm771 = vcmask 261120
        %v772 = vsel %vm771, %v770, %v719
        %vm773 = vcmask 392192
        %v774 = vsel %vm773, %v772, %v723
        %vm775 = vcmask 523264
        %v776 = vsel %vm775, %v774, %v727
        %vm777 = vcmask 654336
        %v778 = vsel %vm777, %v776, %v731
        %vm779 = vcmask 785408
        %v780 = vsel %vm779, %v778, %v735
        %vm781 = vcmask 916480
        %v782 = vsel %vm781, %v780, %v739
        %v783 = vsel %vm769, %v688, %v743
        %v784 = vsel %vm771, %v783, %v747
        %v785 = vsel %vm773, %v784, %v751
        %v786 = vsel %vm775, %v785, %v755
        %v787 = vsel %vm777, %v786, %v759
        %v788 = vsel %vm779, %v787, %v763
        %v789 = vsel %vm781, %v788, %v767
        %798 = vrot.lane.b32.xlu0 %v588, 127
        %v799 = vpop.permute.xlu0 %798
        %800 = vrot.lane.b32.xlu0 %v589, 127
        %v801 = vpop.permute.xlu0 %800
        %802 = vrot.lane.b32.xlu0 %v591, 127
        %v803 = vpop.permute.xlu0 %802
        %804 = vrot.lane.b32.xlu0 %v592, 127
        %v805 = vpop.permute.xlu0 %804
        %806 = vrot.lane.b32.xlu0 %v594, 127
        %v807 = vpop.permute.xlu0 %806
        %808 = vrot.lane.b32.xlu0 %v595, 127
        %v809 = vpop.permute.xlu0 %808
        %810 = vrot.lane.b32.xlu0 %v597, 127
        %v811 = vpop.permute.xlu0 %810
        %812 = vrot.lane.b32.xlu0 %v598, 127
        %v813 = vpop.permute.xlu0 %812
        %v822 = vrot.slane %v807, 4
        %v823 = vsel %vm601, %v822, %v799
        %v824 = vrot.slane %v799, 4
        %v825 = vsel %vm601, %v807, %v824
        %v827 = vunpack.c.l.s4 1983009808
        %v828 = vunpack.c.0.s8 %v827
        %v829 = vperm.slane %v823, %v828
        %v831 = vunpack.c.l.s4 1983009808
        %v832 = vunpack.c.0.s8 %v831
        %v833 = vperm.slane %v825, %v832
        %v834 = vrot.slane %v811, 4
        %v835 = vsel %vm601, %v834, %v803
        %v836 = vrot.slane %v803, 4
        %v837 = vsel %vm601, %v811, %v836
        %v839 = vunpack.c.l.s4 1983009808
        %v840 = vunpack.c.0.s8 %v839
        %v841 = vperm.slane %v835, %v840
        %v843 = vunpack.c.l.s4 1983009808
        %v844 = vunpack.c.0.s8 %v843
        %v845 = vperm.slane %v837, %v844
        %v846 = vrot.slane %v841, 4
        %v847 = vsel %vm601, %v846, %v829
        %v848 = vrot.slane %v829, 4
        %v849 = vsel %vm601, %v841, %v848
        %v851 = vunpack.c.l.s4 1934713408
        %v852 = vunpack.c.0.s8 %v851
        %v853 = vperm.slane %v847, %v852
        %v855 = vunpack.c.l.s4 1934713408
        %v856 = vunpack.c.0.s8 %v855
        %v857 = vperm.slane %v849, %v856
        %v858 = vrot.slane %v845, 4
        %v859 = vsel %vm601, %v858, %v833
        %v860 = vrot.slane %v833, 4
        %v861 = vsel %vm601, %v845, %v860
        %v863 = vunpack.c.l.s4 1934713408
        %v864 = vunpack.c.0.s8 %v863
        %v865 = vperm.slane %v859, %v864
        %v867 = vunpack.c.l.s4 1934713408
        %v868 = vunpack.c.0.s8 %v867
        %v869 = vperm.slane %v861, %v868
        %v870 = vrot.slane %v853, 4
        %v871 = vsel %vm601, 0.0, %v870
        %v872 = vrot.slane %v857, 4
        %v873 = vsel %vm601, 0.0, %v872
        %v874 = vrot.slane %v865, 4
        %v875 = vsel %vm601, 0.0, %v874
        %v876 = vrot.slane %v869, 4
        %v877 = vsel %vm601, 0.0, %v876
        %v878 = vrot.slane %v809, 4
        %v879 = vsel %vm601, %v878, %v801
        %v880 = vrot.slane %v801, 4
        %v881 = vsel %vm601, %v809, %v880
        %v883 = vunpack.c.l.s4 1983009808
        %v884 = vunpack.c.0.s8 %v883
        %v885 = vperm.slane %v879, %v884
        %v887 = vunpack.c.l.s4 1983009808
        %v888 = vunpack.c.0.s8 %v887
        %v889 = vperm.slane %v881, %v888
        %v890 = vrot.slane %v813, 4
        %v891 = vsel %vm601, %v890, %v805
        %v892 = vrot.slane %v805, 4
        %v893 = vsel %vm601, %v813, %v892
        %v895 = vunpack.c.l.s4 1983009808
        %v896 = vunpack.c.0.s8 %v895
        %v897 = vperm.slane %v891, %v896
        %v899 = vunpack.c.l.s4 1983009808
        %v900 = vunpack.c.0.s8 %v899
        %v901 = vperm.slane %v893, %v900
        %v902 = vrot.slane %v897, 4
        %v903 = vsel %vm601, %v902, %v885
        %v904 = vrot.slane %v885, 4
        %v905 = vsel %vm601, %v897, %v904
        %v907 = vunpack.c.l.s4 1934713408
        %v908 = vunpack.c.0.s8 %v907
        %v909 = vperm.slane %v903, %v908
        %v911 = vunpack.c.l.s4 1934713408
        %v912 = vunpack.c.0.s8 %v911
        %v913 = vperm.slane %v905, %v912
        %v914 = vrot.slane %v901, 4
        %v915 = vsel %vm601, %v914, %v889
        %v916 = vrot.slane %v889, 4
        %v917 = vsel %vm601, %v901, %v916
        %v919 = vunpack.c.l.s4 1934713408
        %v920 = vunpack.c.0.s8 %v919
        %v921 = vperm.slane %v915, %v920
        %v923 = vunpack.c.l.s4 1934713408
        %v924 = vunpack.c.0.s8 %v923
        %v925 = vperm.slane %v917, %v924
        %v926 = vrot.slane %v909, 4
        %v927 = vsel %vm601, 0.0, %v926
        %v928 = vrot.slane %v913, 4
        %v929 = vsel %vm601, 0.0, %v928
        %v930 = vrot.slane %v921, 4
        %v931 = vsel %vm601, 0.0, %v930
        %v932 = vrot.slane %v925, 4
        %v933 = vsel %vm601, 0.0, %v932
        %935 = vrot.lane.b32.xlu0 %v871, 16
        %v936 = vpop.permute.xlu0 %935
        %939 = vrot.lane.b32.xlu0 %v857, 32
        %v940 = vpop.permute.xlu0 %939
        %943 = vrot.lane.b32.xlu0 %v873, 48
        %v944 = vpop.permute.xlu0 %943
        %947 = vrot.lane.b32.xlu0 %v865, 64
        %v948 = vpop.permute.xlu0 %947
        %951 = vrot.lane.b32.xlu0 %v875, 80
        %v952 = vpop.permute.xlu0 %951
        %955 = vrot.lane.b32.xlu0 %v869, 96
        %v956 = vpop.permute.xlu0 %955
        %959 = vrot.lane.b32.xlu0 %v877, 112
        %v960 = vpop.permute.xlu0 %959
        %963 = vrot.lane.b32.xlu0 %v927, 16
        %v964 = vpop.permute.xlu0 %963
        %967 = vrot.lane.b32.xlu0 %v913, 32
        %v968 = vpop.permute.xlu0 %967
        %971 = vrot.lane.b32.xlu0 %v929, 48
        %v972 = vpop.permute.xlu0 %971
        %975 = vrot.lane.b32.xlu0 %v921, 64
        %v976 = vpop.permute.xlu0 %975
        %979 = vrot.lane.b32.xlu0 %v931, 80
        %v980 = vpop.permute.xlu0 %979
        %983 = vrot.lane.b32.xlu0 %v925, 96
        %v984 = vpop.permute.xlu0 %983
        %987 = vrot.lane.b32.xlu0 %v933, 112
        %v988 = vpop.permute.xlu0 %987
        %v990 = vsel %vm769, %v853, %v936
        %v991 = vsel %vm771, %v990, %v940
        %v992 = vsel %vm773, %v991, %v944
        %v993 = vsel %vm775, %v992, %v948
        %v994 = vsel %vm777, %v993, %v952
        %v995 = vsel %vm779, %v994, %v956
        %v996 = vsel %vm781, %v995, %v960
        %v997 = vsel %vm769, %v909, %v964
        %v998 = vsel %vm771, %v997, %v968
        %v999 = vsel %vm773, %v998, %v972
        %v1000 = vsel %vm775, %v999, %v976
        %v1001 = vsel %vm777, %v1000, %v980
        %v1002 = vsel %vm779, %v1001, %v984
        %v1003 = vsel %vm781, %v1002, %v988
        %1004 = vrot.lane.b32.xlu0 %v588, 126
        %v1005 = vpop.permute.xlu0 %1004
        %1006 = vrot.lane.b32.xlu0 %v589, 126
        %v1007 = vpop.permute.xlu0 %1006
        %1008 = vrot.lane.b32.xlu0 %v591, 126
        %v1009 = vpop.permute.xlu0 %1008
        %1010 = vrot.lane.b32.xlu0 %v592, 126
        %v1011 = vpop.permute.xlu0 %1010
        %1012 = vrot.lane.b32.xlu0 %v594, 126
        %v1013 = vpop.permute.xlu0 %1012
        %1014 = vrot.lane.b32.xlu0 %v595, 126
        %v1015 = vpop.permute.xlu0 %1014
        %1016 = vrot.lane.b32.xlu0 %v597, 126
        %v1017 = vpop.permute.xlu0 %1016
        %1018 = vrot.lane.b32.xlu0 %v598, 126
        %v1019 = vpop.permute.xlu0 %1018
        %v1028 = vrot.slane %v1013, 4
        %v1029 = vsel %vm601, %v1028, %v1005
        %v1030 = vrot.slane %v1005, 4
        %v1031 = vsel %vm601, %v1013, %v1030
        %v1033 = vunpack.c.l.s4 1983009808
        %v1034 = vunpack.c.0.s8 %v1033
        %v1035 = vperm.slane %v1029, %v1034
        %v1037 = vunpack.c.l.s4 1983009808
        %v1038 = vunpack.c.0.s8 %v1037
        %v1039 = vperm.slane %v1031, %v1038
        %v1040 = vrot.slane %v1017, 4
        %v1041 = vsel %vm601, %v1040, %v1009
        %v1042 = vrot.slane %v1009, 4
        %v1043 = vsel %vm601, %v1017, %v1042
        %v1045 = vunpack.c.l.s4 1983009808
        %v1046 = vunpack.c.0.s8 %v1045
        %v1047 = vperm.slane %v1041, %v1046
        %v1049 = vunpack.c.l.s4 1983009808
        %v1050 = vunpack.c.0.s8 %v1049
        %v1051 = vperm.slane %v1043, %v1050
        %v1052 = vrot.slane %v1047, 4
        %v1053 = vsel %vm601, %v1052, %v1035
        %v1054 = vrot.slane %v1035, 4
        %v1055 = vsel %vm601, %v1047, %v1054
        %v1057 = vunpack.c.l.s4 1934713408
        %v1058 = vunpack.c.0.s8 %v1057
        %v1059 = vperm.slane %v1053, %v1058
        %v1061 = vunpack.c.l.s4 1934713408
        %v1062 = vunpack.c.0.s8 %v1061
        %v1063 = vperm.slane %v1055, %v1062
        %v1064 = vrot.slane %v1051, 4
        %v1065 = vsel %vm601, %v1064, %v1039
        %v1066 = vrot.slane %v1039, 4
        %v1067 = vsel %vm601, %v1051, %v1066
        %v1069 = vunpack.c.l.s4 1934713408
        %v1070 = vunpack.c.0.s8 %v1069
        %v1071 = vperm.slane %v1065, %v1070
        %v1073 = vunpack.c.l.s4 1934713408
        %v1074 = vunpack.c.0.s8 %v1073
        %v1075 = vperm.slane %v1067, %v1074
        %v1076 = vrot.slane %v1059, 4
        %v1077 = vsel %vm601, 0.0, %v1076
        %v1078 = vrot.slane %v1063, 4
        %v1079 = vsel %vm601, 0.0, %v1078
        %v1080 = vrot.slane %v1071, 4
        %v1081 = vsel %vm601, 0.0, %v1080
        %v1082 = vrot.slane %v1075, 4
        %v1083 = vsel %vm601, 0.0, %v1082
        %v1084 = vrot.slane %v1015, 4
        %v1085 = vsel %vm601, %v1084, %v1007
        %v1086 = vrot.slane %v1007, 4
        %v1087 = vsel %vm601, %v1015, %v1086
        %v1089 = vunpack.c.l.s4 1983009808
        %v1090 = vunpack.c.0.s8 %v1089
        %v1091 = vperm.slane %v1085, %v1090
        %v1093 = vunpack.c.l.s4 1983009808
        %v1094 = vunpack.c.0.s8 %v1093
        %v1095 = vperm.slane %v1087, %v1094
        %v1096 = vrot.slane %v1019, 4
        %v1097 = vsel %vm601, %v1096, %v1011
        %v1098 = vrot.slane %v1011, 4
        %v1099 = vsel %vm601, %v1019, %v1098
        %v1101 = vunpack.c.l.s4 1983009808
        %v1102 = vunpack.c.0.s8 %v1101
        %v1103 = vperm.slane %v1097, %v1102
        %v1105 = vunpack.c.l.s4 1983009808
        %v1106 = vunpack.c.0.s8 %v1105
        %v1107 = vperm.slane %v1099, %v1106
        %v1108 = vrot.slane %v1103, 4
        %v1109 = vsel %vm601, %v1108, %v1091
        %v1110 = vrot.slane %v1091, 4
        %v1111 = vsel %vm601, %v1103, %v1110
        %v1113 = vunpack.c.l.s4 1934713408
        %v1114 = vunpack.c.0.s8 %v1113
        %v1115 = vperm.slane %v1109, %v1114
        %v1117 = vunpack.c.l.s4 1934713408
        %v1118 = vunpack.c.0.s8 %v1117
        %v1119 = vperm.slane %v1111, %v1118
        %v1120 = vrot.slane %v1107, 4
        %v1121 = vsel %vm601, %v1120, %v1095
        %v1122 = vrot.slane %v1095, 4
        %v1123 = vsel %vm601, %v1107, %v1122
        %v1125 = vunpack.c.l.s4 1934713408
        %v1126 = vunpack.c.0.s8 %v1125
        %v1127 = vperm.slane %v1121, %v1126
        %v1129 = vunpack.c.l.s4 1934713408
        %v1130 = vunpack.c.0.s8 %v1129
        %v1131 = vperm.slane %v1123, %v1130
        %v1132 = vrot.slane %v1115, 4
        %v1133 = vsel %vm601, 0.0, %v1132
        %v1134 = vrot.slane %v1119, 4
        %v1135 = vsel %vm601, 0.0, %v1134
        %v1136 = vrot.slane %v1127, 4
        %v1137 = vsel %vm601, 0.0, %v1136
        %v1138 = vrot.slane %v1131, 4
        %v1139 = vsel %vm601, 0.0, %v1138
        %1141 = vrot.lane.b32.xlu0 %v1077, 16
        %v1142 = vpop.permute.xlu0 %1141
        %1145 = vrot.lane.b32.xlu0 %v1063, 32
        %v1146 = vpop.permute.xlu0 %1145
        %1149 = vrot.lane.b32.xlu0 %v1079, 48
        %v1150 = vpop.permute.xlu0 %1149
        %1153 = vrot.lane.b32.xlu0 %v1071, 64
        %v1154 = vpop.permute.xlu0 %1153
        %1157 = vrot.lane.b32.xlu0 %v1081, 80
        %v1158 = vpop.permute.xlu0 %1157
        %1161 = vrot.lane.b32.xlu0 %v1075, 96
        %v1162 = vpop.permute.xlu0 %1161
        %1165 = vrot.lane.b32.xlu0 %v1083, 112
        %v1166 = vpop.permute.xlu0 %1165
        %1169 = vrot.lane.b32.xlu0 %v1133, 16
        %v1170 = vpop.permute.xlu0 %1169
        %1173 = vrot.lane.b32.xlu0 %v1119, 32
        %v1174 = vpop.permute.xlu0 %1173
        %1177 = vrot.lane.b32.xlu0 %v1135, 48
        %v1178 = vpop.permute.xlu0 %1177
        %1181 = vrot.lane.b32.xlu0 %v1127, 64
        %v1182 = vpop.permute.xlu0 %1181
        %1185 = vrot.lane.b32.xlu0 %v1137, 80
        %v1186 = vpop.permute.xlu0 %1185
        %1189 = vrot.lane.b32.xlu0 %v1131, 96
        %v1190 = vpop.permute.xlu0 %1189
        %1193 = vrot.lane.b32.xlu0 %v1139, 112
        %v1194 = vpop.permute.xlu0 %1193
        %v1196 = vsel %vm769, %v1059, %v1142
        %v1197 = vsel %vm771, %v1196, %v1146
        %v1198 = vsel %vm773, %v1197, %v1150
        %v1199 = vsel %vm775, %v1198, %v1154
        %v1200 = vsel %vm777, %v1199, %v1158
        %v1201 = vsel %vm779, %v1200, %v1162
        %v1202 = vsel %vm781, %v1201, %v1166
        %v1203 = vsel %vm769, %v1115, %v1170
        %v1204 = vsel %vm771, %v1203, %v1174
        %v1205 = vsel %vm773, %v1204, %v1178
        %v1206 = vsel %vm775, %v1205, %v1182
        %v1207 = vsel %vm777, %v1206, %v1186
        %v1208 = vsel %vm779, %v1207, %v1190
        %v1209 = vsel %vm781, %v1208, %v1194
        %vm1214 = vcmask 1046528
        %v1215 = vrot.slane %v588, 1
        %v1216 = vrot.slane %v589, 1
        %v1217 = vsel %vm1214, %v1215, %v1216
        %v1218 = vrot.slane %v590, 1
        %v1219 = vsel %vm1214, %v1216, %v1218
        %v1220 = vrot.slane %v591, 1
        %v1221 = vrot.slane %v592, 1
        %v1222 = vsel %vm1214, %v1220, %v1221
        %v1223 = vrot.slane %v593, 1
        %v1224 = vsel %vm1214, %v1221, %v1223
        %v1225 = vrot.slane %v594, 1
        %v1226 = vrot.slane %v595, 1
        %v1227 = vsel %vm1214, %v1225, %v1226
        %v1228 = vrot.slane %v596, 1
        %v1229 = vsel %vm1214, %v1226, %v1228
        %v1230 = vrot.slane %v597, 1
        %v1231 = vrot.slane %v598, 1
        %v1232 = vsel %vm1214, %v1230, %v1231
        %v1233 = vrot.slane %v599, 1
        %v1234 = vsel %vm1214, %v1231, %v1233
        %v1243 = vrot.slane %v1227, 4
        %v1244 = vsel %vm601, %v1243, %v1217
        %v1245 = vrot.slane %v1217, 4
        %v1246 = vsel %vm601, %v1227, %v1245
        %v1248 = vunpack.c.l.s4 1983009808
        %v1249 = vunpack.c.0.s8 %v1248
        %v1250 = vperm.slane %v1244, %v1249
        %v1252 = vunpack.c.l.s4 1983009808
        %v1253 = vunpack.c.0.s8 %v1252
        %v1254 = vperm.slane %v1246, %v1253
        %v1255 = vrot.slane %v1232, 4
        %v1256 = vsel %vm601, %v1255, %v1222
        %v1257 = vrot.slane %v1222, 4
        %v1258 = vsel %vm601, %v1232, %v1257
        %v1260 = vunpack.c.l.s4 1983009808
        %v1261 = vunpack.c.0.s8 %v1260
        %v1262 = vperm.slane %v1256, %v1261
        %v1264 = vunpack.c.l.s4 1983009808
        %v1265 = vunpack.c.0.s8 %v1264
        %v1266 = vperm.slane %v1258, %v1265
        %v1267 = vrot.slane %v1262, 4
        %v1268 = vsel %vm601, %v1267, %v1250
        %v1269 = vrot.slane %v1250, 4
        %v1270 = vsel %vm601, %v1262, %v1269
        %v1272 = vunpack.c.l.s4 1934713408
        %v1273 = vunpack.c.0.s8 %v1272
        %v1274 = vperm.slane %v1268, %v1273
        %v1276 = vunpack.c.l.s4 1934713408
        %v1277 = vunpack.c.0.s8 %v1276
        %v1278 = vperm.slane %v1270, %v1277
        %v1279 = vrot.slane %v1266, 4
        %v1280 = vsel %vm601, %v1279, %v1254
        %v1281 = vrot.slane %v1254, 4
        %v1282 = vsel %vm601, %v1266, %v1281
        %v1284 = vunpack.c.l.s4 1934713408
        %v1285 = vunpack.c.0.s8 %v1284
        %v1286 = vperm.slane %v1280, %v1285
        %v1288 = vunpack.c.l.s4 1934713408
        %v1289 = vunpack.c.0.s8 %v1288
        %v1290 = vperm.slane %v1282, %v1289
        %v1291 = vrot.slane %v1274, 4
        %v1292 = vsel %vm601, 0.0, %v1291
        %v1293 = vrot.slane %v1278, 4
        %v1294 = vsel %vm601, 0.0, %v1293
        %v1295 = vrot.slane %v1286, 4
        %v1296 = vsel %vm601, 0.0, %v1295
        %v1297 = vrot.slane %v1290, 4
        %v1298 = vsel %vm601, 0.0, %v1297
        %v1299 = vrot.slane %v1229, 4
        %v1300 = vsel %vm601, %v1299, %v1219
        %v1301 = vrot.slane %v1219, 4
        %v1302 = vsel %vm601, %v1229, %v1301
        %v1304 = vunpack.c.l.s4 1983009808
        %v1305 = vunpack.c.0.s8 %v1304
        %v1306 = vperm.slane %v1300, %v1305
        %v1308 = vunpack.c.l.s4 1983009808
        %v1309 = vunpack.c.0.s8 %v1308
        %v1310 = vperm.slane %v1302, %v1309
        %v1311 = vrot.slane %v1234, 4
        %v1312 = vsel %vm601, %v1311, %v1224
        %v1313 = vrot.slane %v1224, 4
        %v1314 = vsel %vm601, %v1234, %v1313
        %v1316 = vunpack.c.l.s4 1983009808
        %v1317 = vunpack.c.0.s8 %v1316
        %v1318 = vperm.slane %v1312, %v1317
        %v1320 = vunpack.c.l.s4 1983009808
        %v1321 = vunpack.c.0.s8 %v1320
        %v1322 = vperm.slane %v1314, %v1321
        %v1323 = vrot.slane %v1318, 4
        %v1324 = vsel %vm601, %v1323, %v1306
        %v1325 = vrot.slane %v1306, 4
        %v1326 = vsel %vm601, %v1318, %v1325
        %v1328 = vunpack.c.l.s4 1934713408
        %v1329 = vunpack.c.0.s8 %v1328
        %v1330 = vperm.slane %v1324, %v1329
        %v1332 = vunpack.c.l.s4 1934713408
        %v1333 = vunpack.c.0.s8 %v1332
        %v1334 = vperm.slane %v1326, %v1333
        %v1335 = vrot.slane %v1322, 4
        %v1336 = vsel %vm601, %v1335, %v1310
        %v1337 = vrot.slane %v1310, 4
        %v1338 = vsel %vm601, %v1322, %v1337
        %v1340 = vunpack.c.l.s4 1934713408
        %v1341 = vunpack.c.0.s8 %v1340
        %v1342 = vperm.slane %v1336, %v1341
        %v1344 = vunpack.c.l.s4 1934713408
        %v1345 = vunpack.c.0.s8 %v1344
        %v1346 = vperm.slane %v1338, %v1345
        %v1347 = vrot.slane %v1330, 4
        %v1348 = vsel %vm601, 0.0, %v1347
        %v1349 = vrot.slane %v1334, 4
        %v1350 = vsel %vm601, 0.0, %v1349
        %v1351 = vrot.slane %v1342, 4
        %v1352 = vsel %vm601, 0.0, %v1351
        %v1353 = vrot.slane %v1346, 4
        %v1354 = vsel %vm601, 0.0, %v1353
        %1356 = vrot.lane.b32.xlu0 %v1292, 16
        %v1357 = vpop.permute.xlu0 %1356
        %1360 = vrot.lane.b32.xlu0 %v1278, 32
        %v1361 = vpop.permute.xlu0 %1360
        %1364 = vrot.lane.b32.xlu0 %v1294, 48
        %v1365 = vpop.permute.xlu0 %1364
        %1368 = vrot.lane.b32.xlu0 %v1286, 64
        %v1369 = vpop.permute.xlu0 %1368
        %1372 = vrot.lane.b32.xlu0 %v1296, 80
        %v1373 = vpop.permute.xlu0 %1372
        %1376 = vrot.lane.b32.xlu0 %v1290, 96
        %v1377 = vpop.permute.xlu0 %1376
        %1380 = vrot.lane.b32.xlu0 %v1298, 112
        %v1381 = vpop.permute.xlu0 %1380
        %1384 = vrot.lane.b32.xlu0 %v1348, 16
        %v1385 = vpop.permute.xlu0 %1384
        %1388 = vrot.lane.b32.xlu0 %v1334, 32
        %v1389 = vpop.permute.xlu0 %1388
        %1392 = vrot.lane.b32.xlu0 %v1350, 48
        %v1393 = vpop.permute.xlu0 %1392
        %1396 = vrot.lane.b32.xlu0 %v1342, 64
        %v1397 = vpop.permute.xlu0 %1396
        %1400 = vrot.lane.b32.xlu0 %v1352, 80
        %v1401 = vpop.permute.xlu0 %1400
        %1404 = vrot.lane.b32.xlu0 %v1346, 96
        %v1405 = vpop.permute.xlu0 %1404
        %1408 = vrot.lane.b32.xlu0 %v1354, 112
        %v1409 = vpop.permute.xlu0 %1408
        %v1411 = vsel %vm769, %v1274, %v1357
        %v1412 = vsel %vm771, %v1411, %v1361
        %v1413 = vsel %vm773, %v1412, %v1365
        %v1414 = vsel %vm775, %v1413, %v1369
        %v1415 = vsel %vm777, %v1414, %v1373
        %v1416 = vsel %vm779, %v1415, %v1377
        %v1417 = vsel %vm781, %v1416, %v1381
        %v1418 = vsel %vm769, %v1330, %v1385
        %v1419 = vsel %vm771, %v1418, %v1389
        %v1420 = vsel %vm773, %v1419, %v1393
        %v1421 = vsel %vm775, %v1420, %v1397
        %v1422 = vsel %vm777, %v1421, %v1401
        %v1423 = vsel %vm779, %v1422, %v1405
        %v1424 = vsel %vm781, %v1423, %v1409
        %1425 = vrot.lane.b32.xlu0 %v1217, 127
        %v1426 = vpop.permute.xlu0 %1425
        %1427 = vrot.lane.b32.xlu0 %v1219, 127
        %v1428 = vpop.permute.xlu0 %1427
        %1429 = vrot.lane.b32.xlu0 %v1222, 127
        %v1430 = vpop.permute.xlu0 %1429
        %1431 = vrot.lane.b32.xlu0 %v1224, 127
        %v1432 = vpop.permute.xlu0 %1431
        %1433 = vrot.lane.b32.xlu0 %v1227, 127
        %v1434 = vpop.permute.xlu0 %1433
        %1435 = vrot.lane.b32.xlu0 %v1229, 127
        %v1436 = vpop.permute.xlu0 %1435
        %1437 = vrot.lane.b32.xlu0 %v1232, 127
        %v1438 = vpop.permute.xlu0 %1437
        %1439 = vrot.lane.b32.xlu0 %v1234, 127
        %v1440 = vpop.permute.xlu0 %1439
        %v1449 = vrot.slane %v1434, 4
        %v1450 = vsel %vm601, %v1449, %v1426
        %v1451 = vrot.slane %v1426, 4
        %v1452 = vsel %vm601, %v1434, %v1451
        %v1454 = vunpack.c.l.s4 1983009808
        %v1455 = vunpack.c.0.s8 %v1454
        %v1456 = vperm.slane %v1450, %v1455
        %v1458 = vunpack.c.l.s4 1983009808
        %v1459 = vunpack.c.0.s8 %v1458
        %v1460 = vperm.slane %v1452, %v1459
        %v1461 = vrot.slane %v1438, 4
        %v1462 = vsel %vm601, %v1461, %v1430
        %v1463 = vrot.slane %v1430, 4
        %v1464 = vsel %vm601, %v1438, %v1463
        %v1466 = vunpack.c.l.s4 1983009808
        %v1467 = vunpack.c.0.s8 %v1466
        %v1468 = vperm.slane %v1462, %v1467
        %v1470 = vunpack.c.l.s4 1983009808
        %v1471 = vunpack.c.0.s8 %v1470
        %v1472 = vperm.slane %v1464, %v1471
        %v1473 = vrot.slane %v1468, 4
        %v1474 = vsel %vm601, %v1473, %v1456
        %v1475 = vrot.slane %v1456, 4
        %v1476 = vsel %vm601, %v1468, %v1475
        %v1478 = vunpack.c.l.s4 1934713408
        %v1479 = vunpack.c.0.s8 %v1478
        %v1480 = vperm.slane %v1474, %v1479
        %v1482 = vunpack.c.l.s4 1934713408
        %v1483 = vunpack.c.0.s8 %v1482
        %v1484 = vperm.slane %v1476, %v1483
        %v1485 = vrot.slane %v1472, 4
        %v1486 = vsel %vm601, %v1485, %v1460
        %v1487 = vrot.slane %v1460, 4
        %v1488 = vsel %vm601, %v1472, %v1487
        %v1490 = vunpack.c.l.s4 1934713408
        %v1491 = vunpack.c.0.s8 %v1490
        %v1492 = vperm.slane %v1486, %v1491
        %v1494 = vunpack.c.l.s4 1934713408
        %v1495 = vunpack.c.0.s8 %v1494
        %v1496 = vperm.slane %v1488, %v1495
        %v1497 = vrot.slane %v1480, 4
        %v1498 = vsel %vm601, 0.0, %v1497
        %v1499 = vrot.slane %v1484, 4
        %v1500 = vsel %vm601, 0.0, %v1499
        %v1501 = vrot.slane %v1492, 4
        %v1502 = vsel %vm601, 0.0, %v1501
        %v1503 = vrot.slane %v1496, 4
        %v1504 = vsel %vm601, 0.0, %v1503
        %v1505 = vrot.slane %v1436, 4
        %v1506 = vsel %vm601, %v1505, %v1428
        %v1507 = vrot.slane %v1428, 4
        %v1508 = vsel %vm601, %v1436, %v1507
        %v1510 = vunpack.c.l.s4 1983009808
        %v1511 = vunpack.c.0.s8 %v1510
        %v1512 = vperm.slane %v1506, %v1511
        %v1514 = vunpack.c.l.s4 1983009808
        %v1515 = vunpack.c.0.s8 %v1514
        %v1516 = vperm.slane %v1508, %v1515
        %v1517 = vrot.slane %v1440, 4
        %v1518 = vsel %vm601, %v1517, %v1432
        %v1519 = vrot.slane %v1432, 4
        %v1520 = vsel %vm601, %v1440, %v1519
        %v1522 = vunpack.c.l.s4 1983009808
        %v1523 = vunpack.c.0.s8 %v1522
        %v1524 = vperm.slane %v1518, %v1523
        %v1526 = vunpack.c.l.s4 1983009808
        %v1527 = vunpack.c.0.s8 %v1526
        %v1528 = vperm.slane %v1520, %v1527
        %v1529 = vrot.slane %v1524, 4
        %v1530 = vsel %vm601, %v1529, %v1512
        %v1531 = vrot.slane %v1512, 4
        %v1532 = vsel %vm601, %v1524, %v1531
        %v1534 = vunpack.c.l.s4 1934713408
        %v1535 = vunpack.c.0.s8 %v1534
        %v1536 = vperm.slane %v1530, %v1535
        %v1538 = vunpack.c.l.s4 1934713408
        %v1539 = vunpack.c.0.s8 %v1538
        %v1540 = vperm.slane %v1532, %v1539
        %v1541 = vrot.slane %v1528, 4
        %v1542 = vsel %vm601, %v1541, %v1516
        %v1543 = vrot.slane %v1516, 4
        %v1544 = vsel %vm601, %v1528, %v1543
        %v1546 = vunpack.c.l.s4 1934713408
        %v1547 = vunpack.c.0.s8 %v1546
        %v1548 = vperm.slane %v1542, %v1547
        %v1550 = vunpack.c.l.s4 1934713408
        %v1551 = vunpack.c.0.s8 %v1550
        %v1552 = vperm.slane %v1544, %v1551
        %v1553 = vrot.slane %v1536, 4
        %v1554 = vsel %vm601, 0.0, %v1553
        %v1555 = vrot.slane %v1540, 4
        %v1556 = vsel %vm601, 0.0, %v1555
        %v1557 = vrot.slane %v1548, 4
        %v1558 = vsel %vm601, 0.0, %v1557
        %v1559 = vrot.slane %v1552, 4
        %v1560 = vsel %vm601, 0.0, %v1559
        %1562 = vrot.lane.b32.xlu0 %v1498, 16
        %v1563 = vpop.permute.xlu0 %1562
        %1566 = vrot.lane.b32.xlu0 %v1484, 32
        %v1567 = vpop.permute.xlu0 %1566
        %1570 = vrot.lane.b32.xlu0 %v1500, 48
        %v1571 = vpop.permute.xlu0 %1570
        %1574 = vrot.lane.b32.xlu0 %v1492, 64
        %v1575 = vpop.permute.xlu0 %1574
        %1578 = vrot.lane.b32.xlu0 %v1502, 80
        %v1579 = vpop.permute.xlu0 %1578
        %1582 = vrot.lane.b32.xlu0 %v1496, 96
        %v1583 = vpop.permute.xlu0 %1582
        %1586 = vrot.lane.b32.xlu0 %v1504, 112
        %v1587 = vpop.permute.xlu0 %1586
        %1590 = vrot.lane.b32.xlu0 %v1554, 16
        %v1591 = vpop.permute.xlu0 %1590
        %1594 = vrot.lane.b32.xlu0 %v1540, 32
        %v1595 = vpop.permute.xlu0 %1594
        %1598 = vrot.lane.b32.xlu0 %v1556, 48
        %v1599 = vpop.permute.xlu0 %1598
        %1602 = vrot.lane.b32.xlu0 %v1548, 64
        %v1603 = vpop.permute.xlu0 %1602
        %1606 = vrot.lane.b32.xlu0 %v1558, 80
        %v1607 = vpop.permute.xlu0 %1606
        %1610 = vrot.lane.b32.xlu0 %v1552, 96
        %v1611 = vpop.permute.xlu0 %1610
        %1614 = vrot.lane.b32.xlu0 %v1560, 112
        %v1615 = vpop.permute.xlu0 %1614
        %v1617 = vsel %vm769, %v1480, %v1563
        %v1618 = vsel %vm771, %v1617, %v1567
        %v1619 = vsel %vm773, %v1618, %v1571
        %v1620 = vsel %vm775, %v1619, %v1575
        %v1621 = vsel %vm777, %v1620, %v1579
        %v1622 = vsel %vm779, %v1621, %v1583
        %v1623 = vsel %vm781, %v1622, %v1587
        %v1624 = vsel %vm769, %v1536, %v1591
        %v1625 = vsel %vm771, %v1624, %v1595
        %v1626 = vsel %vm773, %v1625, %v1599
        %v1627 = vsel %vm775, %v1626, %v1603
        %v1628 = vsel %vm777, %v1627, %v1607
        %v1629 = vsel %vm779, %v1628, %v1611
        %v1630 = vsel %vm781, %v1629, %v1615
        %1631 = vrot.lane.b32.xlu0 %v1217, 126
        %v1632 = vpop.permute.xlu0 %1631
        %1633 = vrot.lane.b32.xlu0 %v1219, 126
        %v1634 = vpop.permute.xlu0 %1633
        %1635 = vrot.lane.b32.xlu0 %v1222, 126
        %v1636 = vpop.permute.xlu0 %1635
        %1637 = vrot.lane.b32.xlu0 %v1224, 126
        %v1638 = vpop.permute.xlu0 %1637
        %1639 = vrot.lane.b32.xlu0 %v1227, 126
        %v1640 = vpop.permute.xlu0 %1639
        %1641 = vrot.lane.b32.xlu0 %v1229, 126
        %v1642 = vpop.permute.xlu0 %1641
        %1643 = vrot.lane.b32.xlu0 %v1232, 126
        %v1644 = vpop.permute.xlu0 %1643
        %1645 = vrot.lane.b32.xlu0 %v1234, 126
        %v1646 = vpop.permute.xlu0 %1645
        %v1655 = vrot.slane %v1640, 4
        %v1656 = vsel %vm601, %v1655, %v1632
        %v1657 = vrot.slane %v1632, 4
        %v1658 = vsel %vm601, %v1640, %v1657
        %v1660 = vunpack.c.l.s4 1983009808
        %v1661 = vunpack.c.0.s8 %v1660
        %v1662 = vperm.slane %v1656, %v1661
        %v1664 = vunpack.c.l.s4 1983009808
        %v1665 = vunpack.c.0.s8 %v1664
        %v1666 = vperm.slane %v1658, %v1665
        %v1667 = vrot.slane %v1644, 4
        %v1668 = vsel %vm601, %v1667, %v1636
        %v1669 = vrot.slane %v1636, 4
        %v1670 = vsel %vm601, %v1644, %v1669
        %v1672 = vunpack.c.l.s4 1983009808
        %v1673 = vunpack.c.0.s8 %v1672
        %v1674 = vperm.slane %v1668, %v1673
        %v1676 = vunpack.c.l.s4 1983009808
        %v1677 = vunpack.c.0.s8 %v1676
        %v1678 = vperm.slane %v1670, %v1677
        %v1679 = vrot.slane %v1674, 4
        %v1680 = vsel %vm601, %v1679, %v1662
        %v1681 = vrot.slane %v1662, 4
        %v1682 = vsel %vm601, %v1674, %v1681
        %v1684 = vunpack.c.l.s4 1934713408
        %v1685 = vunpack.c.0.s8 %v1684
        %v1686 = vperm.slane %v1680, %v1685
        %v1688 = vunpack.c.l.s4 1934713408
        %v1689 = vunpack.c.0.s8 %v1688
        %v1690 = vperm.slane %v1682, %v1689
        %v1691 = vrot.slane %v1678, 4
        %v1692 = vsel %vm601, %v1691, %v1666
        %v1693 = vrot.slane %v1666, 4
        %v1694 = vsel %vm601, %v1678, %v1693
        %v1696 = vunpack.c.l.s4 1934713408
        %v1697 = vunpack.c.0.s8 %v1696
        %v1698 = vperm.slane %v1692, %v1697
        %v1700 = vunpack.c.l.s4 1934713408
        %v1701 = vunpack.c.0.s8 %v1700
        %v1702 = vperm.slane %v1694, %v1701
        %v1703 = vrot.slane %v1686, 4
        %v1704 = vsel %vm601, 0.0, %v1703
        %v1705 = vrot.slane %v1690, 4
        %v1706 = vsel %vm601, 0.0, %v1705
        %v1707 = vrot.slane %v1698, 4
        %v1708 = vsel %vm601, 0.0, %v1707
        %v1709 = vrot.slane %v1702, 4
        %v1710 = vsel %vm601, 0.0, %v1709
        %v1711 = vrot.slane %v1642, 4
        %v1712 = vsel %vm601, %v1711, %v1634
        %v1713 = vrot.slane %v1634, 4
        %v1714 = vsel %vm601, %v1642, %v1713
        %v1716 = vunpack.c.l.s4 1983009808
        %v1717 = vunpack.c.0.s8 %v1716
        %v1718 = vperm.slane %v1712, %v1717
        %v1720 = vunpack.c.l.s4 1983009808
        %v1721 = vunpack.c.0.s8 %v1720
        %v1722 = vperm.slane %v1714, %v1721
        %v1723 = vrot.slane %v1646, 4
        %v1724 = vsel %vm601, %v1723, %v1638
        %v1725 = vrot.slane %v1638, 4
        %v1726 = vsel %vm601, %v1646, %v1725
        %v1728 = vunpack.c.l.s4 1983009808
        %v1729 = vunpack.c.0.s8 %v1728
        %v1730 = vperm.slane %v1724, %v1729
        %v1732 = vunpack.c.l.s4 1983009808
        %v1733 = vunpack.c.0.s8 %v1732
        %v1734 = vperm.slane %v1726, %v1733
        %v1735 = vrot.slane %v1730, 4
        %v1736 = vsel %vm601, %v1735, %v1718
        %v1737 = vrot.slane %v1718, 4
        %v1738 = vsel %vm601, %v1730, %v1737
        %v1740 = vunpack.c.l.s4 1934713408
        %v1741 = vunpack.c.0.s8 %v1740
        %v1742 = vperm.slane %v1736, %v1741
        %v1744 = vunpack.c.l.s4 1934713408
        %v1745 = vunpack.c.0.s8 %v1744
        %v1746 = vperm.slane %v1738, %v1745
        %v1747 = vrot.slane %v1734, 4
        %v1748 = vsel %vm601, %v1747, %v1722
        %v1749 = vrot.slane %v1722, 4
        %v1750 = vsel %vm601, %v1734, %v1749
        %v1752 = vunpack.c.l.s4 1934713408
        %v1753 = vunpack.c.0.s8 %v1752
        %v1754 = vperm.slane %v1748, %v1753
        %v1756 = vunpack.c.l.s4 1934713408
        %v1757 = vunpack.c.0.s8 %v1756
        %v1758 = vperm.slane %v1750, %v1757
        %v1759 = vrot.slane %v1742, 4
        %v1760 = vsel %vm601, 0.0, %v1759
        %v1761 = vrot.slane %v1746, 4
        %v1762 = vsel %vm601, 0.0, %v1761
        %v1763 = vrot.slane %v1754, 4
        %v1764 = vsel %vm601, 0.0, %v1763
        %v1765 = vrot.slane %v1758, 4
        %v1766 = vsel %vm601, 0.0, %v1765
        %1768 = vrot.lane.b32.xlu0 %v1704, 16
        %v1769 = vpop.permute.xlu0 %1768
        %1772 = vrot.lane.b32.xlu0 %v1690, 32
        %v1773 = vpop.permute.xlu0 %1772
        %1776 = vrot.lane.b32.xlu0 %v1706, 48
        %v1777 = vpop.permute.xlu0 %1776
        %1780 = vrot.lane.b32.xlu0 %v1698, 64
        %v1781 = vpop.permute.xlu0 %1780
        %1784 = vrot.lane.b32.xlu0 %v1708, 80
        %v1785 = vpop.permute.xlu0 %1784
        %1788 = vrot.lane.b32.xlu0 %v1702, 96
        %v1789 = vpop.permute.xlu0 %1788
        %1792 = vrot.lane.b32.xlu0 %v1710, 112
        %v1793 = vpop.permute.xlu0 %1792
        %1796 = vrot.lane.b32.xlu0 %v1760, 16
        %v1797 = vpop.permute.xlu0 %1796
        %1800 = vrot.lane.b32.xlu0 %v1746, 32
        %v1801 = vpop.permute.xlu0 %1800
        %1804 = vrot.lane.b32.xlu0 %v1762, 48
        %v1805 = vpop.permute.xlu0 %1804
        %1808 = vrot.lane.b32.xlu0 %v1754, 64
        %v1809 = vpop.permute.xlu0 %1808
        %1812 = vrot.lane.b32.xlu0 %v1764, 80
        %v1813 = vpop.permute.xlu0 %1812
        %1816 = vrot.lane.b32.xlu0 %v1758, 96
        %v1817 = vpop.permute.xlu0 %1816
        %1820 = vrot.lane.b32.xlu0 %v1766, 112
        %v1821 = vpop.permute.xlu0 %1820
        %v1823 = vsel %vm769, %v1686, %v1769
        %v1824 = vsel %vm771, %v1823, %v1773
        %v1825 = vsel %vm773, %v1824, %v1777
        %v1826 = vsel %vm775, %v1825, %v1781
        %v1827 = vsel %vm777, %v1826, %v1785
        %v1828 = vsel %vm779, %v1827, %v1789
        %v1829 = vsel %vm781, %v1828, %v1793
        %v1830 = vsel %vm769, %v1742, %v1797
        %v1831 = vsel %vm771, %v1830, %v1801
        %v1832 = vsel %vm773, %v1831, %v1805
        %v1833 = vsel %vm775, %v1832, %v1809
        %v1834 = vsel %vm777, %v1833, %v1813
        %v1835 = vsel %vm779, %v1834, %v1817
        %v1836 = vsel %vm781, %v1835, %v1821
        %vm1837 = vcmask 1045504
        %v1838 = vrot.slane %v588, 2
        %v1839 = vrot.slane %v589, 2
        %v1840 = vsel %vm1837, %v1838, %v1839
        %v1841 = vrot.slane %v590, 2
        %v1842 = vsel %vm1837, %v1839, %v1841
        %v1843 = vrot.slane %v591, 2
        %v1844 = vrot.slane %v592, 2
        %v1845 = vsel %vm1837, %v1843, %v1844
        %v1846 = vrot.slane %v593, 2
        %v1847 = vsel %vm1837, %v1844, %v1846
        %v1848 = vrot.slane %v594, 2
        %v1849 = vrot.slane %v595, 2
        %v1850 = vsel %vm1837, %v1848, %v1849
        %v1851 = vrot.slane %v596, 2
        %v1852 = vsel %vm1837, %v1849, %v1851
        %v1853 = vrot.slane %v597, 2
        %v1854 = vrot.slane %v598, 2
        %v1855 = vsel %vm1837, %v1853, %v1854
        %v1856 = vrot.slane %v599, 2
        %v1857 = vsel %vm1837, %v1854, %v1856
        %v1866 = vrot.slane %v1850, 4
        %v1867 = vsel %vm601, %v1866, %v1840
        %v1868 = vrot.slane %v1840, 4
        %v1869 = vsel %vm601, %v1850, %v1868
        %v1871 = vunpack.c.l.s4 1983009808
        %v1872 = vunpack.c.0.s8 %v1871
        %v1873 = vperm.slane %v1867, %v1872
        %v1875 = vunpack.c.l.s4 1983009808
        %v1876 = vunpack.c.0.s8 %v1875
        %v1877 = vperm.slane %v1869, %v1876
        %v1878 = vrot.slane %v1855, 4
        %v1879 = vsel %vm601, %v1878, %v1845
        %v1880 = vrot.slane %v1845, 4
        %v1881 = vsel %vm601, %v1855, %v1880
        %v1883 = vunpack.c.l.s4 1983009808
        %v1884 = vunpack.c.0.s8 %v1883
        %v1885 = vperm.slane %v1879, %v1884
        %v1887 = vunpack.c.l.s4 1983009808
        %v1888 = vunpack.c.0.s8 %v1887
        %v1889 = vperm.slane %v1881, %v1888
        %v1890 = vrot.slane %v1885, 4
        %v1891 = vsel %vm601, %v1890, %v1873
        %v1892 = vrot.slane %v1873, 4
        %v1893 = vsel %vm601, %v1885, %v1892
        %v1895 = vunpack.c.l.s4 1934713408
        %v1896 = vunpack.c.0.s8 %v1895
        %v1897 = vperm.slane %v1891, %v1896
        %v1899 = vunpack.c.l.s4 1934713408
        %v1900 = vunpack.c.0.s8 %v1899
        %v1901 = vperm.slane %v1893, %v1900
        %v1902 = vrot.slane %v1889, 4
        %v1903 = vsel %vm601, %v1902, %v1877
        %v1904 = vrot.slane %v1877, 4
        %v1905 = vsel %vm601, %v1889, %v1904
        %v1907 = vunpack.c.l.s4 1934713408
        %v1908 = vunpack.c.0.s8 %v1907
        %v1909 = vperm.slane %v1903, %v1908
        %v1911 = vunpack.c.l.s4 1934713408
        %v1912 = vunpack.c.0.s8 %v1911
        %v1913 = vperm.slane %v1905, %v1912
        %v1914 = vrot.slane %v1897, 4
        %v1915 = vsel %vm601, 0.0, %v1914
        %v1916 = vrot.slane %v1901, 4
        %v1917 = vsel %vm601, 0.0, %v1916
        %v1918 = vrot.slane %v1909, 4
        %v1919 = vsel %vm601, 0.0, %v1918
        %v1920 = vrot.slane %v1913, 4
        %v1921 = vsel %vm601, 0.0, %v1920
        %v1922 = vrot.slane %v1852, 4
        %v1923 = vsel %vm601, %v1922, %v1842
        %v1924 = vrot.slane %v1842, 4
        %v1925 = vsel %vm601, %v1852, %v1924
        %v1927 = vunpack.c.l.s4 1983009808
        %v1928 = vunpack.c.0.s8 %v1927
        %v1929 = vperm.slane %v1923, %v1928
        %v1931 = vunpack.c.l.s4 1983009808
        %v1932 = vunpack.c.0.s8 %v1931
        %v1933 = vperm.slane %v1925, %v1932
        %v1934 = vrot.slane %v1857, 4
        %v1935 = vsel %vm601, %v1934, %v1847
        %v1936 = vrot.slane %v1847, 4
        %v1937 = vsel %vm601, %v1857, %v1936
        %v1939 = vunpack.c.l.s4 1983009808
        %v1940 = vunpack.c.0.s8 %v1939
        %v1941 = vperm.slane %v1935, %v1940
        %v1943 = vunpack.c.l.s4 1983009808
        %v1944 = vunpack.c.0.s8 %v1943
        %v1945 = vperm.slane %v1937, %v1944
        %v1946 = vrot.slane %v1941, 4
        %v1947 = vsel %vm601, %v1946, %v1929
        %v1948 = vrot.slane %v1929, 4
        %v1949 = vsel %vm601, %v1941, %v1948
        %v1951 = vunpack.c.l.s4 1934713408
        %v1952 = vunpack.c.0.s8 %v1951
        %v1953 = vperm.slane %v1947, %v1952
        %v1955 = vunpack.c.l.s4 1934713408
        %v1956 = vunpack.c.0.s8 %v1955
        %v1957 = vperm.slane %v1949, %v1956
        %v1958 = vrot.slane %v1945, 4
        %v1959 = vsel %vm601, %v1958, %v1933
        %v1960 = vrot.slane %v1933, 4
        %v1961 = vsel %vm601, %v1945, %v1960
        %v1963 = vunpack.c.l.s4 1934713408
        %v1964 = vunpack.c.0.s8 %v1963
        %v1965 = vperm.slane %v1959, %v1964
        %v1967 = vunpack.c.l.s4 1934713408
        %v1968 = vunpack.c.0.s8 %v1967
        %v1969 = vperm.slane %v1961, %v1968
        %v1970 = vrot.slane %v1953, 4
        %v1971 = vsel %vm601, 0.0, %v1970
        %v1972 = vrot.slane %v1957, 4
        %v1973 = vsel %vm601, 0.0, %v1972
        %v1974 = vrot.slane %v1965, 4
        %v1975 = vsel %vm601, 0.0, %v1974
        %v1976 = vrot.slane %v1969, 4
        %v1977 = vsel %vm601, 0.0, %v1976
        %1979 = vrot.lane.b32.xlu0 %v1915, 16
        %v1980 = vpop.permute.xlu0 %1979
        %1983 = vrot.lane.b32.xlu0 %v1901, 32
        %v1984 = vpop.permute.xlu0 %1983
        %1987 = vrot.lane.b32.xlu0 %v1917, 48
        %v1988 = vpop.permute.xlu0 %1987
        %1991 = vrot.lane.b32.xlu0 %v1909, 64
        %v1992 = vpop.permute.xlu0 %1991
        %1995 = vrot.lane.b32.xlu0 %v1919, 80
        %v1996 = vpop.permute.xlu0 %1995
        %1999 = vrot.lane.b32.xlu0 %v1913, 96
        %v2000 = vpop.permute.xlu0 %1999
        %2003 = vrot.lane.b32.xlu0 %v1921, 112
        %v2004 = vpop.permute.xlu0 %2003
        %2007 = vrot.lane.b32.xlu0 %v1971, 16
        %v2008 = vpop.permute.xlu0 %2007
        %2011 = vrot.lane.b32.xlu0 %v1957, 32
        %v2012 = vpop.permute.xlu0 %2011
        %2015 = vrot.lane.b32.xlu0 %v1973, 48
        %v2016 = vpop.permute.xlu0 %2015
        %2019 = vrot.lane.b32.xlu0 %v1965, 64
        %v2020 = vpop.permute.xlu0 %2019
        %2023 = vrot.lane.b32.xlu0 %v1975, 80
        %v2024 = vpop.permute.xlu0 %2023
        %2027 = vrot.lane.b32.xlu0 %v1969, 96
        %v2028 = vpop.permute.xlu0 %2027
        %2031 = vrot.lane.b32.xlu0 %v1977, 112
        %v2032 = vpop.permute.xlu0 %2031
        %v2034 = vsel %vm769, %v1897, %v1980
        %v2035 = vsel %vm771, %v2034, %v1984
        %v2036 = vsel %vm773, %v2035, %v1988
        %v2037 = vsel %vm775, %v2036, %v1992
        %v2038 = vsel %vm777, %v2037, %v1996
        %v2039 = vsel %vm779, %v2038, %v2000
        %v2040 = vsel %vm781, %v2039, %v2004
        %v2041 = vsel %vm769, %v1953, %v2008
        %v2042 = vsel %vm771, %v2041, %v2012
        %v2043 = vsel %vm773, %v2042, %v2016
        %v2044 = vsel %vm775, %v2043, %v2020
        %v2045 = vsel %vm777, %v2044, %v2024
        %v2046 = vsel %vm779, %v2045, %v2028
        %v2047 = vsel %vm781, %v2046, %v2032
        %2048 = vrot.lane.b32.xlu0 %v1840, 127
        %v2049 = vpop.permute.xlu0 %2048
        %2050 = vrot.lane.b32.xlu0 %v1842, 127
        %v2051 = vpop.permute.xlu0 %2050
        %2052 = vrot.lane.b32.xlu0 %v1845, 127
        %v2053 = vpop.permute.xlu0 %2052
        %2054 = vrot.lane.b32.xlu0 %v1847, 127
        %v2055 = vpop.permute.xlu0 %2054
        %2056 = vrot.lane.b32.xlu0 %v1850, 127
        %v2057 = vpop.permute.xlu0 %2056
        %2058 = vrot.lane.b32.xlu0 %v1852, 127
        %v2059 = vpop.permute.xlu0 %2058
        %2060 = vrot.lane.b32.xlu0 %v1855, 127
        %v2061 = vpop.permute.xlu0 %2060
        %2062 = vrot.lane.b32.xlu0 %v1857, 127
        %v2063 = vpop.permute.xlu0 %2062
        %v2072 = vrot.slane %v2057, 4
        %v2073 = vsel %vm601, %v2072, %v2049
        %v2074 = vrot.slane %v2049, 4
        %v2075 = vsel %vm601, %v2057, %v2074
        %v2077 = vunpack.c.l.s4 1983009808
        %v2078 = vunpack.c.0.s8 %v2077
        %v2079 = vperm.slane %v2073, %v2078
        %v2081 = vunpack.c.l.s4 1983009808
        %v2082 = vunpack.c.0.s8 %v2081
        %v2083 = vperm.slane %v2075, %v2082
        %v2084 = vrot.slane %v2061, 4
        %v2085 = vsel %vm601, %v2084, %v2053
        %v2086 = vrot.slane %v2053, 4
        %v2087 = vsel %vm601, %v2061, %v2086
        %v2089 = vunpack.c.l.s4 1983009808
        %v2090 = vunpack.c.0.s8 %v2089
        %v2091 = vperm.slane %v2085, %v2090
        %v2093 = vunpack.c.l.s4 1983009808
        %v2094 = vunpack.c.0.s8 %v2093
        %v2095 = vperm.slane %v2087, %v2094
        %v2096 = vrot.slane %v2091, 4
        %v2097 = vsel %vm601, %v2096, %v2079
        %v2098 = vrot.slane %v2079, 4
        %v2099 = vsel %vm601, %v2091, %v2098
        %v2101 = vunpack.c.l.s4 1934713408
        %v2102 = vunpack.c.0.s8 %v2101
        %v2103 = vperm.slane %v2097, %v2102
        %v2105 = vunpack.c.l.s4 1934713408
        %v2106 = vunpack.c.0.s8 %v2105
        %v2107 = vperm.slane %v2099, %v2106
        %v2108 = vrot.slane %v2095, 4
        %v2109 = vsel %vm601, %v2108, %v2083
        %v2110 = vrot.slane %v2083, 4
        %v2111 = vsel %vm601, %v2095, %v2110
        %v2113 = vunpack.c.l.s4 1934713408
        %v2114 = vunpack.c.0.s8 %v2113
        %v2115 = vperm.slane %v2109, %v2114
        %v2117 = vunpack.c.l.s4 1934713408
        %v2118 = vunpack.c.0.s8 %v2117
        %v2119 = vperm.slane %v2111, %v2118
        %v2120 = vrot.slane %v2103, 4
        %v2121 = vsel %vm601, 0.0, %v2120
        %v2122 = vrot.slane %v2107, 4
        %v2123 = vsel %vm601, 0.0, %v2122
        %v2124 = vrot.slane %v2115, 4
        %v2125 = vsel %vm601, 0.0, %v2124
        %v2126 = vrot.slane %v2119, 4
        %v2127 = vsel %vm601, 0.0, %v2126
        %v2128 = vrot.slane %v2059, 4
        %v2129 = vsel %vm601, %v2128, %v2051
        %v2130 = vrot.slane %v2051, 4
        %v2131 = vsel %vm601, %v2059, %v2130
        %v2133 = vunpack.c.l.s4 1983009808
        %v2134 = vunpack.c.0.s8 %v2133
        %v2135 = vperm.slane %v2129, %v2134
        %v2137 = vunpack.c.l.s4 1983009808
        %v2138 = vunpack.c.0.s8 %v2137
        %v2139 = vperm.slane %v2131, %v2138
        %v2140 = vrot.slane %v2063, 4
        %v2141 = vsel %vm601, %v2140, %v2055
        %v2142 = vrot.slane %v2055, 4
        %v2143 = vsel %vm601, %v2063, %v2142
        %v2145 = vunpack.c.l.s4 1983009808
        %v2146 = vunpack.c.0.s8 %v2145
        %v2147 = vperm.slane %v2141, %v2146
        %v2149 = vunpack.c.l.s4 1983009808
        %v2150 = vunpack.c.0.s8 %v2149
        %v2151 = vperm.slane %v2143, %v2150
        %v2152 = vrot.slane %v2147, 4
        %v2153 = vsel %vm601, %v2152, %v2135
        %v2154 = vrot.slane %v2135, 4
        %v2155 = vsel %vm601, %v2147, %v2154
        %v2157 = vunpack.c.l.s4 1934713408
        %v2158 = vunpack.c.0.s8 %v2157
        %v2159 = vperm.slane %v2153, %v2158
        %v2161 = vunpack.c.l.s4 1934713408
        %v2162 = vunpack.c.0.s8 %v2161
        %v2163 = vperm.slane %v2155, %v2162
        %v2164 = vrot.slane %v2151, 4
        %v2165 = vsel %vm601, %v2164, %v2139
        %v2166 = vrot.slane %v2139, 4
        %v2167 = vsel %vm601, %v2151, %v2166
        %v2169 = vunpack.c.l.s4 1934713408
        %v2170 = vunpack.c.0.s8 %v2169
        %v2171 = vperm.slane %v2165, %v2170
        %v2173 = vunpack.c.l.s4 1934713408
        %v2174 = vunpack.c.0.s8 %v2173
        %v2175 = vperm.slane %v2167, %v2174
        %v2176 = vrot.slane %v2159, 4
        %v2177 = vsel %vm601, 0.0, %v2176
        %v2178 = vrot.slane %v2163, 4
        %v2179 = vsel %vm601, 0.0, %v2178
        %v2180 = vrot.slane %v2171, 4
        %v2181 = vsel %vm601, 0.0, %v2180
        %v2182 = vrot.slane %v2175, 4
        %v2183 = vsel %vm601, 0.0, %v2182
        %2185 = vrot.lane.b32.xlu0 %v2121, 16
        %v2186 = vpop.permute.xlu0 %2185
        %2189 = vrot.lane.b32.xlu0 %v2107, 32
        %v2190 = vpop.permute.xlu0 %2189
        %2193 = vrot.lane.b32.xlu0 %v2123, 48
        %v2194 = vpop.permute.xlu0 %2193
        %2197 = vrot.lane.b32.xlu0 %v2115, 64
        %v2198 = vpop.permute.xlu0 %2197
        %2201 = vrot.lane.b32.xlu0 %v2125, 80
        %v2202 = vpop.permute.xlu0 %2201
        %2205 = vrot.lane.b32.xlu0 %v2119, 96
        %v2206 = vpop.permute.xlu0 %2205
        %2209 = vrot.lane.b32.xlu0 %v2127, 112
        %v2210 = vpop.permute.xlu0 %2209
        %2213 = vrot.lane.b32.xlu0 %v2177, 16
        %v2214 = vpop.permute.xlu0 %2213
        %2217 = vrot.lane.b32.xlu0 %v2163, 32
        %v2218 = vpop.permute.xlu0 %2217
        %2221 = vrot.lane.b32.xlu0 %v2179, 48
        %v2222 = vpop.permute.xlu0 %2221
        %2225 = vrot.lane.b32.xlu0 %v2171, 64
        %v2226 = vpop.permute.xlu0 %2225
        %2229 = vrot.lane.b32.xlu0 %v2181, 80
        %v2230 = vpop.permute.xlu0 %2229
        %2233 = vrot.lane.b32.xlu0 %v2175, 96
        %v2234 = vpop.permute.xlu0 %2233
        %2237 = vrot.lane.b32.xlu0 %v2183, 112
        %v2238 = vpop.permute.xlu0 %2237
        %v2240 = vsel %vm769, %v2103, %v2186
        %v2241 = vsel %vm771, %v2240, %v2190
        %v2242 = vsel %vm773, %v2241, %v2194
        %v2243 = vsel %vm775, %v2242, %v2198
        %v2244 = vsel %vm777, %v2243, %v2202
        %v2245 = vsel %vm779, %v2244, %v2206
        %v2246 = vsel %vm781, %v2245, %v2210
        %v2247 = vsel %vm769, %v2159, %v2214
        %v2248 = vsel %vm771, %v2247, %v2218
        %v2249 = vsel %vm773, %v2248, %v2222
        %v2250 = vsel %vm775, %v2249, %v2226
        %v2251 = vsel %vm777, %v2250, %v2230
        %v2252 = vsel %vm779, %v2251, %v2234
        %v2253 = vsel %vm781, %v2252, %v2238
        %2254 = vrot.lane.b32.xlu0 %v1840, 126
        %v2255 = vpop.permute.xlu0 %2254
        %2256 = vrot.lane.b32.xlu0 %v1842, 126
        %v2257 = vpop.permute.xlu0 %2256
        %2258 = vrot.lane.b32.xlu0 %v1845, 126
        %v2259 = vpop.permute.xlu0 %2258
        %2260 = vrot.lane.b32.xlu0 %v1847, 126
        %v2261 = vpop.permute.xlu0 %2260
        %2262 = vrot.lane.b32.xlu0 %v1850, 126
        %v2263 = vpop.permute.xlu0 %2262
        %2264 = vrot.lane.b32.xlu0 %v1852, 126
        %v2265 = vpop.permute.xlu0 %2264
        %2266 = vrot.lane.b32.xlu0 %v1855, 126
        %v2267 = vpop.permute.xlu0 %2266
        %2268 = vrot.lane.b32.xlu0 %v1857, 126
        %v2269 = vpop.permute.xlu0 %2268
        %v2278 = vrot.slane %v2263, 4
        %v2279 = vsel %vm601, %v2278, %v2255
        %v2280 = vrot.slane %v2255, 4
        %v2281 = vsel %vm601, %v2263, %v2280
        %v2283 = vunpack.c.l.s4 1983009808
        %v2284 = vunpack.c.0.s8 %v2283
        %v2285 = vperm.slane %v2279, %v2284
        %v2287 = vunpack.c.l.s4 1983009808
        %v2288 = vunpack.c.0.s8 %v2287
        %v2289 = vperm.slane %v2281, %v2288
        %v2290 = vrot.slane %v2267, 4
        %v2291 = vsel %vm601, %v2290, %v2259
        %v2292 = vrot.slane %v2259, 4
        %v2293 = vsel %vm601, %v2267, %v2292
        %v2295 = vunpack.c.l.s4 1983009808
        %v2296 = vunpack.c.0.s8 %v2295
        %v2297 = vperm.slane %v2291, %v2296
        %v2299 = vunpack.c.l.s4 1983009808
        %v2300 = vunpack.c.0.s8 %v2299
        %v2301 = vperm.slane %v2293, %v2300
        %v2302 = vrot.slane %v2297, 4
        %v2303 = vsel %vm601, %v2302, %v2285
        %v2304 = vrot.slane %v2285, 4
        %v2305 = vsel %vm601, %v2297, %v2304
        %v2307 = vunpack.c.l.s4 1934713408
        %v2308 = vunpack.c.0.s8 %v2307
        %v2309 = vperm.slane %v2303, %v2308
        %v2311 = vunpack.c.l.s4 1934713408
        %v2312 = vunpack.c.0.s8 %v2311
        %v2313 = vperm.slane %v2305, %v2312
        %v2314 = vrot.slane %v2301, 4
        %v2315 = vsel %vm601, %v2314, %v2289
        %v2316 = vrot.slane %v2289, 4
        %v2317 = vsel %vm601, %v2301, %v2316
        %v2319 = vunpack.c.l.s4 1934713408
        %v2320 = vunpack.c.0.s8 %v2319
        %v2321 = vperm.slane %v2315, %v2320
        %v2323 = vunpack.c.l.s4 1934713408
        %v2324 = vunpack.c.0.s8 %v2323
        %v2325 = vperm.slane %v2317, %v2324
        %v2326 = vrot.slane %v2309, 4
        %v2327 = vsel %vm601, 0.0, %v2326
        %v2328 = vrot.slane %v2313, 4
        %v2329 = vsel %vm601, 0.0, %v2328
        %v2330 = vrot.slane %v2321, 4
        %v2331 = vsel %vm601, 0.0, %v2330
        %v2332 = vrot.slane %v2325, 4
        %v2333 = vsel %vm601, 0.0, %v2332
        %v2334 = vrot.slane %v2265, 4
        %v2335 = vsel %vm601, %v2334, %v2257
        %v2336 = vrot.slane %v2257, 4
        %v2337 = vsel %vm601, %v2265, %v2336
        %v2339 = vunpack.c.l.s4 1983009808
        %v2340 = vunpack.c.0.s8 %v2339
        %v2341 = vperm.slane %v2335, %v2340
        %v2343 = vunpack.c.l.s4 1983009808
        %v2344 = vunpack.c.0.s8 %v2343
        %v2345 = vperm.slane %v2337, %v2344
        %v2346 = vrot.slane %v2269, 4
        %v2347 = vsel %vm601, %v2346, %v2261
        %v2348 = vrot.slane %v2261, 4
        %v2349 = vsel %vm601, %v2269, %v2348
        %v2351 = vunpack.c.l.s4 1983009808
        %v2352 = vunpack.c.0.s8 %v2351
        %v2353 = vperm.slane %v2347, %v2352
        %v2355 = vunpack.c.l.s4 1983009808
        %v2356 = vunpack.c.0.s8 %v2355
        %v2357 = vperm.slane %v2349, %v2356
        %v2358 = vrot.slane %v2353, 4
        %v2359 = vsel %vm601, %v2358, %v2341
        %v2360 = vrot.slane %v2341, 4
        %v2361 = vsel %vm601, %v2353, %v2360
        %v2363 = vunpack.c.l.s4 1934713408
        %v2364 = vunpack.c.0.s8 %v2363
        %v2365 = vperm.slane %v2359, %v2364
        %v2367 = vunpack.c.l.s4 1934713408
        %v2368 = vunpack.c.0.s8 %v2367
        %v2369 = vperm.slane %v2361, %v2368
        %v2370 = vrot.slane %v2357, 4
        %v2371 = vsel %vm601, %v2370, %v2345
        %v2372 = vrot.slane %v2345, 4
        %v2373 = vsel %vm601, %v2357, %v2372
        %v2375 = vunpack.c.l.s4 1934713408
        %v2376 = vunpack.c.0.s8 %v2375
        %v2377 = vperm.slane %v2371, %v2376
        %v2379 = vunpack.c.l.s4 1934713408
        %v2380 = vunpack.c.0.s8 %v2379
        %v2381 = vperm.slane %v2373, %v2380
        %v2382 = vrot.slane %v2365, 4
        %v2383 = vsel %vm601, 0.0, %v2382
        %v2384 = vrot.slane %v2369, 4
        %v2385 = vsel %vm601, 0.0, %v2384
        %v2386 = vrot.slane %v2377, 4
        %v2387 = vsel %vm601, 0.0, %v2386
        %v2388 = vrot.slane %v2381, 4
        %v2389 = vsel %vm601, 0.0, %v2388
        %2391 = vrot.lane.b32.xlu0 %v2327, 16
        %v2392 = vpop.permute.xlu0 %2391
        %2395 = vrot.lane.b32.xlu0 %v2313, 32
        %v2396 = vpop.permute.xlu0 %2395
        %2399 = vrot.lane.b32.xlu0 %v2329, 48
        %v2400 = vpop.permute.xlu0 %2399
        %2403 = vrot.lane.b32.xlu0 %v2321, 64
        %v2404 = vpop.permute.xlu0 %2403
        %2407 = vrot.lane.b32.xlu0 %v2331, 80
        %v2408 = vpop.permute.xlu0 %2407
        %2411 = vrot.lane.b32.xlu0 %v2325, 96
        %v2412 = vpop.permute.xlu0 %2411
        %2415 = vrot.lane.b32.xlu0 %v2333, 112
        %v2416 = vpop.permute.xlu0 %2415
        %2419 = vrot.lane.b32.xlu0 %v2383, 16
        %v2420 = vpop.permute.xlu0 %2419
        %2423 = vrot.lane.b32.xlu0 %v2369, 32
        %v2424 = vpop.permute.xlu0 %2423
        %2427 = vrot.lane.b32.xlu0 %v2385, 48
        %v2428 = vpop.permute.xlu0 %2427
        %2431 = vrot.lane.b32.xlu0 %v2377, 64
        %v2432 = vpop.permute.xlu0 %2431
        %2435 = vrot.lane.b32.xlu0 %v2387, 80
        %v2436 = vpop.permute.xlu0 %2435
        %2439 = vrot.lane.b32.xlu0 %v2381, 96
        %v2440 = vpop.permute.xlu0 %2439
        %2443 = vrot.lane.b32.xlu0 %v2389, 112
        %v2444 = vpop.permute.xlu0 %2443
        %v2446 = vsel %vm769, %v2309, %v2392
        %v2447 = vsel %vm771, %v2446, %v2396
        %v2448 = vsel %vm773, %v2447, %v2400
        %v2449 = vsel %vm775, %v2448, %v2404
        %v2450 = vsel %vm777, %v2449, %v2408
        %v2451 = vsel %vm779, %v2450, %v2412
        %v2452 = vsel %vm781, %v2451, %v2416
        %v2453 = vsel %vm769, %v2365, %v2420
        %v2454 = vsel %vm771, %v2453, %v2424
        %v2455 = vsel %vm773, %v2454, %v2428
        %v2456 = vsel %vm775, %v2455, %v2432
        %v2457 = vsel %vm777, %v2456, %v2436
        %v2458 = vsel %vm779, %v2457, %v2440
        %v2459 = vsel %vm781, %v2458, %v2444
        %v2462 = vrot.slane %v996, 4
        %v2463 = vrot.slane %v1003, 4
        %v2468 = vrot.slane %v1417, 4
        %v2469 = vrot.slane %v1424, 4
        %v2474 = vrot.slane %v1829, 4
        %v2475 = vrot.slane %v1836, 4
        %v2480 = vrot.slane %v2246, 4
        %v2481 = vrot.slane %v2253, 4
        %vm2484 = vcmask 1043456
        %v2485 = vsel %vm2484, %v782, %v2462
        %v2486 = vsel %vm2484, %v789, %v2463
        %v2487 = vsel %vm2484, %v1202, %v2468
        %v2488 = vsel %vm2484, %v1209, %v2469
        %v2489 = vsel %vm2484, %v1623, %v2474
        %v2490 = vsel %vm2484, %v1630, %v2475
        %v2491 = vsel %vm2484, %v2040, %v2480
        %v2492 = vsel %vm2484, %v2047, %v2481
        %v2493 = vld [vmem:[%s4] sm:$0x3]
        %v2494 = vld [vmem:[%s5] sm:$0x3]
        %2496 = vset.pattern.permute.xlu0 0
        %2497 = vperm.xlu0 %2496, %v2494
        %v2498 = vpop.permute.xlu0 %2497
        %vm2500 = vcmask 293888
        %v2502 = vsel %vm2500, %v2493, 0
        %v2505 = vsel %vm2484, %v2452, 0
        %v2508 = vsel %vm2484, %v2459, 0
        %2510 = vmatpush.msra.mxu0 0.0
        %2511 = vmatpush.msra.mxu0 0.0
        %2512 = vmatpush.msra.mxu0 0.0
        %2513 = vmatpush.msra.mxu0 0.0
        %2514 = vmatpush.msra.mxu0 0.0
        %2515 = vmatpush.msra.mxu0 0.0
        %2516 = vmatpush.msra.mxu0 0.0
        %2517 = vmatpush.msra.mxu0 0.0
        %2518 = vmatpush.msra.mxu0 0.0
        %2519 = vmatpush.msra.mxu0 0.0
        %2520 = vmatpush.msra.mxu0 0.0
        %2521 = vmatpush.msra.mxu0 %v2505
        %2522 = vmatpush.msra.mxu0 %v2491
        %2523 = vmatpush.msra.mxu0 %v2489
        %2524 = vmatpush.msra.mxu0 %v2487
        %2525 = vmatpush.msra.mxu0 %v2485
        %2526 = vmatmul.f32.gmra.mxu0 %v2502
        %v2527 = vpop.f32.mrf.mxu0
        %v2528 = vadd.f32 %v2498, %v2527
        %2529 = vdwg.mxu0
        %2530 = vmatpush.msra.mxu0 0.0
        %2531 = vmatpush.msra.mxu0 0.0
        %2532 = vmatpush.msra.mxu0 0.0
        %2533 = vmatpush.msra.mxu0 0.0
        %2534 = vmatpush.msra.mxu0 0.0
        %2535 = vmatpush.msra.mxu0 0.0
        %2536 = vmatpush.msra.mxu0 0.0
        %2537 = vmatpush.msra.mxu0 0.0
        %2538 = vmatpush.msra.mxu0 0.0
        %2539 = vmatpush.msra.mxu0 0.0
        %2540 = vmatpush.msra.mxu0 0.0
        %2541 = vmatpush.msra.mxu0 %v2508
        %2542 = vmatpush.msra.mxu0 %v2492
        %2543 = vmatpush.msra.mxu0 %v2490
        %2544 = vmatpush.msra.mxu0 %v2488
        %2545 = vmatpush.msra.mxu0 %v2486
        %2546 = vmatmul.f32.gmra.mxu0 %v2502
        %v2547 = vpop.f32.mrf.mxu0
        %v2548 = vadd.f32 %v2498, %v2547
        %2549 = vdwg.mxu0
        %v2550 = vmax.f32 %v2528, 0.0
        %v2551 = vmax.f32 %v2548, 0.0
        %2552 = vst.msk [vmem:[#allocation3] sm:$0xff] %vm525, 0.0
        %2553 = vst.msk [vmem:[#allocation3 + $0x8] sm:$0xff] %vm525, 0.0
        %2554 = vst.msk [vmem:[#allocation3 + $0x10] sm:$0x3] %vm528, 0.0
        %2555 = vst.msk [vmem:[#allocation3 + $0x18] sm:$0xff] %vm525, 0.0
        %2556 = vst.msk [vmem:[#allocation3 + $0x20] sm:$0xff] %vm525, 0.0
        %2557 = vst.msk [vmem:[#allocation3 + $0x28] sm:$0x3] %vm528, 0.0
        %2559 = vrot.lane.b32.xlu0 %v2550, 112
        %v2560 = vpop.permute.xlu0 %2559
        %2562 = vrot.lane.b32.xlu0 %v2550, 96
        %v2563 = vpop.permute.xlu0 %2562
        %2565 = vrot.lane.b32.xlu0 %v2550, 80
        %v2566 = vpop.permute.xlu0 %2565
        %2568 = vrot.lane.b32.xlu0 %v2550, 64
        %v2569 = vpop.permute.xlu0 %2568
        %2571 = vrot.lane.b32.xlu0 %v2550, 48
        %v2572 = vpop.permute.xlu0 %2571
        %2574 = vrot.lane.b32.xlu0 %v2550, 32
        %v2575 = vpop.permute.xlu0 %2574
        %2577 = vrot.lane.b32.xlu0 %v2550, 16
        %v2578 = vpop.permute.xlu0 %2577
        %2581 = vrot.lane.b32.xlu0 %v2551, 112
        %v2582 = vpop.permute.xlu0 %2581
        %2584 = vrot.lane.b32.xlu0 %v2551, 96
        %v2585 = vpop.permute.xlu0 %2584
        %2587 = vrot.lane.b32.xlu0 %v2551, 80
        %v2588 = vpop.permute.xlu0 %2587
        %2590 = vrot.lane.b32.xlu0 %v2551, 64
        %v2591 = vpop.permute.xlu0 %2590
        %2593 = vrot.lane.b32.xlu0 %v2551, 48
        %v2594 = vpop.permute.xlu0 %2593
        %2596 = vrot.lane.b32.xlu0 %v2551, 32
        %v2597 = vpop.permute.xlu0 %2596
        %2599 = vrot.lane.b32.xlu0 %v2551, 16
        %v2600 = vpop.permute.xlu0 %2599
        %v2602 = vrot.slane %v2563, 4
        %v2603 = vsel %vm601, %v2602, %v2550
        %v2605 = vunpack.c.l.s4 1983009808
        %v2606 = vunpack.c.0.s8 %v2605
        %v2607 = vperm.slane %v2603, %v2606
        %v2608 = vrot.slane %v2566, 4
        %v2609 = vsel %vm601, %v2608, %v2560
        %v2611 = vunpack.c.l.s4 1983009808
        %v2612 = vunpack.c.0.s8 %v2611
        %v2613 = vperm.slane %v2609, %v2612
        %v2614 = vrot.slane %v2575, 4
        %v2615 = vsel %vm601, %v2614, %v2569
        %v2617 = vunpack.c.l.s4 1983009808
        %v2618 = vunpack.c.0.s8 %v2617
        %v2619 = vperm.slane %v2615, %v2618
        %v2620 = vrot.slane %v2578, 4
        %v2621 = vsel %vm601, %v2620, %v2572
        %v2623 = vunpack.c.l.s4 1983009808
        %v2624 = vunpack.c.0.s8 %v2623
        %v2625 = vperm.slane %v2621, %v2624
        %v2626 = vrot.slane %v2613, 4
        %v2627 = vsel %vm601, %v2626, %v2607
        %v2629 = vunpack.c.l.s4 1934713408
        %v2630 = vunpack.c.0.s8 %v2629
        %v2631 = vperm.slane %v2627, %v2630
        %v2632 = vrot.slane %v2625, 4
        %v2633 = vsel %vm601, %v2632, %v2619
        %v2635 = vunpack.c.l.s4 1934713408
        %v2636 = vunpack.c.0.s8 %v2635
        %v2637 = vperm.slane %v2633, %v2636
        %v2638 = vrot.slane %v2637, 4
        %v2639 = vsel %vm601, %v2638, %v2631
        %v2640 = vrot.slane %v2631, 4
        %v2641 = vsel %vm601, %v2637, %v2640
        %v2642 = vrot.slane %v2585, 4
        %v2643 = vsel %vm601, %v2642, %v2551
        %v2645 = vunpack.c.l.s4 1983009808
        %v2646 = vunpack.c.0.s8 %v2645
        %v2647 = vperm.slane %v2643, %v2646
        %v2648 = vrot.slane %v2588, 4
        %v2649 = vsel %vm601, %v2648, %v2582
        %v2651 = vunpack.c.l.s4 1983009808
        %v2652 = vunpack.c.0.s8 %v2651
        %v2653 = vperm.slane %v2649, %v2652
        %v2654 = vrot.slane %v2597, 4
        %v2655 = vsel %vm601, %v2654, %v2591
        %v2657 = vunpack.c.l.s4 1983009808
        %v2658 = vunpack.c.0.s8 %v2657
        %v2659 = vperm.slane %v2655, %v2658
        %v2660 = vrot.slane %v2600, 4
        %v2661 = vsel %vm601, %v2660, %v2594
        %v2663 = vunpack.c.l.s4 1983009808
        %v2664 = vunpack.c.0.s8 %v2663
        %v2665 = vperm.slane %v2661, %v2664
        %v2666 = vrot.slane %v2653, 4
        %v2667 = vsel %vm601, %v2666, %v2647
        %v2669 = vunpack.c.l.s4 1934713408
        %v2670 = vunpack.c.0.s8 %v2669
        %v2671 = vperm.slane %v2667, %v2670
        %v2672 = vrot.slane %v2665, 4
        %v2673 = vsel %vm601, %v2672, %v2659
        %v2675 = vunpack.c.l.s4 1934713408
        %v2676 = vunpack.c.0.s8 %v2675
        %v2677 = vperm.slane %v2673, %v2676
        %v2678 = vrot.slane %v2677, 4
        %v2679 = vsel %vm601, %v2678, %v2671
        %v2680 = vrot.slane %v2671, 4
        %v2681 = vsel %vm601, %v2677, %v2680
        %2686 = vrot.lane.b32.xlu0 %v2639, 1
        %v2687 = vpop.permute.xlu0 %2686
        %2688 = vrot.lane.b32.xlu0 %v2679, 1
        %v2689 = vpop.permute.xlu0 %2688
        %2690 = vrot.lane.b32.xlu0 %v2641, 1
        %v2691 = vpop.permute.xlu0 %2690
        %2692 = vrot.lane.b32.xlu0 %v2681, 1
        %v2693 = vpop.permute.xlu0 %2692
        %2698 = vst.msk [vmem:[#allocation3 + $0x1] sm:$0xff] %vm579, %v2687
        %2699 = vst.msk [vmem:[#allocation3 + $0x9] sm:$0xff] %vm579, %v2689
        %2700 = vst.msk [vmem:[#allocation3 + $0x19] sm:$0xff] %vm579, %v2691
        %2701 = vst.msk [vmem:[#allocation3 + $0x21] sm:$0xff] %vm579, %v2693
        %v2702 = vld [vmem:[#allocation3] sm:$0xff]
        %v2703 = vld [vmem:[#allocation3 + $0x8] sm:$0xff]
        %v2704 = vld [vmem:[#allocation3 + $0x10] sm:$0x3]
        %v2705 = vld [vmem:[#allocation3 + $0x18] sm:$0xff]
        %v2706 = vld [vmem:[#allocation3 + $0x20] sm:$0xff]
        %v2707 = vld [vmem:[#allocation3 + $0x28] sm:$0x3]
        %v2708 = vrot.slane %v2702, 4
        %v2709 = vsel %vm601, 0.0, %v2708
        %v2711 = vunpack.c.l.s4 1983009808
        %v2712 = vunpack.c.0.s8 %v2711
        %v2713 = vperm.slane %v2702, %v2712
        %v2715 = vunpack.c.l.s4 1983009808
        %v2716 = vunpack.c.0.s8 %v2715
        %v2717 = vperm.slane %v2709, %v2716
        %v2718 = vrot.slane %v2705, 4
        %v2719 = vsel %vm601, 0.0, %v2718
        %v2721 = vunpack.c.l.s4 1983009808
        %v2722 = vunpack.c.0.s8 %v2721
        %v2723 = vperm.slane %v2705, %v2722
        %v2725 = vunpack.c.l.s4 1983009808
        %v2726 = vunpack.c.0.s8 %v2725
        %v2727 = vperm.slane %v2719, %v2726
        %v2728 = vrot.slane %v2723, 4
        %v2729 = vsel %vm601, %v2728, %v2713
        %v2730 = vrot.slane %v2713, 4
        %v2731 = vsel %vm601, %v2723, %v2730
        %v2733 = vunpack.c.l.s4 1934713408
        %v2734 = vunpack.c.0.s8 %v2733
        %v2735 = vperm.slane %v2729, %v2734
        %v2737 = vunpack.c.l.s4 1934713408
        %v2738 = vunpack.c.0.s8 %v2737
        %v2739 = vperm.slane %v2731, %v2738
        %v2740 = vrot.slane %v2727, 4
        %v2741 = vsel %vm601, %v2740, %v2717
        %v2742 = vrot.slane %v2717, 4
        %v2743 = vsel %vm601, %v2727, %v2742
        %v2745 = vunpack.c.l.s4 1934713408
        %v2746 = vunpack.c.0.s8 %v2745
        %v2747 = vperm.slane %v2741, %v2746
        %v2749 = vunpack.c.l.s4 1934713408
        %v2750 = vunpack.c.0.s8 %v2749
        %v2751 = vperm.slane %v2743, %v2750
        %v2752 = vrot.slane %v2735, 4
        %v2753 = vsel %vm601, 0.0, %v2752
        %v2754 = vrot.slane %v2739, 4
        %v2755 = vsel %vm601, 0.0, %v2754
        %v2756 = vrot.slane %v2747, 4
        %v2757 = vsel %vm601, 0.0, %v2756
        %v2758 = vrot.slane %v2751, 4
        %v2759 = vsel %vm601, 0.0, %v2758
        %v2760 = vrot.slane %v2703, 4
        %v2761 = vsel %vm601, 0.0, %v2760
        %v2763 = vunpack.c.l.s4 1983009808
        %v2764 = vunpack.c.0.s8 %v2763
        %v2765 = vperm.slane %v2703, %v2764
        %v2767 = vunpack.c.l.s4 1983009808
        %v2768 = vunpack.c.0.s8 %v2767
        %v2769 = vperm.slane %v2761, %v2768
        %v2770 = vrot.slane %v2706, 4
        %v2771 = vsel %vm601, 0.0, %v2770
        %v2773 = vunpack.c.l.s4 1983009808
        %v2774 = vunpack.c.0.s8 %v2773
        %v2775 = vperm.slane %v2706, %v2774
        %v2777 = vunpack.c.l.s4 1983009808
        %v2778 = vunpack.c.0.s8 %v2777
        %v2779 = vperm.slane %v2771, %v2778
        %v2780 = vrot.slane %v2775, 4
        %v2781 = vsel %vm601, %v2780, %v2765
        %v2782 = vrot.slane %v2765, 4
        %v2783 = vsel %vm601, %v2775, %v2782
        %v2785 = vunpack.c.l.s4 1934713408
        %v2786 = vunpack.c.0.s8 %v2785
        %v2787 = vperm.slane %v2781, %v2786
        %v2789 = vunpack.c.l.s4 1934713408
        %v2790 = vunpack.c.0.s8 %v2789
        %v2791 = vperm.slane %v2783, %v2790
        %v2792 = vrot.slane %v2779, 4
        %v2793 = vsel %vm601, %v2792, %v2769
        %v2794 = vrot.slane %v2769, 4
        %v2795 = vsel %vm601, %v2779, %v2794
        %v2797 = vunpack.c.l.s4 1934713408
        %v2798 = vunpack.c.0.s8 %v2797
        %v2799 = vperm.slane %v2793, %v2798
        %v2801 = vunpack.c.l.s4 1934713408
        %v2802 = vunpack.c.0.s8 %v2801
        %v2803 = vperm.slane %v2795, %v2802
        %v2804 = vrot.slane %v2787, 4
        %v2805 = vsel %vm601, 0.0, %v2804
        %v2806 = vrot.slane %v2791, 4
        %v2807 = vsel %vm601, 0.0, %v2806
        %v2808 = vrot.slane %v2799, 4
        %v2809 = vsel %vm601, 0.0, %v2808
        %v2810 = vrot.slane %v2803, 4
        %v2811 = vsel %vm601, 0.0, %v2810
        %2813 = vrot.lane.b32.xlu0 %v2753, 16
        %v2814 = vpop.permute.xlu0 %2813
        %2817 = vrot.lane.b32.xlu0 %v2739, 32
        %v2818 = vpop.permute.xlu0 %2817
        %2821 = vrot.lane.b32.xlu0 %v2755, 48
        %v2822 = vpop.permute.xlu0 %2821
        %2825 = vrot.lane.b32.xlu0 %v2747, 64
        %v2826 = vpop.permute.xlu0 %2825
        %2829 = vrot.lane.b32.xlu0 %v2757, 80
        %v2830 = vpop.permute.xlu0 %2829
        %2833 = vrot.lane.b32.xlu0 %v2751, 96
        %v2834 = vpop.permute.xlu0 %2833
        %2837 = vrot.lane.b32.xlu0 %v2759, 112
        %v2838 = vpop.permute.xlu0 %2837
        %2841 = vrot.lane.b32.xlu0 %v2805, 16
        %v2842 = vpop.permute.xlu0 %2841
        %2845 = vrot.lane.b32.xlu0 %v2791, 32
        %v2846 = vpop.permute.xlu0 %2845
        %2849 = vrot.lane.b32.xlu0 %v2807, 48
        %v2850 = vpop.permute.xlu0 %2849
        %2853 = vrot.lane.b32.xlu0 %v2799, 64
        %v2854 = vpop.permute.xlu0 %2853
        %2857 = vrot.lane.b32.xlu0 %v2809, 80
        %v2858 = vpop.permute.xlu0 %2857
        %2861 = vrot.lane.b32.xlu0 %v2803, 96
        %v2862 = vpop.permute.xlu0 %2861
        %2865 = vrot.lane.b32.xlu0 %v2811, 112
        %v2866 = vpop.permute.xlu0 %2865
        %v2868 = vsel %vm769, %v2735, %v2814
        %v2869 = vsel %vm771, %v2868, %v2818
        %v2870 = vsel %vm773, %v2869, %v2822
        %v2871 = vsel %vm775, %v2870, %v2826
        %v2872 = vsel %vm777, %v2871, %v2830
        %v2873 = vsel %vm779, %v2872, %v2834
        %v2874 = vsel %vm781, %v2873, %v2838
        %v2875 = vsel %vm769, %v2787, %v2842
        %v2876 = vsel %vm771, %v2875, %v2846
        %v2877 = vsel %vm773, %v2876, %v2850
        %v2878 = vsel %vm775, %v2877, %v2854
        %v2879 = vsel %vm777, %v2878, %v2858
        %v2880 = vsel %vm779, %v2879, %v2862
        %v2881 = vsel %vm781, %v2880, %v2866
        %2886 = vrot.lane.b32.xlu0 %v2702, 127
        %v2887 = vpop.permute.xlu0 %2886
        %2888 = vrot.lane.b32.xlu0 %v2703, 127
        %v2889 = vpop.permute.xlu0 %2888
        %2890 = vrot.lane.b32.xlu0 %v2705, 127
        %v2891 = vpop.permute.xlu0 %2890
        %2892 = vrot.lane.b32.xlu0 %v2706, 127
        %v2893 = vpop.permute.xlu0 %2892
        %v2898 = vrot.slane %v2887, 4
        %v2899 = vsel %vm601, 0.0, %v2898
        %v2901 = vunpack.c.l.s4 1983009808
        %v2902 = vunpack.c.0.s8 %v2901
        %v2903 = vperm.slane %v2887, %v2902
        %v2905 = vunpack.c.l.s4 1983009808
        %v2906 = vunpack.c.0.s8 %v2905
        %v2907 = vperm.slane %v2899, %v2906
        %v2908 = vrot.slane %v2891, 4
        %v2909 = vsel %vm601, 0.0, %v2908
        %v2911 = vunpack.c.l.s4 1983009808
        %v2912 = vunpack.c.0.s8 %v2911
        %v2913 = vperm.slane %v2891, %v2912
        %v2915 = vunpack.c.l.s4 1983009808
        %v2916 = vunpack.c.0.s8 %v2915
        %v2917 = vperm.slane %v2909, %v2916
        %v2918 = vrot.slane %v2913, 4
        %v2919 = vsel %vm601, %v2918, %v2903
        %v2920 = vrot.slane %v2903, 4
        %v2921 = vsel %vm601, %v2913, %v2920
        %v2923 = vunpack.c.l.s4 1934713408
        %v2924 = vunpack.c.0.s8 %v2923
        %v2925 = vperm.slane %v2919, %v2924
        %v2927 = vunpack.c.l.s4 1934713408
        %v2928 = vunpack.c.0.s8 %v2927
        %v2929 = vperm.slane %v2921, %v2928
        %v2930 = vrot.slane %v2917, 4
        %v2931 = vsel %vm601, %v2930, %v2907
        %v2932 = vrot.slane %v2907, 4
        %v2933 = vsel %vm601, %v2917, %v2932
        %v2935 = vunpack.c.l.s4 1934713408
        %v2936 = vunpack.c.0.s8 %v2935
        %v2937 = vperm.slane %v2931, %v2936
        %v2939 = vunpack.c.l.s4 1934713408
        %v2940 = vunpack.c.0.s8 %v2939
        %v2941 = vperm.slane %v2933, %v2940
        %v2942 = vrot.slane %v2925, 4
        %v2943 = vsel %vm601, 0.0, %v2942
        %v2944 = vrot.slane %v2929, 4
        %v2945 = vsel %vm601, 0.0, %v2944
        %v2946 = vrot.slane %v2937, 4
        %v2947 = vsel %vm601, 0.0, %v2946
        %v2948 = vrot.slane %v2941, 4
        %v2949 = vsel %vm601, 0.0, %v2948
        %v2950 = vrot.slane %v2889, 4
        %v2951 = vsel %vm601, 0.0, %v2950
        %v2953 = vunpack.c.l.s4 1983009808
        %v2954 = vunpack.c.0.s8 %v2953
        %v2955 = vperm.slane %v2889, %v2954
        %v2957 = vunpack.c.l.s4 1983009808
        %v2958 = vunpack.c.0.s8 %v2957
        %v2959 = vperm.slane %v2951, %v2958
        %v2960 = vrot.slane %v2893, 4
        %v2961 = vsel %vm601, 0.0, %v2960
        %v2963 = vunpack.c.l.s4 1983009808
        %v2964 = vunpack.c.0.s8 %v2963
        %v2965 = vperm.slane %v2893, %v2964
        %v2967 = vunpack.c.l.s4 1983009808
        %v2968 = vunpack.c.0.s8 %v2967
        %v2969 = vperm.slane %v2961, %v2968
        %v2970 = vrot.slane %v2965, 4
        %v2971 = vsel %vm601, %v2970, %v2955
        %v2972 = vrot.slane %v2955, 4
        %v2973 = vsel %vm601, %v2965, %v2972
        %v2975 = vunpack.c.l.s4 1934713408
        %v2976 = vunpack.c.0.s8 %v2975
        %v2977 = vperm.slane %v2971, %v2976
        %v2979 = vunpack.c.l.s4 1934713408
        %v2980 = vunpack.c.0.s8 %v2979
        %v2981 = vperm.slane %v2973, %v2980
        %v2982 = vrot.slane %v2969, 4
        %v2983 = vsel %vm601, %v2982, %v2959
        %v2984 = vrot.slane %v2959, 4
        %v2985 = vsel %vm601, %v2969, %v2984
        %v2987 = vunpack.c.l.s4 1934713408
        %v2988 = vunpack.c.0.s8 %v2987
        %v2989 = vperm.slane %v2983, %v2988
        %v2991 = vunpack.c.l.s4 1934713408
        %v2992 = vunpack.c.0.s8 %v2991
        %v2993 = vperm.slane %v2985, %v2992
        %v2994 = vrot.slane %v2977, 4
        %v2995 = vsel %vm601, 0.0, %v2994
        %v2996 = vrot.slane %v2981, 4
        %v2997 = vsel %vm601, 0.0, %v2996
        %v2998 = vrot.slane %v2989, 4
        %v2999 = vsel %vm601, 0.0, %v2998
        %v3000 = vrot.slane %v2993, 4
        %v3001 = vsel %vm601, 0.0, %v3000
        %3003 = vrot.lane.b32.xlu0 %v2943, 16
        %v3004 = vpop.permute.xlu0 %3003
        %3007 = vrot.lane.b32.xlu0 %v2929, 32
        %v3008 = vpop.permute.xlu0 %3007
        %3011 = vrot.lane.b32.xlu0 %v2945, 48
        %v3012 = vpop.permute.xlu0 %3011
        %3015 = vrot.lane.b32.xlu0 %v2937, 64
        %v3016 = vpop.permute.xlu0 %3015
        %3019 = vrot.lane.b32.xlu0 %v2947, 80
        %v3020 = vpop.permute.xlu0 %3019
        %3023 = vrot.lane.b32.xlu0 %v2941, 96
        %v3024 = vpop.permute.xlu0 %3023
        %3027 = vrot.lane.b32.xlu0 %v2949, 112
        %v3028 = vpop.permute.xlu0 %3027
        %3031 = vrot.lane.b32.xlu0 %v2995, 16
        %v3032 = vpop.permute.xlu0 %3031
        %3035 = vrot.lane.b32.xlu0 %v2981, 32
        %v3036 = vpop.permute.xlu0 %3035
        %3039 = vrot.lane.b32.xlu0 %v2997, 48
        %v3040 = vpop.permute.xlu0 %3039
        %3043 = vrot.lane.b32.xlu0 %v2989, 64
        %v3044 = vpop.permute.xlu0 %3043
        %3047 = vrot.lane.b32.xlu0 %v2999, 80
        %v3048 = vpop.permute.xlu0 %3047
        %3051 = vrot.lane.b32.xlu0 %v2993, 96
        %v3052 = vpop.permute.xlu0 %3051
        %3055 = vrot.lane.b32.xlu0 %v3001, 112
        %v3056 = vpop.permute.xlu0 %3055
        %v3058 = vsel %vm769, %v2925, %v3004
        %v3059 = vsel %vm771, %v3058, %v3008
        %v3060 = vsel %vm773, %v3059, %v3012
        %v3061 = vsel %vm775, %v3060, %v3016
        %v3062 = vsel %vm777, %v3061, %v3020
        %v3063 = vsel %vm779, %v3062, %v3024
        %v3064 = vsel %vm781, %v3063, %v3028
        %v3065 = vsel %vm769, %v2977, %v3032
        %v3066 = vsel %vm771, %v3065, %v3036
        %v3067 = vsel %vm773, %v3066, %v3040
        %v3068 = vsel %vm775, %v3067, %v3044
        %v3069 = vsel %vm777, %v3068, %v3048
        %v3070 = vsel %vm779, %v3069, %v3052
        %v3071 = vsel %vm781, %v3070, %v3056
        %3072 = vrot.lane.b32.xlu0 %v2702, 126
        %v3073 = vpop.permute.xlu0 %3072
        %3074 = vrot.lane.b32.xlu0 %v2703, 126
        %v3075 = vpop.permute.xlu0 %3074
        %3076 = vrot.lane.b32.xlu0 %v2705, 126
        %v3077 = vpop.permute.xlu0 %3076
        %3078 = vrot.lane.b32.xlu0 %v2706, 126
        %v3079 = vpop.permute.xlu0 %3078
        %v3084 = vrot.slane %v3073, 4
        %v3085 = vsel %vm601, 0.0, %v3084
        %v3087 = vunpack.c.l.s4 1983009808
        %v3088 = vunpack.c.0.s8 %v3087
        %v3089 = vperm.slane %v3073, %v3088
        %v3091 = vunpack.c.l.s4 1983009808
        %v3092 = vunpack.c.0.s8 %v3091
        %v3093 = vperm.slane %v3085, %v3092
        %v3094 = vrot.slane %v3077, 4
        %v3095 = vsel %vm601, 0.0, %v3094
        %v3097 = vunpack.c.l.s4 1983009808
        %v3098 = vunpack.c.0.s8 %v3097
        %v3099 = vperm.slane %v3077, %v3098
        %v3101 = vunpack.c.l.s4 1983009808
        %v3102 = vunpack.c.0.s8 %v3101
        %v3103 = vperm.slane %v3095, %v3102
        %v3104 = vrot.slane %v3099, 4
        %v3105 = vsel %vm601, %v3104, %v3089
        %v3106 = vrot.slane %v3089, 4
        %v3107 = vsel %vm601, %v3099, %v3106
        %v3109 = vunpack.c.l.s4 1934713408
        %v3110 = vunpack.c.0.s8 %v3109
        %v3111 = vperm.slane %v3105, %v3110
        %v3113 = vunpack.c.l.s4 1934713408
        %v3114 = vunpack.c.0.s8 %v3113
        %v3115 = vperm.slane %v3107, %v3114
        %v3116 = vrot.slane %v3103, 4
        %v3117 = vsel %vm601, %v3116, %v3093
        %v3118 = vrot.slane %v3093, 4
        %v3119 = vsel %vm601, %v3103, %v3118
        %v3121 = vunpack.c.l.s4 1934713408
        %v3122 = vunpack.c.0.s8 %v3121
        %v3123 = vperm.slane %v3117, %v3122
        %v3125 = vunpack.c.l.s4 1934713408
        %v3126 = vunpack.c.0.s8 %v3125
        %v3127 = vperm.slane %v3119, %v3126
        %v3128 = vrot.slane %v3111, 4
        %v3129 = vsel %vm601, 0.0, %v3128
        %v3130 = vrot.slane %v3115, 4
        %v3131 = vsel %vm601, 0.0, %v3130
        %v3132 = vrot.slane %v3123, 4
        %v3133 = vsel %vm601, 0.0, %v3132
        %v3134 = vrot.slane %v3127, 4
        %v3135 = vsel %vm601, 0.0, %v3134
        %v3136 = vrot.slane %v3075, 4
        %v3137 = vsel %vm601, 0.0, %v3136
        %v3139 = vunpack.c.l.s4 1983009808
        %v3140 = vunpack.c.0.s8 %v3139
        %v3141 = vperm.slane %v3075, %v3140
        %v3143 = vunpack.c.l.s4 1983009808
        %v3144 = vunpack.c.0.s8 %v3143
        %v3145 = vperm.slane %v3137, %v3144
        %v3146 = vrot.slane %v3079, 4
        %v3147 = vsel %vm601, 0.0, %v3146
        %v3149 = vunpack.c.l.s4 1983009808
        %v3150 = vunpack.c.0.s8 %v3149
        %v3151 = vperm.slane %v3079, %v3150
        %v3153 = vunpack.c.l.s4 1983009808
        %v3154 = vunpack.c.0.s8 %v3153
        %v3155 = vperm.slane %v3147, %v3154
        %v3156 = vrot.slane %v3151, 4
        %v3157 = vsel %vm601, %v3156, %v3141
        %v3158 = vrot.slane %v3141, 4
        %v3159 = vsel %vm601, %v3151, %v3158
        %v3161 = vunpack.c.l.s4 1934713408
        %v3162 = vunpack.c.0.s8 %v3161
        %v3163 = vperm.slane %v3157, %v3162
        %v3165 = vunpack.c.l.s4 1934713408
        %v3166 = vunpack.c.0.s8 %v3165
        %v3167 = vperm.slane %v3159, %v3166
        %v3168 = vrot.slane %v3155, 4
        %v3169 = vsel %vm601, %v3168, %v3145
        %v3170 = vrot.slane %v3145, 4
        %v3171 = vsel %vm601, %v3155, %v3170
        %v3173 = vunpack.c.l.s4 1934713408
        %v3174 = vunpack.c.0.s8 %v3173
        %v3175 = vperm.slane %v3169, %v3174
        %v3177 = vunpack.c.l.s4 1934713408
        %v3178 = vunpack.c.0.s8 %v3177
        %v3179 = vperm.slane %v3171, %v3178
        %v3180 = vrot.slane %v3163, 4
        %v3181 = vsel %vm601, 0.0, %v3180
        %v3182 = vrot.slane %v3167, 4
        %v3183 = vsel %vm601, 0.0, %v3182
        %v3184 = vrot.slane %v3175, 4
        %v3185 = vsel %vm601, 0.0, %v3184
        %v3186 = vrot.slane %v3179, 4
        %v3187 = vsel %vm601, 0.0, %v3186
        %3189 = vrot.lane.b32.xlu0 %v3129, 16
        %v3190 = vpop.permute.xlu0 %3189
        %3193 = vrot.lane.b32.xlu0 %v3115, 32
        %v3194 = vpop.permute.xlu0 %3193
        %3197 = vrot.lane.b32.xlu0 %v3131, 48
        %v3198 = vpop.permute.xlu0 %3197
        %3201 = vrot.lane.b32.xlu0 %v3123, 64
        %v3202 = vpop.permute.xlu0 %3201
        %3205 = vrot.lane.b32.xlu0 %v3133, 80
        %v3206 = vpop.permute.xlu0 %3205
        %3209 = vrot.lane.b32.xlu0 %v3127, 96
        %v3210 = vpop.permute.xlu0 %3209
        %3213 = vrot.lane.b32.xlu0 %v3135, 112
        %v3214 = vpop.permute.xlu0 %3213
        %3217 = vrot.lane.b32.xlu0 %v3181, 16
        %v3218 = vpop.permute.xlu0 %3217
        %3221 = vrot.lane.b32.xlu0 %v3167, 32
        %v3222 = vpop.permute.xlu0 %3221
        %3225 = vrot.lane.b32.xlu0 %v3183, 48
        %v3226 = vpop.permute.xlu0 %3225
        %3229 = vrot.lane.b32.xlu0 %v3175, 64
        %v3230 = vpop.permute.xlu0 %3229
        %3233 = vrot.lane.b32.xlu0 %v3185, 80
        %v3234 = vpop.permute.xlu0 %3233
        %3237 = vrot.lane.b32.xlu0 %v3179, 96
        %v3238 = vpop.permute.xlu0 %3237
        %3241 = vrot.lane.b32.xlu0 %v3187, 112
        %v3242 = vpop.permute.xlu0 %3241
        %v3244 = vsel %vm769, %v3111, %v3190
        %v3245 = vsel %vm771, %v3244, %v3194
        %v3246 = vsel %vm773, %v3245, %v3198
        %v3247 = vsel %vm775, %v3246, %v3202
        %v3248 = vsel %vm777, %v3247, %v3206
        %v3249 = vsel %vm779, %v3248, %v3210
        %v3250 = vsel %vm781, %v3249, %v3214
        %v3251 = vsel %vm769, %v3163, %v3218
        %v3252 = vsel %vm771, %v3251, %v3222
        %v3253 = vsel %vm773, %v3252, %v3226
        %v3254 = vsel %vm775, %v3253, %v3230
        %v3255 = vsel %vm777, %v3254, %v3234
        %v3256 = vsel %vm779, %v3255, %v3238
        %v3257 = vsel %vm781, %v3256, %v3242
        %v3260 = vrot.slane %v2702, 1
        %v3261 = vrot.slane %v2703, 1
        %v3262 = vsel %vm1214, %v3260, %v3261
        %v3263 = vrot.slane %v2704, 1
        %v3264 = vsel %vm1214, %v3261, %v3263
        %v3265 = vrot.slane %v2705, 1
        %v3266 = vrot.slane %v2706, 1
        %v3267 = vsel %vm1214, %v3265, %v3266
        %v3268 = vrot.slane %v2707, 1
        %v3269 = vsel %vm1214, %v3266, %v3268
        %v3274 = vrot.slane %v3262, 4
        %v3275 = vsel %vm601, 0.0, %v3274
        %v3277 = vunpack.c.l.s4 1983009808
        %v3278 = vunpack.c.0.s8 %v3277
        %v3279 = vperm.slane %v3262, %v3278
        %v3281 = vunpack.c.l.s4 1983009808
        %v3282 = vunpack.c.0.s8 %v3281
        %v3283 = vperm.slane %v3275, %v3282
        %v3284 = vrot.slane %v3267, 4
        %v3285 = vsel %vm601, 0.0, %v3284
        %v3287 = vunpack.c.l.s4 1983009808
        %v3288 = vunpack.c.0.s8 %v3287
        %v3289 = vperm.slane %v3267, %v3288
        %v3291 = vunpack.c.l.s4 1983009808
        %v3292 = vunpack.c.0.s8 %v3291
        %v3293 = vperm.slane %v3285, %v3292
        %v3294 = vrot.slane %v3289, 4
        %v3295 = vsel %vm601, %v3294, %v3279
        %v3296 = vrot.slane %v3279, 4
        %v3297 = vsel %vm601, %v3289, %v3296
        %v3299 = vunpack.c.l.s4 1934713408
        %v3300 = vunpack.c.0.s8 %v3299
        %v3301 = vperm.slane %v3295, %v3300
        %v3303 = vunpack.c.l.s4 1934713408
        %v3304 = vunpack.c.0.s8 %v3303
        %v3305 = vperm.slane %v3297, %v3304
        %v3306 = vrot.slane %v3293, 4
        %v3307 = vsel %vm601, %v3306, %v3283
        %v3308 = vrot.slane %v3283, 4
        %v3309 = vsel %vm601, %v3293, %v3308
        %v3311 = vunpack.c.l.s4 1934713408
        %v3312 = vunpack.c.0.s8 %v3311
        %v3313 = vperm.slane %v3307, %v3312
        %v3315 = vunpack.c.l.s4 1934713408
        %v3316 = vunpack.c.0.s8 %v3315
        %v3317 = vperm.slane %v3309, %v3316
        %v3318 = vrot.slane %v3301, 4
        %v3319 = vsel %vm601, 0.0, %v3318
        %v3320 = vrot.slane %v3305, 4
        %v3321 = vsel %vm601, 0.0, %v3320
        %v3322 = vrot.slane %v3313, 4
        %v3323 = vsel %vm601, 0.0, %v3322
        %v3324 = vrot.slane %v3317, 4
        %v3325 = vsel %vm601, 0.0, %v3324
        %v3326 = vrot.slane %v3264, 4
        %v3327 = vsel %vm601, 0.0, %v3326
        %v3329 = vunpack.c.l.s4 1983009808
        %v3330 = vunpack.c.0.s8 %v3329
        %v3331 = vperm.slane %v3264, %v3330
        %v3333 = vunpack.c.l.s4 1983009808
        %v3334 = vunpack.c.0.s8 %v3333
        %v3335 = vperm.slane %v3327, %v3334
        %v3336 = vrot.slane %v3269, 4
        %v3337 = vsel %vm601, 0.0, %v3336
        %v3339 = vunpack.c.l.s4 1983009808
        %v3340 = vunpack.c.0.s8 %v3339
        %v3341 = vperm.slane %v3269, %v3340
        %v3343 = vunpack.c.l.s4 1983009808
        %v3344 = vunpack.c.0.s8 %v3343
        %v3345 = vperm.slane %v3337, %v3344
        %v3346 = vrot.slane %v3341, 4
        %v3347 = vsel %vm601, %v3346, %v3331
        %v3348 = vrot.slane %v3331, 4
        %v3349 = vsel %vm601, %v3341, %v3348
        %v3351 = vunpack.c.l.s4 1934713408
        %v3352 = vunpack.c.0.s8 %v3351
        %v3353 = vperm.slane %v3347, %v3352
        %v3355 = vunpack.c.l.s4 1934713408
        %v3356 = vunpack.c.0.s8 %v3355
        %v3357 = vperm.slane %v3349, %v3356
        %v3358 = vrot.slane %v3345, 4
        %v3359 = vsel %vm601, %v3358, %v3335
        %v3360 = vrot.slane %v3335, 4
        %v3361 = vsel %vm601, %v3345, %v3360
        %v3363 = vunpack.c.l.s4 1934713408
        %v3364 = vunpack.c.0.s8 %v3363
        %v3365 = vperm.slane %v3359, %v3364
        %v3367 = vunpack.c.l.s4 1934713408
        %v3368 = vunpack.c.0.s8 %v3367
        %v3369 = vperm.slane %v3361, %v3368
        %v3370 = vrot.slane %v3353, 4
        %v3371 = vsel %vm601, 0.0, %v3370
        %v3372 = vrot.slane %v3357, 4
        %v3373 = vsel %vm601, 0.0, %v3372
        %v3374 = vrot.slane %v3365, 4
        %v3375 = vsel %vm601, 0.0, %v3374
        %v3376 = vrot.slane %v3369, 4
        %v3377 = vsel %vm601, 0.0, %v3376
        %3379 = vrot.lane.b32.xlu0 %v3319, 16
        %v3380 = vpop.permute.xlu0 %3379
        %3383 = vrot.lane.b32.xlu0 %v3305, 32
        %v3384 = vpop.permute.xlu0 %3383
        %3387 = vrot.lane.b32.xlu0 %v3321, 48
        %v3388 = vpop.permute.xlu0 %3387
        %3391 = vrot.lane.b32.xlu0 %v3313, 64
        %v3392 = vpop.permute.xlu0 %3391
        %3395 = vrot.lane.b32.xlu0 %v3323, 80
        %v3396 = vpop.permute.xlu0 %3395
        %3399 = vrot.lane.b32.xlu0 %v3317, 96
        %v3400 = vpop.permute.xlu0 %3399
        %3403 = vrot.lane.b32.xlu0 %v3325, 112
        %v3404 = vpop.permute.xlu0 %3403
        %3407 = vrot.lane.b32.xlu0 %v3371, 16
        %v3408 = vpop.permute.xlu0 %3407
        %3411 = vrot.lane.b32.xlu0 %v3357, 32
        %v3412 = vpop.permute.xlu0 %3411
        %3415 = vrot.lane.b32.xlu0 %v3373, 48
        %v3416 = vpop.permute.xlu0 %3415
        %3419 = vrot.lane.b32.xlu0 %v3365, 64
        %v3420 = vpop.permute.xlu0 %3419
        %3423 = vrot.lane.b32.xlu0 %v3375, 80
        %v3424 = vpop.permute.xlu0 %3423
        %3427 = vrot.lane.b32.xlu0 %v3369, 96
        %v3428 = vpop.permute.xlu0 %3427
        %3431 = vrot.lane.b32.xlu0 %v3377, 112
        %v3432 = vpop.permute.xlu0 %3431
        %v3434 = vsel %vm769, %v3301, %v3380
        %v3435 = vsel %vm771, %v3434, %v3384
        %v3436 = vsel %vm773, %v3435, %v3388
        %v3437 = vsel %vm775, %v3436, %v3392
        %v3438 = vsel %vm777, %v3437, %v3396
        %v3439 = vsel %vm779, %v3438, %v3400
        %v3440 = vsel %vm781, %v3439, %v3404
        %v3441 = vsel %vm769, %v3353, %v3408
        %v3442 = vsel %vm771, %v3441, %v3412
        %v3443 = vsel %vm773, %v3442, %v3416
        %v3444 = vsel %vm775, %v3443, %v3420
        %v3445 = vsel %vm777, %v3444, %v3424
        %v3446 = vsel %vm779, %v3445, %v3428
        %v3447 = vsel %vm781, %v3446, %v3432
        %3448 = vrot.lane.b32.xlu0 %v3262, 127
        %v3449 = vpop.permute.xlu0 %3448
        %3450 = vrot.lane.b32.xlu0 %v3264, 127
        %v3451 = vpop.permute.xlu0 %3450
        %3452 = vrot.lane.b32.xlu0 %v3267, 127
        %v3453 = vpop.permute.xlu0 %3452
        %3454 = vrot.lane.b32.xlu0 %v3269, 127
        %v3455 = vpop.permute.xlu0 %3454
        %v3460 = vrot.slane %v3449, 4
        %v3461 = vsel %vm601, 0.0, %v3460
        %v3463 = vunpack.c.l.s4 1983009808
        %v3464 = vunpack.c.0.s8 %v3463
        %v3465 = vperm.slane %v3449, %v3464
        %v3467 = vunpack.c.l.s4 1983009808
        %v3468 = vunpack.c.0.s8 %v3467
        %v3469 = vperm.slane %v3461, %v3468
        %v3470 = vrot.slane %v3453, 4
        %v3471 = vsel %vm601, 0.0, %v3470
        %v3473 = vunpack.c.l.s4 1983009808
        %v3474 = vunpack.c.0.s8 %v3473
        %v3475 = vperm.slane %v3453, %v3474
        %v3477 = vunpack.c.l.s4 1983009808
        %v3478 = vunpack.c.0.s8 %v3477
        %v3479 = vperm.slane %v3471, %v3478
        %v3480 = vrot.slane %v3475, 4
        %v3481 = vsel %vm601, %v3480, %v3465
        %v3482 = vrot.slane %v3465, 4
        %v3483 = vsel %vm601, %v3475, %v3482
        %v3485 = vunpack.c.l.s4 1934713408
        %v3486 = vunpack.c.0.s8 %v3485
        %v3487 = vperm.slane %v3481, %v3486
        %v3489 = vunpack.c.l.s4 1934713408
        %v3490 = vunpack.c.0.s8 %v3489
        %v3491 = vperm.slane %v3483, %v3490
        %v3492 = vrot.slane %v3479, 4
        %v3493 = vsel %vm601, %v3492, %v3469
        %v3494 = vrot.slane %v3469, 4
        %v3495 = vsel %vm601, %v3479, %v3494
        %v3497 = vunpack.c.l.s4 1934713408
        %v3498 = vunpack.c.0.s8 %v3497
        %v3499 = vperm.slane %v3493, %v3498
        %v3501 = vunpack.c.l.s4 1934713408
        %v3502 = vunpack.c.0.s8 %v3501
        %v3503 = vperm.slane %v3495, %v3502
        %v3504 = vrot.slane %v3487, 4
        %v3505 = vsel %vm601, 0.0, %v3504
        %v3506 = vrot.slane %v3491, 4
        %v3507 = vsel %vm601, 0.0, %v3506
        %v3508 = vrot.slane %v3499, 4
        %v3509 = vsel %vm601, 0.0, %v3508
        %v3510 = vrot.slane %v3503, 4
        %v3511 = vsel %vm601, 0.0, %v3510
        %v3512 = vrot.slane %v3451, 4
        %v3513 = vsel %vm601, 0.0, %v3512
        %v3515 = vunpack.c.l.s4 1983009808
        %v3516 = vunpack.c.0.s8 %v3515
        %v3517 = vperm.slane %v3451, %v3516
        %v3519 = vunpack.c.l.s4 1983009808
        %v3520 = vunpack.c.0.s8 %v3519
        %v3521 = vperm.slane %v3513, %v3520
        %v3522 = vrot.slane %v3455, 4
        %v3523 = vsel %vm601, 0.0, %v3522
        %v3525 = vunpack.c.l.s4 1983009808
        %v3526 = vunpack.c.0.s8 %v3525
        %v3527 = vperm.slane %v3455, %v3526
        %v3529 = vunpack.c.l.s4 1983009808
        %v3530 = vunpack.c.0.s8 %v3529
        %v3531 = vperm.slane %v3523, %v3530
        %v3532 = vrot.slane %v3527, 4
        %v3533 = vsel %vm601, %v3532, %v3517
        %v3534 = vrot.slane %v3517, 4
        %v3535 = vsel %vm601, %v3527, %v3534
        %v3537 = vunpack.c.l.s4 1934713408
        %v3538 = vunpack.c.0.s8 %v3537
        %v3539 = vperm.slane %v3533, %v3538
        %v3541 = vunpack.c.l.s4 1934713408
        %v3542 = vunpack.c.0.s8 %v3541
        %v3543 = vperm.slane %v3535, %v3542
        %v3544 = vrot.slane %v3531, 4
        %v3545 = vsel %vm601, %v3544, %v3521
        %v3546 = vrot.slane %v3521, 4
        %v3547 = vsel %vm601, %v3531, %v3546
        %v3549 = vunpack.c.l.s4 1934713408
        %v3550 = vunpack.c.0.s8 %v3549
        %v3551 = vperm.slane %v3545, %v3550
        %v3553 = vunpack.c.l.s4 1934713408
        %v3554 = vunpack.c.0.s8 %v3553
        %v3555 = vperm.slane %v3547, %v3554
        %v3556 = vrot.slane %v3539, 4
        %v3557 = vsel %vm601, 0.0, %v3556
        %v3558 = vrot.slane %v3543, 4
        %v3559 = vsel %vm601, 0.0, %v3558
        %v3560 = vrot.slane %v3551, 4
        %v3561 = vsel %vm601, 0.0, %v3560
        %v3562 = vrot.slane %v3555, 4
        %v3563 = vsel %vm601, 0.0, %v3562
        %3565 = vrot.lane.b32.xlu0 %v3505, 16
        %v3566 = vpop.permute.xlu0 %3565
        %3569 = vrot.lane.b32.xlu0 %v3491, 32
        %v3570 = vpop.permute.xlu0 %3569
        %3573 = vrot.lane.b32.xlu0 %v3507, 48
        %v3574 = vpop.permute.xlu0 %3573
        %3577 = vrot.lane.b32.xlu0 %v3499, 64
        %v3578 = vpop.permute.xlu0 %3577
        %3581 = vrot.lane.b32.xlu0 %v3509, 80
        %v3582 = vpop.permute.xlu0 %3581
        %3585 = vrot.lane.b32.xlu0 %v3503, 96
        %v3586 = vpop.permute.xlu0 %3585
        %3589 = vrot.lane.b32.xlu0 %v3511, 112
        %v3590 = vpop.permute.xlu0 %3589
        %3593 = vrot.lane.b32.xlu0 %v3557, 16
        %v3594 = vpop.permute.xlu0 %3593
        %3597 = vrot.lane.b32.xlu0 %v3543, 32
        %v3598 = vpop.permute.xlu0 %3597
        %3601 = vrot.lane.b32.xlu0 %v3559, 48
        %v3602 = vpop.permute.xlu0 %3601
        %3605 = vrot.lane.b32.xlu0 %v3551, 64
        %v3606 = vpop.permute.xlu0 %3605
        %3609 = vrot.lane.b32.xlu0 %v3561, 80
        %v3610 = vpop.permute.xlu0 %3609
        %3613 = vrot.lane.b32.xlu0 %v3555, 96
        %v3614 = vpop.permute.xlu0 %3613
        %3617 = vrot.lane.b32.xlu0 %v3563, 112
        %v3618 = vpop.permute.xlu0 %3617
        %v3620 = vsel %vm769, %v3487, %v3566
        %v3621 = vsel %vm771, %v3620, %v3570
        %v3622 = vsel %vm773, %v3621, %v3574
        %v3623 = vsel %vm775, %v3622, %v3578
        %v3624 = vsel %vm777, %v3623, %v3582
        %v3625 = vsel %vm779, %v3624, %v3586
        %v3626 = vsel %vm781, %v3625, %v3590
        %v3627 = vsel %vm769, %v3539, %v3594
        %v3628 = vsel %vm771, %v3627, %v3598
        %v3629 = vsel %vm773, %v3628, %v3602
        %v3630 = vsel %vm775, %v3629, %v3606
        %v3631 = vsel %vm777, %v3630, %v3610
        %v3632 = vsel %vm779, %v3631, %v3614
        %v3633 = vsel %vm781, %v3632, %v3618
        %3634 = vrot.lane.b32.xlu0 %v3262, 126
        %v3635 = vpop.permute.xlu0 %3634
        %3636 = vrot.lane.b32.xlu0 %v3264, 126
        %v3637 = vpop.permute.xlu0 %3636
        %3638 = vrot.lane.b32.xlu0 %v3267, 126
        %v3639 = vpop.permute.xlu0 %3638
        %3640 = vrot.lane.b32.xlu0 %v3269, 126
        %v3641 = vpop.permute.xlu0 %3640
        %v3646 = vrot.slane %v3635, 4
        %v3647 = vsel %vm601, 0.0, %v3646
        %v3649 = vunpack.c.l.s4 1983009808
        %v3650 = vunpack.c.0.s8 %v3649
        %v3651 = vperm.slane %v3635, %v3650
        %v3653 = vunpack.c.l.s4 1983009808
        %v3654 = vunpack.c.0.s8 %v3653
        %v3655 = vperm.slane %v3647, %v3654
        %v3656 = vrot.slane %v3639, 4
        %v3657 = vsel %vm601, 0.0, %v3656
        %v3659 = vunpack.c.l.s4 1983009808
        %v3660 = vunpack.c.0.s8 %v3659
        %v3661 = vperm.slane %v3639, %v3660
        %v3663 = vunpack.c.l.s4 1983009808
        %v3664 = vunpack.c.0.s8 %v3663
        %v3665 = vperm.slane %v3657, %v3664
        %v3666 = vrot.slane %v3661, 4
        %v3667 = vsel %vm601, %v3666, %v3651
        %v3668 = vrot.slane %v3651, 4
        %v3669 = vsel %vm601, %v3661, %v3668
        %v3671 = vunpack.c.l.s4 1934713408
        %v3672 = vunpack.c.0.s8 %v3671
        %v3673 = vperm.slane %v3667, %v3672
        %v3675 = vunpack.c.l.s4 1934713408
        %v3676 = vunpack.c.0.s8 %v3675
        %v3677 = vperm.slane %v3669, %v3676
        %v3678 = vrot.slane %v3665, 4
        %v3679 = vsel %vm601, %v3678, %v3655
        %v3680 = vrot.slane %v3655, 4
        %v3681 = vsel %vm601, %v3665, %v3680
        %v3683 = vunpack.c.l.s4 1934713408
        %v3684 = vunpack.c.0.s8 %v3683
        %v3685 = vperm.slane %v3679, %v3684
        %v3687 = vunpack.c.l.s4 1934713408
        %v3688 = vunpack.c.0.s8 %v3687
        %v3689 = vperm.slane %v3681, %v3688
        %v3690 = vrot.slane %v3673, 4
        %v3691 = vsel %vm601, 0.0, %v3690
        %v3692 = vrot.slane %v3677, 4
        %v3693 = vsel %vm601, 0.0, %v3692
        %v3694 = vrot.slane %v3685, 4
        %v3695 = vsel %vm601, 0.0, %v3694
        %v3696 = vrot.slane %v3689, 4
        %v3697 = vsel %vm601, 0.0, %v3696
        %v3698 = vrot.slane %v3637, 4
        %v3699 = vsel %vm601, 0.0, %v3698
        %v3701 = vunpack.c.l.s4 1983009808
        %v3702 = vunpack.c.0.s8 %v3701
        %v3703 = vperm.slane %v3637, %v3702
        %v3705 = vunpack.c.l.s4 1983009808
        %v3706 = vunpack.c.0.s8 %v3705
        %v3707 = vperm.slane %v3699, %v3706
        %v3708 = vrot.slane %v3641, 4
        %v3709 = vsel %vm601, 0.0, %v3708
        %v3711 = vunpack.c.l.s4 1983009808
        %v3712 = vunpack.c.0.s8 %v3711
        %v3713 = vperm.slane %v3641, %v3712
        %v3715 = vunpack.c.l.s4 1983009808
        %v3716 = vunpack.c.0.s8 %v3715
        %v3717 = vperm.slane %v3709, %v3716
        %v3718 = vrot.slane %v3713, 4
        %v3719 = vsel %vm601, %v3718, %v3703
        %v3720 = vrot.slane %v3703, 4
        %v3721 = vsel %vm601, %v3713, %v3720
        %v3723 = vunpack.c.l.s4 1934713408
        %v3724 = vunpack.c.0.s8 %v3723
        %v3725 = vperm.slane %v3719, %v3724
        %v3727 = vunpack.c.l.s4 1934713408
        %v3728 = vunpack.c.0.s8 %v3727
        %v3729 = vperm.slane %v3721, %v3728
        %v3730 = vrot.slane %v3717, 4
        %v3731 = vsel %vm601, %v3730, %v3707
        %v3732 = vrot.slane %v3707, 4
        %v3733 = vsel %vm601, %v3717, %v3732
        %v3735 = vunpack.c.l.s4 1934713408
        %v3736 = vunpack.c.0.s8 %v3735
        %v3737 = vperm.slane %v3731, %v3736
        %v3739 = vunpack.c.l.s4 1934713408
        %v3740 = vunpack.c.0.s8 %v3739
        %v3741 = vperm.slane %v3733, %v3740
        %v3742 = vrot.slane %v3725, 4
        %v3743 = vsel %vm601, 0.0, %v3742
        %v3744 = vrot.slane %v3729, 4
        %v3745 = vsel %vm601, 0.0, %v3744
        %v3746 = vrot.slane %v3737, 4
        %v3747 = vsel %vm601, 0.0, %v3746
        %v3748 = vrot.slane %v3741, 4
        %v3749 = vsel %vm601, 0.0, %v3748
        %3751 = vrot.lane.b32.xlu0 %v3691, 16
        %v3752 = vpop.permute.xlu0 %3751
        %3755 = vrot.lane.b32.xlu0 %v3677, 32
        %v3756 = vpop.permute.xlu0 %3755
        %3759 = vrot.lane.b32.xlu0 %v3693, 48
        %v3760 = vpop.permute.xlu0 %3759
        %3763 = vrot.lane.b32.xlu0 %v3685, 64
        %v3764 = vpop.permute.xlu0 %3763
        %3767 = vrot.lane.b32.xlu0 %v3695, 80
        %v3768 = vpop.permute.xlu0 %3767
        %3771 = vrot.lane.b32.xlu0 %v3689, 96
        %v3772 = vpop.permute.xlu0 %3771
        %3775 = vrot.lane.b32.xlu0 %v3697, 112
        %v3776 = vpop.permute.xlu0 %3775
        %3779 = vrot.lane.b32.xlu0 %v3743, 16
        %v3780 = vpop.permute.xlu0 %3779
        %3783 = vrot.lane.b32.xlu0 %v3729, 32
        %v3784 = vpop.permute.xlu0 %3783
        %3787 = vrot.lane.b32.xlu0 %v3745, 48
        %v3788 = vpop.permute.xlu0 %3787
        %3791 = vrot.lane.b32.xlu0 %v3737, 64
        %v3792 = vpop.permute.xlu0 %3791
        %3795 = vrot.lane.b32.xlu0 %v3747, 80
        %v3796 = vpop.permute.xlu0 %3795
        %3799 = vrot.lane.b32.xlu0 %v3741, 96
        %v3800 = vpop.permute.xlu0 %3799
        %3803 = vrot.lane.b32.xlu0 %v3749, 112
        %v3804 = vpop.permute.xlu0 %3803
        %v3806 = vsel %vm769, %v3673, %v3752
        %v3807 = vsel %vm771, %v3806, %v3756
        %v3808 = vsel %vm773, %v3807, %v3760
        %v3809 = vsel %vm775, %v3808, %v3764
        %v3810 = vsel %vm777, %v3809, %v3768
        %v3811 = vsel %vm779, %v3810, %v3772
        %v3812 = vsel %vm781, %v3811, %v3776
        %v3813 = vsel %vm769, %v3725, %v3780
        %v3814 = vsel %vm771, %v3813, %v3784
        %v3815 = vsel %vm773, %v3814, %v3788
        %v3816 = vsel %vm775, %v3815, %v3792
        %v3817 = vsel %vm777, %v3816, %v3796
        %v3818 = vsel %vm779, %v3817, %v3800
        %v3819 = vsel %vm781, %v3818, %v3804
        %v3820 = vrot.slane %v2702, 2
        %v3821 = vrot.slane %v2703, 2
        %v3822 = vsel %vm1837, %v3820, %v3821
        %v3823 = vrot.slane %v2704, 2
        %v3824 = vsel %vm1837, %v3821, %v3823
        %v3825 = vrot.slane %v2705, 2
        %v3826 = vrot.slane %v2706, 2
        %v3827 = vsel %vm1837, %v3825, %v3826
        %v3828 = vrot.slane %v2707, 2
        %v3829 = vsel %vm1837, %v3826, %v3828
        %v3834 = vrot.slane %v3822, 4
        %v3835 = vsel %vm601, 0.0, %v3834
        %v3837 = vunpack.c.l.s4 1983009808
        %v3838 = vunpack.c.0.s8 %v3837
        %v3839 = vperm.slane %v3822, %v3838
        %v3841 = vunpack.c.l.s4 1983009808
        %v3842 = vunpack.c.0.s8 %v3841
        %v3843 = vperm.slane %v3835, %v3842
        %v3844 = vrot.slane %v3827, 4
        %v3845 = vsel %vm601, 0.0, %v3844
        %v3847 = vunpack.c.l.s4 1983009808
        %v3848 = vunpack.c.0.s8 %v3847
        %v3849 = vperm.slane %v3827, %v3848
        %v3851 = vunpack.c.l.s4 1983009808
        %v3852 = vunpack.c.0.s8 %v3851
        %v3853 = vperm.slane %v3845, %v3852
        %v3854 = vrot.slane %v3849, 4
        %v3855 = vsel %vm601, %v3854, %v3839
        %v3856 = vrot.slane %v3839, 4
        %v3857 = vsel %vm601, %v3849, %v3856
        %v3859 = vunpack.c.l.s4 1934713408
        %v3860 = vunpack.c.0.s8 %v3859
        %v3861 = vperm.slane %v3855, %v3860
        %v3863 = vunpack.c.l.s4 1934713408
        %v3864 = vunpack.c.0.s8 %v3863
        %v3865 = vperm.slane %v3857, %v3864
        %v3866 = vrot.slane %v3853, 4
        %v3867 = vsel %vm601, %v3866, %v3843
        %v3868 = vrot.slane %v3843, 4
        %v3869 = vsel %vm601, %v3853, %v3868
        %v3871 = vunpack.c.l.s4 1934713408
        %v3872 = vunpack.c.0.s8 %v3871
        %v3873 = vperm.slane %v3867, %v3872
        %v3875 = vunpack.c.l.s4 1934713408
        %v3876 = vunpack.c.0.s8 %v3875
        %v3877 = vperm.slane %v3869, %v3876
        %v3878 = vrot.slane %v3861, 4
        %v3879 = vsel %vm601, 0.0, %v3878
        %v3880 = vrot.slane %v3865, 4
        %v3881 = vsel %vm601, 0.0, %v3880
        %v3882 = vrot.slane %v3873, 4
        %v3883 = vsel %vm601, 0.0, %v3882
        %v3884 = vrot.slane %v3877, 4
        %v3885 = vsel %vm601, 0.0, %v3884
        %v3886 = vrot.slane %v3824, 4
        %v3887 = vsel %vm601, 0.0, %v3886
        %v3889 = vunpack.c.l.s4 1983009808
        %v3890 = vunpack.c.0.s8 %v3889
        %v3891 = vperm.slane %v3824, %v3890
        %v3893 = vunpack.c.l.s4 1983009808
        %v3894 = vunpack.c.0.s8 %v3893
        %v3895 = vperm.slane %v3887, %v3894
        %v3896 = vrot.slane %v3829, 4
        %v3897 = vsel %vm601, 0.0, %v3896
        %v3899 = vunpack.c.l.s4 1983009808
        %v3900 = vunpack.c.0.s8 %v3899
        %v3901 = vperm.slane %v3829, %v3900
        %v3903 = vunpack.c.l.s4 1983009808
        %v3904 = vunpack.c.0.s8 %v3903
        %v3905 = vperm.slane %v3897, %v3904
        %v3906 = vrot.slane %v3901, 4
        %v3907 = vsel %vm601, %v3906, %v3891
        %v3908 = vrot.slane %v3891, 4
        %v3909 = vsel %vm601, %v3901, %v3908
        %v3911 = vunpack.c.l.s4 1934713408
        %v3912 = vunpack.c.0.s8 %v3911
        %v3913 = vperm.slane %v3907, %v3912
        %v3915 = vunpack.c.l.s4 1934713408
        %v3916 = vunpack.c.0.s8 %v3915
        %v3917 = vperm.slane %v3909, %v3916
        %v3918 = vrot.slane %v3905, 4
        %v3919 = vsel %vm601, %v3918, %v3895
        %v3920 = vrot.slane %v3895, 4
        %v3921 = vsel %vm601, %v3905, %v3920
        %v3923 = vunpack.c.l.s4 1934713408
        %v3924 = vunpack.c.0.s8 %v3923
        %v3925 = vperm.slane %v3919, %v3924
        %v3927 = vunpack.c.l.s4 1934713408
        %v3928 = vunpack.c.0.s8 %v3927
        %v3929 = vperm.slane %v3921, %v3928
        %v3930 = vrot.slane %v3913, 4
        %v3931 = vsel %vm601, 0.0, %v3930
        %v3932 = vrot.slane %v3917, 4
        %v3933 = vsel %vm601, 0.0, %v3932
        %v3934 = vrot.slane %v3925, 4
        %v3935 = vsel %vm601, 0.0, %v3934
        %v3936 = vrot.slane %v3929, 4
        %v3937 = vsel %vm601, 0.0, %v3936
        %3939 = vrot.lane.b32.xlu0 %v3879, 16
        %v3940 = vpop.permute.xlu0 %3939
        %3943 = vrot.lane.b32.xlu0 %v3865, 32
        %v3944 = vpop.permute.xlu0 %3943
        %3947 = vrot.lane.b32.xlu0 %v3881, 48
        %v3948 = vpop.permute.xlu0 %3947
        %3951 = vrot.lane.b32.xlu0 %v3873, 64
        %v3952 = vpop.permute.xlu0 %3951
        %3955 = vrot.lane.b32.xlu0 %v3883, 80
        %v3956 = vpop.permute.xlu0 %3955
        %3959 = vrot.lane.b32.xlu0 %v3877, 96
        %v3960 = vpop.permute.xlu0 %3959
        %3963 = vrot.lane.b32.xlu0 %v3885, 112
        %v3964 = vpop.permute.xlu0 %3963
        %3967 = vrot.lane.b32.xlu0 %v3931, 16
        %v3968 = vpop.permute.xlu0 %3967
        %3971 = vrot.lane.b32.xlu0 %v3917, 32
        %v3972 = vpop.permute.xlu0 %3971
        %3975 = vrot.lane.b32.xlu0 %v3933, 48
        %v3976 = vpop.permute.xlu0 %3975
        %3979 = vrot.lane.b32.xlu0 %v3925, 64
        %v3980 = vpop.permute.xlu0 %3979
        %3983 = vrot.lane.b32.xlu0 %v3935, 80
        %v3984 = vpop.permute.xlu0 %3983
        %3987 = vrot.lane.b32.xlu0 %v3929, 96
        %v3988 = vpop.permute.xlu0 %3987
        %3991 = vrot.lane.b32.xlu0 %v3937, 112
        %v3992 = vpop.permute.xlu0 %3991
        %v3994 = vsel %vm769, %v3861, %v3940
        %v3995 = vsel %vm771, %v3994, %v3944
        %v3996 = vsel %vm773, %v3995, %v3948
        %v3997 = vsel %vm775, %v3996, %v3952
        %v3998 = vsel %vm777, %v3997, %v3956
        %v3999 = vsel %vm779, %v3998, %v3960
        %v4000 = vsel %vm781, %v3999, %v3964
        %v4001 = vsel %vm769, %v3913, %v3968
        %v4002 = vsel %vm771, %v4001, %v3972
        %v4003 = vsel %vm773, %v4002, %v3976
        %v4004 = vsel %vm775, %v4003, %v3980
        %v4005 = vsel %vm777, %v4004, %v3984
        %v4006 = vsel %vm779, %v4005, %v3988
        %v4007 = vsel %vm781, %v4006, %v3992
        %4008 = vrot.lane.b32.xlu0 %v3822, 127
        %v4009 = vpop.permute.xlu0 %4008
        %4010 = vrot.lane.b32.xlu0 %v3824, 127
        %v4011 = vpop.permute.xlu0 %4010
        %4012 = vrot.lane.b32.xlu0 %v3827, 127
        %v4013 = vpop.permute.xlu0 %4012
        %4014 = vrot.lane.b32.xlu0 %v3829, 127
        %v4015 = vpop.permute.xlu0 %4014
        %v4020 = vrot.slane %v4009, 4
        %v4021 = vsel %vm601, 0.0, %v4020
        %v4023 = vunpack.c.l.s4 1983009808
        %v4024 = vunpack.c.0.s8 %v4023
        %v4025 = vperm.slane %v4009, %v4024
        %v4027 = vunpack.c.l.s4 1983009808
        %v4028 = vunpack.c.0.s8 %v4027
        %v4029 = vperm.slane %v4021, %v4028
        %v4030 = vrot.slane %v4013, 4
        %v4031 = vsel %vm601, 0.0, %v4030
        %v4033 = vunpack.c.l.s4 1983009808
        %v4034 = vunpack.c.0.s8 %v4033
        %v4035 = vperm.slane %v4013, %v4034
        %v4037 = vunpack.c.l.s4 1983009808
        %v4038 = vunpack.c.0.s8 %v4037
        %v4039 = vperm.slane %v4031, %v4038
        %v4040 = vrot.slane %v4035, 4
        %v4041 = vsel %vm601, %v4040, %v4025
        %v4042 = vrot.slane %v4025, 4
        %v4043 = vsel %vm601, %v4035, %v4042
        %v4045 = vunpack.c.l.s4 1934713408
        %v4046 = vunpack.c.0.s8 %v4045
        %v4047 = vperm.slane %v4041, %v4046
        %v4049 = vunpack.c.l.s4 1934713408
        %v4050 = vunpack.c.0.s8 %v4049
        %v4051 = vperm.slane %v4043, %v4050
        %v4052 = vrot.slane %v4039, 4
        %v4053 = vsel %vm601, %v4052, %v4029
        %v4054 = vrot.slane %v4029, 4
        %v4055 = vsel %vm601, %v4039, %v4054
        %v4057 = vunpack.c.l.s4 1934713408
        %v4058 = vunpack.c.0.s8 %v4057
        %v4059 = vperm.slane %v4053, %v4058
        %v4061 = vunpack.c.l.s4 1934713408
        %v4062 = vunpack.c.0.s8 %v4061
        %v4063 = vperm.slane %v4055, %v4062
        %v4064 = vrot.slane %v4047, 4
        %v4065 = vsel %vm601, 0.0, %v4064
        %v4066 = vrot.slane %v4051, 4
        %v4067 = vsel %vm601, 0.0, %v4066
        %v4068 = vrot.slane %v4059, 4
        %v4069 = vsel %vm601, 0.0, %v4068
        %v4070 = vrot.slane %v4063, 4
        %v4071 = vsel %vm601, 0.0, %v4070
        %v4072 = vrot.slane %v4011, 4
        %v4073 = vsel %vm601, 0.0, %v4072
        %v4075 = vunpack.c.l.s4 1983009808
        %v4076 = vunpack.c.0.s8 %v4075
        %v4077 = vperm.slane %v4011, %v4076
        %v4079 = vunpack.c.l.s4 1983009808
        %v4080 = vunpack.c.0.s8 %v4079
        %v4081 = vperm.slane %v4073, %v4080
        %v4082 = vrot.slane %v4015, 4
        %v4083 = vsel %vm601, 0.0, %v4082
        %v4085 = vunpack.c.l.s4 1983009808
        %v4086 = vunpack.c.0.s8 %v4085
        %v4087 = vperm.slane %v4015, %v4086
        %v4089 = vunpack.c.l.s4 1983009808
        %v4090 = vunpack.c.0.s8 %v4089
        %v4091 = vperm.slane %v4083, %v4090
        %v4092 = vrot.slane %v4087, 4
        %v4093 = vsel %vm601, %v4092, %v4077
        %v4094 = vrot.slane %v4077, 4
        %v4095 = vsel %vm601, %v4087, %v4094
        %v4097 = vunpack.c.l.s4 1934713408
        %v4098 = vunpack.c.0.s8 %v4097
        %v4099 = vperm.slane %v4093, %v4098
        %v4101 = vunpack.c.l.s4 1934713408
        %v4102 = vunpack.c.0.s8 %v4101
        %v4103 = vperm.slane %v4095, %v4102
        %v4104 = vrot.slane %v4091, 4
        %v4105 = vsel %vm601, %v4104, %v4081
        %v4106 = vrot.slane %v4081, 4
        %v4107 = vsel %vm601, %v4091, %v4106
        %v4109 = vunpack.c.l.s4 1934713408
        %v4110 = vunpack.c.0.s8 %v4109
        %v4111 = vperm.slane %v4105, %v4110
        %v4113 = vunpack.c.l.s4 1934713408
        %v4114 = vunpack.c.0.s8 %v4113
        %v4115 = vperm.slane %v4107, %v4114
        %v4116 = vrot.slane %v4099, 4
        %v4117 = vsel %vm601, 0.0, %v4116
        %v4118 = vrot.slane %v4103, 4
        %v4119 = vsel %vm601, 0.0, %v4118
        %v4120 = vrot.slane %v4111, 4
        %v4121 = vsel %vm601, 0.0, %v4120
        %v4122 = vrot.slane %v4115, 4
        %v4123 = vsel %vm601, 0.0, %v4122
        %4125 = vrot.lane.b32.xlu0 %v4065, 16
        %v4126 = vpop.permute.xlu0 %4125
        %4129 = vrot.lane.b32.xlu0 %v4051, 32
        %v4130 = vpop.permute.xlu0 %4129
        %4133 = vrot.lane.b32.xlu0 %v4067, 48
        %v4134 = vpop.permute.xlu0 %4133
        %4137 = vrot.lane.b32.xlu0 %v4059, 64
        %v4138 = vpop.permute.xlu0 %4137
        %4141 = vrot.lane.b32.xlu0 %v4069, 80
        %v4142 = vpop.permute.xlu0 %4141
        %4145 = vrot.lane.b32.xlu0 %v4063, 96
        %v4146 = vpop.permute.xlu0 %4145
        %4149 = vrot.lane.b32.xlu0 %v4071, 112
        %v4150 = vpop.permute.xlu0 %4149
        %4153 = vrot.lane.b32.xlu0 %v4117, 16
        %v4154 = vpop.permute.xlu0 %4153
        %4157 = vrot.lane.b32.xlu0 %v4103, 32
        %v4158 = vpop.permute.xlu0 %4157
        %4161 = vrot.lane.b32.xlu0 %v4119, 48
        %v4162 = vpop.permute.xlu0 %4161
        %4165 = vrot.lane.b32.xlu0 %v4111, 64
        %v4166 = vpop.permute.xlu0 %4165
        %4169 = vrot.lane.b32.xlu0 %v4121, 80
        %v4170 = vpop.permute.xlu0 %4169
        %4173 = vrot.lane.b32.xlu0 %v4115, 96
        %v4174 = vpop.permute.xlu0 %4173
        %4177 = vrot.lane.b32.xlu0 %v4123, 112
        %v4178 = vpop.permute.xlu0 %4177
        %v4180 = vsel %vm769, %v4047, %v4126
        %v4181 = vsel %vm771, %v4180, %v4130
        %v4182 = vsel %vm773, %v4181, %v4134
        %v4183 = vsel %vm775, %v4182, %v4138
        %v4184 = vsel %vm777, %v4183, %v4142
        %v4185 = vsel %vm779, %v4184, %v4146
        %v4186 = vsel %vm781, %v4185, %v4150
        %v4187 = vsel %vm769, %v4099, %v4154
        %v4188 = vsel %vm771, %v4187, %v4158
        %v4189 = vsel %vm773, %v4188, %v4162
        %v4190 = vsel %vm775, %v4189, %v4166
        %v4191 = vsel %vm777, %v4190, %v4170
        %v4192 = vsel %vm779, %v4191, %v4174
        %v4193 = vsel %vm781, %v4192, %v4178
        %4194 = vrot.lane.b32.xlu0 %v3822, 126
        %v4195 = vpop.permute.xlu0 %4194
        %4196 = vrot.lane.b32.xlu0 %v3824, 126
        %v4197 = vpop.permute.xlu0 %4196
        %4198 = vrot.lane.b32.xlu0 %v3827, 126
        %v4199 = vpop.permute.xlu0 %4198
        %4200 = vrot.lane.b32.xlu0 %v3829, 126
        %v4201 = vpop.permute.xlu0 %4200
        %v4206 = vrot.slane %v4195, 4
        %v4207 = vsel %vm601, 0.0, %v4206
        %v4209 = vunpack.c.l.s4 1983009808
        %v4210 = vunpack.c.0.s8 %v4209
        %v4211 = vperm.slane %v4195, %v4210
        %v4213 = vunpack.c.l.s4 1983009808
        %v4214 = vunpack.c.0.s8 %v4213
        %v4215 = vperm.slane %v4207, %v4214
        %v4216 = vrot.slane %v4199, 4
        %v4217 = vsel %vm601, 0.0, %v4216
        %v4219 = vunpack.c.l.s4 1983009808
        %v4220 = vunpack.c.0.s8 %v4219
        %v4221 = vperm.slane %v4199, %v4220
        %v4223 = vunpack.c.l.s4 1983009808
        %v4224 = vunpack.c.0.s8 %v4223
        %v4225 = vperm.slane %v4217, %v4224
        %v4226 = vrot.slane %v4221, 4
        %v4227 = vsel %vm601, %v4226, %v4211
        %v4228 = vrot.slane %v4211, 4
        %v4229 = vsel %vm601, %v4221, %v4228
        %v4231 = vunpack.c.l.s4 1934713408
        %v4232 = vunpack.c.0.s8 %v4231
        %v4233 = vperm.slane %v4227, %v4232
        %v4235 = vunpack.c.l.s4 1934713408
        %v4236 = vunpack.c.0.s8 %v4235
        %v4237 = vperm.slane %v4229, %v4236
        %v4238 = vrot.slane %v4225, 4
        %v4239 = vsel %vm601, %v4238, %v4215
        %v4240 = vrot.slane %v4215, 4
        %v4241 = vsel %vm601, %v4225, %v4240
        %v4243 = vunpack.c.l.s4 1934713408
        %v4244 = vunpack.c.0.s8 %v4243
        %v4245 = vperm.slane %v4239, %v4244
        %v4247 = vunpack.c.l.s4 1934713408
        %v4248 = vunpack.c.0.s8 %v4247
        %v4249 = vperm.slane %v4241, %v4248
        %v4250 = vrot.slane %v4233, 4
        %v4251 = vsel %vm601, 0.0, %v4250
        %v4252 = vrot.slane %v4237, 4
        %v4253 = vsel %vm601, 0.0, %v4252
        %v4254 = vrot.slane %v4245, 4
        %v4255 = vsel %vm601, 0.0, %v4254
        %v4256 = vrot.slane %v4249, 4
        %v4257 = vsel %vm601, 0.0, %v4256
        %v4258 = vrot.slane %v4197, 4
        %v4259 = vsel %vm601, 0.0, %v4258
        %v4261 = vunpack.c.l.s4 1983009808
        %v4262 = vunpack.c.0.s8 %v4261
        %v4263 = vperm.slane %v4197, %v4262
        %v4265 = vunpack.c.l.s4 1983009808
        %v4266 = vunpack.c.0.s8 %v4265
        %v4267 = vperm.slane %v4259, %v4266
        %v4268 = vrot.slane %v4201, 4
        %v4269 = vsel %vm601, 0.0, %v4268
        %v4271 = vunpack.c.l.s4 1983009808
        %v4272 = vunpack.c.0.s8 %v4271
        %v4273 = vperm.slane %v4201, %v4272
        %v4275 = vunpack.c.l.s4 1983009808
        %v4276 = vunpack.c.0.s8 %v4275
        %v4277 = vperm.slane %v4269, %v4276
        %v4278 = vrot.slane %v4273, 4
        %v4279 = vsel %vm601, %v4278, %v4263
        %v4280 = vrot.slane %v4263, 4
        %v4281 = vsel %vm601, %v4273, %v4280
        %v4283 = vunpack.c.l.s4 1934713408
        %v4284 = vunpack.c.0.s8 %v4283
        %v4285 = vperm.slane %v4279, %v4284
        %v4287 = vunpack.c.l.s4 1934713408
        %v4288 = vunpack.c.0.s8 %v4287
        %v4289 = vperm.slane %v4281, %v4288
        %v4290 = vrot.slane %v4277, 4
        %v4291 = vsel %vm601, %v4290, %v4267
        %v4292 = vrot.slane %v4267, 4
        %v4293 = vsel %vm601, %v4277, %v4292
        %v4295 = vunpack.c.l.s4 1934713408
        %v4296 = vunpack.c.0.s8 %v4295
        %v4297 = vperm.slane %v4291, %v4296
        %v4299 = vunpack.c.l.s4 1934713408
        %v4300 = vunpack.c.0.s8 %v4299
        %v4301 = vperm.slane %v4293, %v4300
        %v4302 = vrot.slane %v4285, 4
        %v4303 = vsel %vm601, 0.0, %v4302
        %v4304 = vrot.slane %v4289, 4
        %v4305 = vsel %vm601, 0.0, %v4304
        %v4306 = vrot.slane %v4297, 4
        %v4307 = vsel %vm601, 0.0, %v4306
        %v4308 = vrot.slane %v4301, 4
        %v4309 = vsel %vm601, 0.0, %v4308
        %4311 = vrot.lane.b32.xlu0 %v4251, 16
        %v4312 = vpop.permute.xlu0 %4311
        %4315 = vrot.lane.b32.xlu0 %v4237, 32
        %v4316 = vpop.permute.xlu0 %4315
        %4319 = vrot.lane.b32.xlu0 %v4253, 48
        %v4320 = vpop.permute.xlu0 %4319
        %4323 = vrot.lane.b32.xlu0 %v4245, 64
        %v4324 = vpop.permute.xlu0 %4323
        %4327 = vrot.lane.b32.xlu0 %v4255, 80
        %v4328 = vpop.permute.xlu0 %4327
        %4331 = vrot.lane.b32.xlu0 %v4249, 96
        %v4332 = vpop.permute.xlu0 %4331
        %4335 = vrot.lane.b32.xlu0 %v4257, 112
        %v4336 = vpop.permute.xlu0 %4335
        %4339 = vrot.lane.b32.xlu0 %v4303, 16
        %v4340 = vpop.permute.xlu0 %4339
        %4343 = vrot.lane.b32.xlu0 %v4289, 32
        %v4344 = vpop.permute.xlu0 %4343
        %4347 = vrot.lane.b32.xlu0 %v4305, 48
        %v4348 = vpop.permute.xlu0 %4347
        %4351 = vrot.lane.b32.xlu0 %v4297, 64
        %v4352 = vpop.permute.xlu0 %4351
        %4355 = vrot.lane.b32.xlu0 %v4307, 80
        %v4356 = vpop.permute.xlu0 %4355
        %4359 = vrot.lane.b32.xlu0 %v4301, 96
        %v4360 = vpop.permute.xlu0 %4359
        %4363 = vrot.lane.b32.xlu0 %v4309, 112
        %v4364 = vpop.permute.xlu0 %4363
        %v4366 = vsel %vm769, %v4233, %v4312
        %v4367 = vsel %vm771, %v4366, %v4316
        %v4368 = vsel %vm773, %v4367, %v4320
        %v4369 = vsel %vm775, %v4368, %v4324
        %v4370 = vsel %vm777, %v4369, %v4328
        %v4371 = vsel %vm779, %v4370, %v4332
        %v4372 = vsel %vm781, %v4371, %v4336
        %v4373 = vsel %vm769, %v4285, %v4340
        %v4374 = vsel %vm771, %v4373, %v4344
        %v4375 = vsel %vm773, %v4374, %v4348
        %v4376 = vsel %vm775, %v4375, %v4352
        %v4377 = vsel %vm777, %v4376, %v4356
        %v4378 = vsel %vm779, %v4377, %v4360
        %v4379 = vsel %vm781, %v4378, %v4364
        %v4382 = vrot.slane %v3064, 6
        %v4383 = vrot.slane %v3071, 6
        %v4388 = vrot.slane %v3250, 4
        %v4389 = vrot.slane %v3257, 4
        %v4394 = vrot.slane %v3440, 2
        %v4395 = vrot.slane %v3447, 2
        %v4400 = vrot.slane %v3812, 6
        %v4401 = vrot.slane %v3819, 6
        %v4406 = vrot.slane %v4000, 4
        %v4407 = vrot.slane %v4007, 4
        %v4412 = vrot.slane %v4186, 2
        %v4413 = vrot.slane %v4193, 2
        %vm4416 = vcmask 1041408
        %v4417 = vsel %vm4416, %v2874, %v4382
        %v4418 = vsel %vm4416, %v2881, %v4383
        %v4419 = vsel %vm2484, %v4417, %v4388
        %v4420 = vsel %vm2484, %v4418, %v4389
        %v4421 = vsel %vm1837, %v4419, %v4394
        %v4422 = vsel %vm1837, %v4420, %v4395
        %v4423 = vsel %vm4416, %v3626, %v4400
        %v4424 = vsel %vm4416, %v3633, %v4401
        %v4425 = vsel %vm2484, %v4423, %v4406
        %v4426 = vsel %vm2484, %v4424, %v4407
        %v4427 = vsel %vm1837, %v4425, %v4412
        %v4428 = vsel %vm1837, %v4426, %v4413
        %v4429 = vld [vmem:[%s6] sm:$0x7]
        %v4430 = vld [vmem:[%s7] sm:$0x7]
        %4432 = vset.pattern.permute.xlu0 0
        %4433 = vperm.xlu0 %4432, %v4430
        %v4434 = vpop.permute.xlu0 %4433
        %v4437 = vsel %vm525, %v4429, 0
        %v4440 = vsel %vm4416, %v4372, 0
        %v4443 = vsel %vm4416, %v4379, 0
        %4445 = vmatpush.msra.mxu0 0.0
        %4446 = vmatpush.msra.mxu0 0.0
        %4447 = vmatpush.msra.mxu0 0.0
        %4448 = vmatpush.msra.mxu0 0.0
        %4449 = vmatpush.msra.mxu0 0.0
        %4450 = vmatpush.msra.mxu0 0.0
        %4451 = vmatpush.msra.mxu0 0.0
        %4452 = vmatpush.msra.mxu0 0.0
        %4453 = vmatpush.msra.mxu0 0.0
        %4454 = vmatpush.msra.mxu0 0.0
        %4455 = vmatpush.msra.mxu0 0.0
        %4456 = vmatpush.msra.mxu0 0.0
        %4457 = vmatpush.msra.mxu0 0.0
        %4458 = vmatpush.msra.mxu0 %v4440
        %4459 = vmatpush.msra.mxu0 %v4427
        %4460 = vmatpush.msra.mxu0 %v4421
        %4461 = vmatmul.f32.gmra.mxu0 %v4437
        %v4462 = vpop.f32.mrf.mxu0
        %v4463 = vadd.f32 %v4434, %v4462
        %4464 = vdwg.mxu0
        %4465 = vmatpush.msra.mxu0 0.0
        %4466 = vmatpush.msra.mxu0 0.0
        %4467 = vmatpush.msra.mxu0 0.0
        %4468 = vmatpush.msra.mxu0 0.0
        %4469 = vmatpush.msra.mxu0 0.0
        %4470 = vmatpush.msra.mxu0 0.0
        %4471 = vmatpush.msra.mxu0 0.0
        %4472 = vmatpush.msra.mxu0 0.0
        %4473 = vmatpush.msra.mxu0 0.0
        %4474 = vmatpush.msra.mxu0 0.0
        %4475 = vmatpush.msra.mxu0 0.0
        %4476 = vmatpush.msra.mxu0 0.0
        %4477 = vmatpush.msra.mxu0 0.0
        %4478 = vmatpush.msra.mxu0 %v4443
        %4479 = vmatpush.msra.mxu0 %v4428
        %4480 = vmatpush.msra.mxu0 %v4422
        %4481 = vmatmul.f32.gmra.mxu0 %v4437
        %v4482 = vpop.f32.mrf.mxu0
        %v4483 = vadd.f32 %v4434, %v4482
        %4484 = vdwg.mxu0
        %v4485 = vmax.f32 %v4463, 0.0
        %v4486 = vmax.f32 %v4483, 0.0
        %v4489 = vrot.slane %v4486, 4
        %v4490 = vsel %vm2484, %v4485, %v4489
        %4492 = vst [vmem:[%s369] sm:$0x77] %v4490
        %p4493 = scmp.lt.s32.totalorder %s25, 1
        %s4494 = scalar_select %p4493, %s25, 1
        %s4495 = smul.addr %s4494, 2
        %s4496 = smul.addr %s4495, 4
        %s4497 = scalar_lea.vmem %s8, %s4496
        // Predicated region
        $region61: #{tpu_custom_call.1} parent=51 // pred_check
          %p4498 = pneg %p221
        $region62: #{tpu_custom_call.1} parent=51 // pred_check_branch
          %4500 = sbr.rel (%p4498) target = $region64
        $region63: #{tpu_custom_call.1} parent=51 // pred_region
          _
        $region64: #{tpu_custom_call.1} parent=51 // pred_fallthru
          _
      $region52: #{tpu_custom_call.1} parent=5 // pred_fallthru
        _
      %p4501 = scmp.le.s32.totalorder 2, %s20
      // Predicated region
      $region65: #{tpu_custom_call.1} parent=5 // pred_check
        %p4502 = pneg %p4501
      $region66: #{tpu_custom_call.1} parent=5 // pred_check_branch
        %4504 = sbr.rel (%p4502) target = $region68
      $region67: #{tpu_custom_call.1} parent=5 // pred_region
        %s4505 = ssub.s32 %s20, 2
        // Predicated region
        $region69: #{tpu_custom_call.1} parent=67 // pred_check
          %p4506 = pneg %p227
        $region70: #{tpu_custom_call.1} parent=67 // pred_check_branch
          %4508 = sbr.rel (%p4506) target = $region72
        $region71: #{tpu_custom_call.1} parent=67 // pred_region
          %p4509 = scmp.lt.s32.totalorder %s26, 1
          %s4510 = scalar_select %p4509, %s26, 1
          %s4511 = smul.addr %s4510, 2
          %s4512 = smul.addr %s4511, 4
          %s4513 = scalar_lea.vmem %s8, %s4512
        $region72: #{tpu_custom_call.1} parent=67 // pred_fallthru
          _
      $region68: #{tpu_custom_call.1} parent=5 // pred_fallthru
        _
    $region6: #{tpu_custom_call.1} parent=1 // loop_footer
      %s24 = sadd.s32 1, %s20
    $region7: #{tpu_custom_call.1} parent=1 // loop_footer_branch
      %19 = sbr.rel target = $region3
    $region8: #{tpu_custom_call.1} parent=1 // loop_exit
      _
    %4514 = vsyncpa [#allocation5], 1
    %s4515 = scalar_lea.sflag [#allocation5], 1
    %4516 = vsyncpa %s4515, 1
    %4517 = vsyncpa [#allocation7], 1
    %s4518 = scalar_lea.sflag [#allocation7], 1
    %4519 = vsyncpa %s4518, 1

</llo_original>
